<compile_context>
chip_gen: v5e
topology: v5e:2x2
jax: 0.10.0
libtpu: 0.0.40
codegen_flags: <defaults>
</compile_context>

<pallas_src>
import math
import numpy as np

import jax
import jax.numpy as jnp
from jax.experimental import pallas as pl
from jax.experimental.pallas import tpu as pltpu

POSITION = [3, 5, 7]
POSITION_CANDIDATES = [(px, py) for py in POSITION for px in POSITION]
WINDOW_CANDIDATES = [1, 2]
NUM_OPS = 2
T_STEPS = 10


class Args:
    hid_dim = 32
    num_cells = 2
    num_scale = 3


# ----------------------------------------------------------------------------
# Fused Pallas kernel: all cells + fusion layer, one grid step per batch element
# ----------------------------------------------------------------------------
def _make_fused_kernel(C, S0, T, D):
    def kernel(alpha_ref, gp_ref, gw_ref, go_ref,        # SMEM (softmaxed arch weights)
               a_ref, v_ref, wslab_ref, m3_ref, m5_ref,  # VMEM inputs
               fw_ref, fb_ref, lnw_ref, lnb_ref,         # VMEM fusion-layer params
               o_ref):                                   # VMEM output block (1, T, D)
        interp = [m3_ref[...], m5_ref[...]]              # (T,3), (T,5) upsample matrices
        a_stages = [a_ref[s, 0] for s in range(S0)]      # each (T, D)
        v_stages = [v_ref[s, 0] for s in range(S0)]

        def softmax_attn(scores, values):
            mx = jnp.max(scores, axis=-1, keepdims=True)
            p = jnp.exp(scores - mx)
            denom = jnp.sum(p, axis=-1, keepdims=True)
            p = p * pl.reciprocal(denom, approx=True)    # EUP divide (free slot)
            return jnp.dot(p, values, preferred_element_type=jnp.float32)

        z_cells = []
        for i in range(C):
            # --- alpha-weighted combination over scale stages (softmax(alpha)) ---
            x = jnp.zeros((T, D), jnp.float32)
            y = jnp.zeros((T, D), jnp.float32)
            for s in range(S0 + i):
                xs = a_stages[s] if s < S0 else z_cells[s - S0]
                ys = v_stages[s] if s < S0 else z_cells[s - S0]
                x = x + alpha_ref[2 * i + 0, s] * xs
                y = y + alpha_ref[2 * i + 1, s] * ys

            # --- packed lane-dense projections: one (2T, D) @ (D, 4D) matmul ---
            xy = jnp.concatenate([x, y], axis=0)                           # (2T, D)
            proj = jnp.dot(xy, wslab_ref[i],
                           preferred_element_type=jnp.float32)             # (2T, 4D)
            q_g = proj[:T, 0:D]                 # wq pre-scaled by 1/sqrt(D) in wrapper
            k_g = proj[T:, D:2 * D]
            v_g = proj[T:, 2 * D:3 * D]
            g_g = jax.nn.sigmoid(proj[T:, 3 * D:4 * D])

            wo0 = go_ref[i, 0]
            wo1 = go_ref[i, 1]

            # --- global candidate ops; scores reused (sliced) by all windowed terms ---
            s_full = jax.lax.dot_general(q_g, k_g, (((1,), (1,)), ((), ())),
                                         preferred_element_type=jnp.float32)  # (T, T)
            # z_global hoisted out of the (position, window) loops (softmax weights sum to 1)
            z_out = wo0 * softmax_attn(s_full, v_g) + wo1 * (x * g_g)

            # --- windowed candidates: pure slices of global projections / scores ---
            for w_idx, m in enumerate(WINDOW_CANDIDATES):
                L = 2 * m + 1
                acc = jnp.zeros((L, D), jnp.float32)
                for p_idx, (px, py) in enumerate(POSITION_CANDIDATES):
                    sw = s_full[px - m:px + m + 1, py - m:py + m + 1]       # (L, L)
                    zw = (wo0 * softmax_attn(sw, v_g[py - m:py + m + 1, :])
                          + wo1 * (x[px - m:px + m + 1, :] * g_g[py - m:py + m + 1, :]))
                    acc = acc + gp_ref[i, p_idx] * zw
                # upsample is linear -> apply once per window on the wp-weighted sum
                z_out = z_out + gw_ref[i, w_idx] * jnp.dot(
                    interp[w_idx], acc, preferred_element_type=jnp.float32)

            z_cells.append(z_out)

        # --- fusion layer: Linear(D*C -> D) + LayerNorm([T, D]) + ReLU ---
        z_cat = jnp.concatenate(z_cells[-C:], axis=-1)                      # (T, D*C)
        h = jnp.dot(z_cat, fw_ref[...],
                    preferred_element_type=jnp.float32) + fb_ref[...]       # (T, D)
        mu = jnp.mean(h)                              # LayerNorm over full [T, D]
        var = jnp.mean((h - mu) * (h - mu))
        hn = (h - mu) * jax.lax.rsqrt(var + 1e-5)
        o_ref[0] = jnp.maximum(hn * lnw_ref[...] + lnb_ref[...], 0.0)

    return kernel


# ----------------------------------------------------------------------------
# Parameter setup / helpers
# ----------------------------------------------------------------------------
def _bilinear_matrix(L, T=T_STEPS):
    """PyTorch bilinear upsample (align_corners=False), L -> T, as a (T, L) matrix."""
    M = np.zeros((T, L), np.float32)
    for i in range(T):
        src = max((i + 0.5) * L / T - 0.5, 0.0)
        x0 = min(int(np.floor(src)), L - 1)
        x1 = min(x0 + 1, L - 1)
        frac = src - x0
        M[i, x0] += 1.0 - frac
        M[i, x1] += frac
    return jnp.asarray(M)


def init_params(args, key):
    D, C, S0 = args.hid_dim, args.num_cells, args.num_scale
    keys = iter(jax.random.split(key, 8 * C + 4))
    params = {"alphas": [], "cells": []}
    for i in range(C):
        params["alphas"].append(
            0.001 * jax.random.normal(next(keys), (2, S0 + i), jnp.float32))
        cell = {
            "gammas_p": 0.001 * jax.random.normal(next(keys), (len(POSITION_CANDIDATES),), jnp.float32),
            "gammas_w": 0.001 * jax.random.normal(next(keys), (len(WINDOW_CANDIDATES),), jnp.float32),
            "gammas_o": 0.001 * jax.random.normal(next(keys), (NUM_OPS,), jnp.float32),
            "wq": jax.random.normal(next(keys), (D, D), jnp.float32) / math.sqrt(D),
            "wk": jax.random.normal(next(keys), (D, D), jnp.float32) / math.sqrt(D),
            "wv": jax.random.normal(next(keys), (D, D), jnp.float32) / math.sqrt(D),
            "wg": jax.random.normal(next(keys), (D, D), jnp.float32) / math.sqrt(D),
        }
        params["cells"].append(cell)
    params["fusion_w"] = jax.random.normal(next(keys), (D * C, D), jnp.float32) / math.sqrt(D * C)
    params["fusion_b"] = jnp.zeros((1, D), jnp.float32)
    params["ln_w"] = jnp.ones((T_STEPS, D), jnp.float32)   # LayerNorm([T, D]) affine
    params["ln_b"] = jnp.zeros((T_STEPS, D), jnp.float32)
    return params


# ----------------------------------------------------------------------------
# Forward: single fused pallas_call
# ----------------------------------------------------------------------------
def forward(params, aud_feats, vid_feats, args):
    C, S0, D = args.num_cells, args.num_scale, args.hid_dim
    B, T, _ = aud_feats[0].shape
    a_st = jnp.stack(aud_feats, axis=0).astype(jnp.float32)   # (S0, B, T, D)
    v_st = jnp.stack(vid_feats, axis=0).astype(jnp.float32)

    # Softmax'd architecture weights.  NOTE: the in-kernel hoists of z_global and of the
    # bilinear upsample are exactly equivalent only because these sum to 1 (softmax).
    smax = S0 + C - 1
    alpha_rows = []
    for i in range(C):
        w = jax.nn.softmax(params["alphas"][i], axis=-1)       # (2, S0+i)
        alpha_rows.append(jnp.pad(w, ((0, 0), (0, smax - (S0 + i)))))
    alpha_all = jnp.concatenate(alpha_rows, axis=0)            # (2C, smax)

    gp = jnp.stack([jax.nn.softmax(c["gammas_p"], axis=-1) for c in params["cells"]])  # (C, 9)
    gw = jnp.stack([jax.nn.softmax(c["gammas_w"], axis=-1) for c in params["cells"]])  # (C, 2)
    go = jnp.stack([jax.nn.softmax(c["gammas_o"], axis=-1) for c in params["cells"]])  # (C, 2)

    # Pack the four projection weights into one lane-dense (D, 4D) slab per cell;
    # fold the 1/sqrt(D) attention scale into wq at trace time.
    scale = 1.0 / math.sqrt(D)
    wslab = jnp.stack([jnp.concatenate(
        [c["wq"] * scale, c["wk"], c["wv"], c["wg"]], axis=1)
        for c in params["cells"]], axis=0)                     # (C, D, 4D)

    m3 = _bilinear_matrix(3)
    m5 = _bilinear_matrix(5)

    smem = pl.BlockSpec(memory_space=pltpu.MemorySpace.SMEM)
    kernel = _make_fused_kernel(C, S0, T, D)
    grid_spec = pltpu.PrefetchScalarGridSpec(
        num_scalar_prefetch=0,
        grid=(B,),
        in_specs=[
            smem, smem, smem, smem,                                   # alpha / gp / gw / go
            pl.BlockSpec((S0, 1, T, D), lambda b: (0, b, 0, 0)),      # a_st  (per-batch block)
            pl.BlockSpec((S0, 1, T, D), lambda b: (0, b, 0, 0)),      # v_st
            pl.BlockSpec((C, D, 4 * D), lambda b: (0, 0, 0)),         # packed weights
            pl.BlockSpec((T, 3), lambda b: (0, 0)),                   # upsample 3 -> T
            pl.BlockSpec((T, 5), lambda b: (0, 0)),                   # upsample 5 -> T
            pl.BlockSpec((D * C, D), lambda b: (0, 0)),               # fusion Linear W
            pl.BlockSpec((1, D), lambda b: (0, 0)),                   # fusion Linear b
            pl.BlockSpec((T, D), lambda b: (0, 0)),                   # LayerNorm weight
            pl.BlockSpec((T, D), lambda b: (0, 0)),                   # LayerNorm bias
        ],
        out_specs=pl.BlockSpec((1, T, D), lambda b: (b, 0, 0)),
    )
    return pl.pallas_call(
        kernel,
        out_shape=jax.ShapeDtypeStruct((B, T, D), jnp.float32),
        grid_spec=grid_spec,
        compiler_params=pltpu.CompilerParams(
            dimension_semantics=("parallel",)),   # B=2 maps to v7x's two TensorCores
    )(alpha_all, gp, gw, go, a_st, v_st, wslab, m3, m5,
      params["fusion_w"], params["fusion_b"], params["ln_w"], params["ln_b"])


if __name__ == "__main__":
    args = Args()
    B = 2
    key = jax.random.PRNGKey(0)
    kp, kd = jax.random.split(key)
    params = init_params(args, kp)

    dkeys = jax.random.split(kd, 2 * args.num_scale)
    aud_feats = [jax.random.normal(dkeys[i], (B, T_STEPS, args.hid_dim), jnp.float32)
                 for i in range(args.num_scale)]
    vid_feats = [jax.random.normal(dkeys[args.num_scale + i], (B, T_STEPS, args.hid_dim), jnp.float32)
                 for i in range(args.num_scale)]

    out = jax.block_until_ready(forward(params, aud_feats, vid_feats, args))
    assert out.shape == (B, T_STEPS, args.hid_dim), out.shape
    assert bool(jnp.all(jnp.isfinite(out)))
    print("KERNEL_OK")
</pallas_src>

<mosaic_0001>
module attributes {stable_mosaic.version = 11 : i64} {
  func.func @kernel(%arg0: i32, %arg1: memref<4x4xf32, #tpu.memory_space<smem>>, %arg2: memref<2x9xf32, #tpu.memory_space<smem>>, %arg3: memref<2x2xf32, #tpu.memory_space<smem>>, %arg4: memref<2x2xf32, #tpu.memory_space<smem>>, %arg5: memref<3x1x10x32xf32, #tpu.memory_space<vmem>>, %arg6: memref<3x1x10x32xf32, #tpu.memory_space<vmem>>, %arg7: memref<2x32x128xf32, #tpu.memory_space<vmem>>, %arg8: memref<10x3xf32, #tpu.memory_space<vmem>>, %arg9: memref<10x5xf32, #tpu.memory_space<vmem>>, %arg10: memref<64x32xf32, #tpu.memory_space<vmem>>, %arg11: memref<1x32xf32, #tpu.memory_space<vmem>>, %arg12: memref<10x32xf32, #tpu.memory_space<vmem>>, %arg13: memref<10x32xf32, #tpu.memory_space<vmem>>, %arg14: memref<1x10x32xf32, #tpu.memory_space<vmem>>) attributes {dimension_semantics = [#tpu.dimension_semantics<parallel>], iteration_bounds = array<i64: 2>, scalar_prefetch = 0 : i64, scratch_operands = 0 : i64, tpu.core_type = #tpu.core_type<tc>, window_params = [{transform_indices = @transform_0, window_bounds = array<i64: 4, 4>}, {transform_indices = @transform_1, window_bounds = array<i64: 2, 9>}, {transform_indices = @transform_2, window_bounds = array<i64: 2, 2>}, {transform_indices = @transform_3, window_bounds = array<i64: 2, 2>}, {transform_indices = @transform_4, window_bounds = array<i64: 3, 1, 10, 32>}, {transform_indices = @transform_5, window_bounds = array<i64: 3, 1, 10, 32>}, {pipeline_mode = #tpu.pipeline_mode<synchronous>, transform_indices = @transform_6, window_bounds = array<i64: 2, 32, 128>}, {pipeline_mode = #tpu.pipeline_mode<synchronous>, transform_indices = @transform_7, window_bounds = array<i64: 10, 3>}, {pipeline_mode = #tpu.pipeline_mode<synchronous>, transform_indices = @transform_8, window_bounds = array<i64: 10, 5>}, {pipeline_mode = #tpu.pipeline_mode<synchronous>, transform_indices = @transform_9, window_bounds = array<i64: 64, 32>}, {pipeline_mode = #tpu.pipeline_mode<synchronous>, transform_indices = @transform_10, window_bounds = array<i64: 1, 32>}, {pipeline_mode = #tpu.pipeline_mode<synchronous>, transform_indices = @transform_11, window_bounds = array<i64: 10, 32>}, {pipeline_mode = #tpu.pipeline_mode<synchronous>, transform_indices = @transform_12, window_bounds = array<i64: 10, 32>}, {transform_indices = @transform_13, window_bounds = array<i64: 1, 10, 32>}]} {
    %c0 = arith.constant 0 : index
    %c0_0 = arith.constant 0 : index
    %0 = vector.load %arg8[%c0, %c0_0] : memref<10x3xf32, #tpu.memory_space<vmem>>, vector<10x3xf32>
    %c0_1 = arith.constant 0 : index
    %c0_2 = arith.constant 0 : index
    %1 = vector.load %arg9[%c0_1, %c0_2] : memref<10x5xf32, #tpu.memory_space<vmem>>, vector<10x5xf32>
    %c0_3 = arith.constant 0 : index
    %c0_4 = arith.constant 0 : index
    %c0_5 = arith.constant 0 : index
    %c0_6 = arith.constant 0 : index
    %2 = vector.load %arg5[%c0_3, %c0_4, %c0_5, %c0_6] : memref<3x1x10x32xf32, #tpu.memory_space<vmem>>, vector<1x1x10x32xf32>
    %3 = vector.shape_cast %2 : vector<1x1x10x32xf32> to vector<10x32xf32>
    %c1 = arith.constant 1 : index
    %c0_7 = arith.constant 0 : index
    %c0_8 = arith.constant 0 : index
    %c0_9 = arith.constant 0 : index
    %4 = vector.load %arg5[%c1, %c0_7, %c0_8, %c0_9] : memref<3x1x10x32xf32, #tpu.memory_space<vmem>>, vector<1x1x10x32xf32>
    %5 = vector.shape_cast %4 : vector<1x1x10x32xf32> to vector<10x32xf32>
    %c2 = arith.constant 2 : index
    %c0_10 = arith.constant 0 : index
    %c0_11 = arith.constant 0 : index
    %c0_12 = arith.constant 0 : index
    %6 = vector.load %arg5[%c2, %c0_10, %c0_11, %c0_12] : memref<3x1x10x32xf32, #tpu.memory_space<vmem>>, vector<1x1x10x32xf32>
    %7 = vector.shape_cast %6 : vector<1x1x10x32xf32> to vector<10x32xf32>
    %c0_13 = arith.constant 0 : index
    %c0_14 = arith.constant 0 : index
    %c0_15 = arith.constant 0 : index
    %c0_16 = arith.constant 0 : index
    %8 = vector.load %arg6[%c0_13, %c0_14, %c0_15, %c0_16] : memref<3x1x10x32xf32, #tpu.memory_space<vmem>>, vector<1x1x10x32xf32>
    %9 = vector.shape_cast %8 : vector<1x1x10x32xf32> to vector<10x32xf32>
    %c1_17 = arith.constant 1 : index
    %c0_18 = arith.constant 0 : index
    %c0_19 = arith.constant 0 : index
    %c0_20 = arith.constant 0 : index
    %10 = vector.load %arg6[%c1_17, %c0_18, %c0_19, %c0_20] : memref<3x1x10x32xf32, #tpu.memory_space<vmem>>, vector<1x1x10x32xf32>
    %11 = vector.shape_cast %10 : vector<1x1x10x32xf32> to vector<10x32xf32>
    %c2_21 = arith.constant 2 : index
    %c0_22 = arith.constant 0 : index
    %c0_23 = arith.constant 0 : index
    %c0_24 = arith.constant 0 : index
    %12 = vector.load %arg6[%c2_21, %c0_22, %c0_23, %c0_24] : memref<3x1x10x32xf32, #tpu.memory_space<vmem>>, vector<1x1x10x32xf32>
    %13 = vector.shape_cast %12 : vector<1x1x10x32xf32> to vector<10x32xf32>
    %cst = arith.constant 0.000000e+00 : f32
    %14 = vector.broadcast %cst : f32 to vector<10x32xf32>
    %cst_25 = arith.constant 0.000000e+00 : f32
    %15 = vector.broadcast %cst_25 : f32 to vector<10x32xf32>
    %c0_26 = arith.constant 0 : index
    %c0_27 = arith.constant 0 : index
    %16 = memref.load %arg1[%c0_26, %c0_27] : memref<4x4xf32, #tpu.memory_space<smem>>
    %17 = vector.broadcast %16 : f32 to vector<10x32xf32>
    %18 = arith.mulf %17, %3 : vector<10x32xf32>
    %19 = arith.addf %14, %18 : vector<10x32xf32>
    %c1_28 = arith.constant 1 : index
    %c0_29 = arith.constant 0 : index
    %20 = memref.load %arg1[%c1_28, %c0_29] : memref<4x4xf32, #tpu.memory_space<smem>>
    %21 = vector.broadcast %20 : f32 to vector<10x32xf32>
    %22 = arith.mulf %21, %9 : vector<10x32xf32>
    %23 = arith.addf %15, %22 : vector<10x32xf32>
    %c0_30 = arith.constant 0 : index
    %c1_31 = arith.constant 1 : index
    %24 = memref.load %arg1[%c0_30, %c1_31] : memref<4x4xf32, #tpu.memory_space<smem>>
    %25 = vector.broadcast %24 : f32 to vector<10x32xf32>
    %26 = arith.mulf %25, %5 : vector<10x32xf32>
    %27 = arith.addf %19, %26 : vector<10x32xf32>
    %c1_32 = arith.constant 1 : index
    %c1_33 = arith.constant 1 : index
    %28 = memref.load %arg1[%c1_32, %c1_33] : memref<4x4xf32, #tpu.memory_space<smem>>
    %29 = vector.broadcast %28 : f32 to vector<10x32xf32>
    %30 = arith.mulf %29, %11 : vector<10x32xf32>
    %31 = arith.addf %23, %30 : vector<10x32xf32>
    %c0_34 = arith.constant 0 : index
    %c2_35 = arith.constant 2 : index
    %32 = memref.load %arg1[%c0_34, %c2_35] : memref<4x4xf32, #tpu.memory_space<smem>>
    %33 = vector.broadcast %32 : f32 to vector<10x32xf32>
    %34 = arith.mulf %33, %7 : vector<10x32xf32>
    %35 = arith.addf %27, %34 : vector<10x32xf32>
    %c1_36 = arith.constant 1 : index
    %c2_37 = arith.constant 2 : index
    %36 = memref.load %arg1[%c1_36, %c2_37] : memref<4x4xf32, #tpu.memory_space<smem>>
    %37 = vector.broadcast %36 : f32 to vector<10x32xf32>
    %38 = arith.mulf %37, %13 : vector<10x32xf32>
    %39 = arith.addf %31, %38 : vector<10x32xf32>
    %40 = tpu.concatenate %35, %39 in 0 : vector<10x32xf32>, vector<10x32xf32> -> vector<20x32xf32>
    %c0_38 = arith.constant 0 : index
    %c0_39 = arith.constant 0 : index
    %c0_40 = arith.constant 0 : index
    %41 = vector.load %arg7[%c0_38, %c0_39, %c0_40] : memref<2x32x128xf32, #tpu.memory_space<vmem>>, vector<1x32x128xf32>
    %42 = vector.shape_cast %41 : vector<1x32x128xf32> to vector<32x128xf32>
    %cst_41 = arith.constant dense<0.000000e+00> : vector<20x128xf32>
    %43 = tpu.matmul %40, %42, %cst_41 {dimension_numbers = #tpu.dot_dimension_numbers<[1], [0], [0], [1], [0, 0, 1, 1], [], []>} : vector<20x32xf32>, vector<32x128xf32>, vector<20x128xf32> -> vector<20x128xf32>
    %44 = vector.extract_strided_slice %43 {offsets = [0, 0], sizes = [10, 32], strides = [1, 1]} : vector<20x128xf32> to vector<10x32xf32>
    %45 = vector.extract_strided_slice %43 {offsets = [10, 32], sizes = [10, 32], strides = [1, 1]} : vector<20x128xf32> to vector<10x32xf32>
    %46 = vector.extract_strided_slice %43 {offsets = [10, 64], sizes = [10, 32], strides = [1, 1]} : vector<20x128xf32> to vector<10x32xf32>
    %47 = vector.extract_strided_slice %43 {offsets = [10, 96], sizes = [10, 32], strides = [1, 1]} : vector<20x128xf32> to vector<10x32xf32>
    %48 = arith.negf %47 : vector<10x32xf32>
    %49 = math.exp %48 : vector<10x32xf32>
    %cst_42 = arith.constant 1.000000e+00 : f32
    %50 = vector.broadcast %cst_42 : f32 to vector<10x32xf32>
    %51 = arith.addf %50, %49 : vector<10x32xf32>
    %52 = arith.divf %50, %51 : vector<10x32xf32>
    %c0_43 = arith.constant 0 : index
    %c0_44 = arith.constant 0 : index
    %53 = memref.load %arg4[%c0_43, %c0_44] : memref<2x2xf32, #tpu.memory_space<smem>>
    %c0_45 = arith.constant 0 : index
    %c1_46 = arith.constant 1 : index
    %54 = memref.load %arg4[%c0_45, %c1_46] : memref<2x2xf32, #tpu.memory_space<smem>>
    %cst_47 = arith.constant dense<0.000000e+00> : vector<10x10xf32>
    %55 = tpu.matmul %44, %45, %cst_47 {dimension_numbers = #tpu.dot_dimension_numbers<[1], [1], [0], [0], [0, 0, 1, 0], [], []>} : vector<10x32xf32>, vector<10x32xf32>, vector<10x10xf32> -> vector<10x10xf32>
    %cst_48 = arith.constant dense<0xFF800000> : vector<10xf32>
    %56 = vector.multi_reduction <maximumf>, %55, %cst_48 [1] : vector<10x10xf32> to vector<10xf32>
    %57 = vector.shape_cast %56 : vector<10xf32> to vector<10x1xf32>
    %58 = vector.broadcast %57 : vector<10x1xf32> to vector<10x10xf32>
    %59 = arith.subf %55, %58 : vector<10x10xf32>
    %60 = math.exp %59 : vector<10x10xf32>
    %cst_49 = arith.constant dense<0.000000e+00> : vector<10xf32>
    %61 = vector.multi_reduction <add>, %60, %cst_49 [1] : vector<10x10xf32> to vector<10xf32>
    %62 = vector.shape_cast %61 : vector<10xf32> to vector<10x1xf32>
    %63 = tpu.reciprocal %62 {approx = true} : vector<10x1xf32> -> vector<10x1xf32>
    %64 = vector.broadcast %63 : vector<10x1xf32> to vector<10x10xf32>
    %65 = arith.mulf %60, %64 : vector<10x10xf32>
    %cst_50 = arith.constant dense<0.000000e+00> : vector<10x32xf32>
    %66 = tpu.matmul %65, %46, %cst_50 {dimension_numbers = #tpu.dot_dimension_numbers<[1], [0], [0], [1], [0, 0, 1, 1], [], []>} : vector<10x10xf32>, vector<10x32xf32>, vector<10x32xf32> -> vector<10x32xf32>
    %67 = vector.broadcast %53 : f32 to vector<10x32xf32>
    %68 = arith.mulf %67, %66 : vector<10x32xf32>
    %69 = arith.mulf %35, %52 : vector<10x32xf32>
    %70 = vector.broadcast %54 : f32 to vector<10x32xf32>
    %71 = arith.mulf %70, %69 : vector<10x32xf32>
    %72 = arith.addf %68, %71 : vector<10x32xf32>
    %cst_51 = arith.constant 0.000000e+00 : f32
    %73 = vector.broadcast %cst_51 : f32 to vector<3x32xf32>
    %74 = vector.extract_strided_slice %55 {offsets = [2, 2], sizes = [3, 3], strides = [1, 1]} : vector<10x10xf32> to vector<3x3xf32>
    %75 = vector.extract_strided_slice %46 {offsets = [2, 0], sizes = [3, 32], strides = [1, 1]} : vector<10x32xf32> to vector<3x32xf32>
    %cst_52 = arith.constant dense<0xFF800000> : vector<3xf32>
    %76 = vector.multi_reduction <maximumf>, %74, %cst_52 [1] : vector<3x3xf32> to vector<3xf32>
    %77 = vector.shape_cast %76 : vector<3xf32> to vector<3x1xf32>
    %78 = vector.broadcast %77 : vector<3x1xf32> to vector<3x3xf32>
    %79 = arith.subf %74, %78 : vector<3x3xf32>
    %80 = math.exp %79 : vector<3x3xf32>
    %cst_53 = arith.constant dense<0.000000e+00> : vector<3xf32>
    %81 = vector.multi_reduction <add>, %80, %cst_53 [1] : vector<3x3xf32> to vector<3xf32>
    %82 = vector.shape_cast %81 : vector<3xf32> to vector<3x1xf32>
    %83 = tpu.reciprocal %82 {approx = true} : vector<3x1xf32> -> vector<3x1xf32>
    %84 = vector.broadcast %83 : vector<3x1xf32> to vector<3x3xf32>
    %85 = arith.mulf %80, %84 : vector<3x3xf32>
    %cst_54 = arith.constant dense<0.000000e+00> : vector<3x32xf32>
    %86 = tpu.matmul %85, %75, %cst_54 {dimension_numbers = #tpu.dot_dimension_numbers<[1], [0], [0], [1], [0, 0, 1, 1], [], []>} : vector<3x3xf32>, vector<3x32xf32>, vector<3x32xf32> -> vector<3x32xf32>
    %87 = vector.broadcast %53 : f32 to vector<3x32xf32>
    %88 = arith.mulf %87, %86 : vector<3x32xf32>
    %89 = vector.extract_strided_slice %35 {offsets = [2, 0], sizes = [3, 32], strides = [1, 1]} : vector<10x32xf32> to vector<3x32xf32>
    %90 = vector.extract_strided_slice %52 {offsets = [2, 0], sizes = [3, 32], strides = [1, 1]} : vector<10x32xf32> to vector<3x32xf32>
    %91 = arith.mulf %89, %90 : vector<3x32xf32>
    %92 = vector.broadcast %54 : f32 to vector<3x32xf32>
    %93 = arith.mulf %92, %91 : vector<3x32xf32>
    %94 = arith.addf %88, %93 : vector<3x32xf32>
    %c0_55 = arith.constant 0 : index
    %c0_56 = arith.constant 0 : index
    %95 = memref.load %arg2[%c0_55, %c0_56] : memref<2x9xf32, #tpu.memory_space<smem>>
    %96 = vector.broadcast %95 : f32 to vector<3x32xf32>
    %97 = arith.mulf %96, %94 : vector<3x32xf32>
    %98 = arith.addf %73, %97 : vector<3x32xf32>
    %99 = vector.extract_strided_slice %55 {offsets = [4, 2], sizes = [3, 3], strides = [1, 1]} : vector<10x10xf32> to vector<3x3xf32>
    %100 = vector.extract_strided_slice %46 {offsets = [2, 0], sizes = [3, 32], strides = [1, 1]} : vector<10x32xf32> to vector<3x32xf32>
    %cst_57 = arith.constant dense<0xFF800000> : vector<3xf32>
    %101 = vector.multi_reduction <maximumf>, %99, %cst_57 [1] : vector<3x3xf32> to vector<3xf32>
    %102 = vector.shape_cast %101 : vector<3xf32> to vector<3x1xf32>
    %103 = vector.broadcast %102 : vector<3x1xf32> to vector<3x3xf32>
    %104 = arith.subf %99, %103 : vector<3x3xf32>
    %105 = math.exp %104 : vector<3x3xf32>
    %cst_58 = arith.constant dense<0.000000e+00> : vector<3xf32>
    %106 = vector.multi_reduction <add>, %105, %cst_58 [1] : vector<3x3xf32> to vector<3xf32>
    %107 = vector.shape_cast %106 : vector<3xf32> to vector<3x1xf32>
    %108 = tpu.reciprocal %107 {approx = true} : vector<3x1xf32> -> vector<3x1xf32>
    %109 = vector.broadcast %108 : vector<3x1xf32> to vector<3x3xf32>
    %110 = arith.mulf %105, %109 : vector<3x3xf32>
    %cst_59 = arith.constant dense<0.000000e+00> : vector<3x32xf32>
    %111 = tpu.matmul %110, %100, %cst_59 {dimension_numbers = #tpu.dot_dimension_numbers<[1], [0], [0], [1], [0, 0, 1, 1], [], []>} : vector<3x3xf32>, vector<3x32xf32>, vector<3x32xf32> -> vector<3x32xf32>
    %112 = vector.broadcast %53 : f32 to vector<3x32xf32>
    %113 = arith.mulf %112, %111 : vector<3x32xf32>
    %114 = vector.extract_strided_slice %35 {offsets = [4, 0], sizes = [3, 32], strides = [1, 1]} : vector<10x32xf32> to vector<3x32xf32>
    %115 = vector.extract_strided_slice %52 {offsets = [2, 0], sizes = [3, 32], strides = [1, 1]} : vector<10x32xf32> to vector<3x32xf32>
    %116 = arith.mulf %114, %115 : vector<3x32xf32>
    %117 = vector.broadcast %54 : f32 to vector<3x32xf32>
    %118 = arith.mulf %117, %116 : vector<3x32xf32>
    %119 = arith.addf %113, %118 : vector<3x32xf32>
    %c0_60 = arith.constant 0 : index
    %c1_61 = arith.constant 1 : index
    %120 = memref.load %arg2[%c0_60, %c1_61] : memref<2x9xf32, #tpu.memory_space<smem>>
    %121 = vector.broadcast %120 : f32 to vector<3x32xf32>
    %122 = arith.mulf %121, %119 : vector<3x32xf32>
    %123 = arith.addf %98, %122 : vector<3x32xf32>
    %124 = vector.extract_strided_slice %55 {offsets = [6, 2], sizes = [3, 3], strides = [1, 1]} : vector<10x10xf32> to vector<3x3xf32>
    %125 = vector.extract_strided_slice %46 {offsets = [2, 0], sizes = [3, 32], strides = [1, 1]} : vector<10x32xf32> to vector<3x32xf32>
    %cst_62 = arith.constant dense<0xFF800000> : vector<3xf32>
    %126 = vector.multi_reduction <maximumf>, %124, %cst_62 [1] : vector<3x3xf32> to vector<3xf32>
    %127 = vector.shape_cast %126 : vector<3xf32> to vector<3x1xf32>
    %128 = vector.broadcast %127 : vector<3x1xf32> to vector<3x3xf32>
    %129 = arith.subf %124, %128 : vector<3x3xf32>
    %130 = math.exp %129 : vector<3x3xf32>
    %cst_63 = arith.constant dense<0.000000e+00> : vector<3xf32>
    %131 = vector.multi_reduction <add>, %130, %cst_63 [1] : vector<3x3xf32> to vector<3xf32>
    %132 = vector.shape_cast %131 : vector<3xf32> to vector<3x1xf32>
    %133 = tpu.reciprocal %132 {approx = true} : vector<3x1xf32> -> vector<3x1xf32>
    %134 = vector.broadcast %133 : vector<3x1xf32> to vector<3x3xf32>
    %135 = arith.mulf %130, %134 : vector<3x3xf32>
    %cst_64 = arith.constant dense<0.000000e+00> : vector<3x32xf32>
    %136 = tpu.matmul %135, %125, %cst_64 {dimension_numbers = #tpu.dot_dimension_numbers<[1], [0], [0], [1], [0, 0, 1, 1], [], []>} : vector<3x3xf32>, vector<3x32xf32>, vector<3x32xf32> -> vector<3x32xf32>
    %137 = vector.broadcast %53 : f32 to vector<3x32xf32>
    %138 = arith.mulf %137, %136 : vector<3x32xf32>
    %139 = vector.extract_strided_slice %35 {offsets = [6, 0], sizes = [3, 32], strides = [1, 1]} : vector<10x32xf32> to vector<3x32xf32>
    %140 = vector.extract_strided_slice %52 {offsets = [2, 0], sizes = [3, 32], strides = [1, 1]} : vector<10x32xf32> to vector<3x32xf32>
    %141 = arith.mulf %139, %140 : vector<3x32xf32>
    %142 = vector.broadcast %54 : f32 to vector<3x32xf32>
    %143 = arith.mulf %142, %141 : vector<3x32xf32>
    %144 = arith.addf %138, %143 : vector<3x32xf32>
    %c0_65 = arith.constant 0 : index
    %c2_66 = arith.constant 2 : index
    %145 = memref.load %arg2[%c0_65, %c2_66] : memref<2x9xf32, #tpu.memory_space<smem>>
    %146 = vector.broadcast %145 : f32 to vector<3x32xf32>
    %147 = arith.mulf %146, %144 : vector<3x32xf32>
    %148 = arith.addf %123, %147 : vector<3x32xf32>
    %149 = vector.extract_strided_slice %55 {offsets = [2, 4], sizes = [3, 3], strides = [1, 1]} : vector<10x10xf32> to vector<3x3xf32>
    %150 = vector.extract_strided_slice %46 {offsets = [4, 0], sizes = [3, 32], strides = [1, 1]} : vector<10x32xf32> to vector<3x32xf32>
    %cst_67 = arith.constant dense<0xFF800000> : vector<3xf32>
    %151 = vector.multi_reduction <maximumf>, %149, %cst_67 [1] : vector<3x3xf32> to vector<3xf32>
    %152 = vector.shape_cast %151 : vector<3xf32> to vector<3x1xf32>
    %153 = vector.broadcast %152 : vector<3x1xf32> to vector<3x3xf32>
    %154 = arith.subf %149, %153 : vector<3x3xf32>
    %155 = math.exp %154 : vector<3x3xf32>
    %cst_68 = arith.constant dense<0.000000e+00> : vector<3xf32>
    %156 = vector.multi_reduction <add>, %155, %cst_68 [1] : vector<3x3xf32> to vector<3xf32>
    %157 = vector.shape_cast %156 : vector<3xf32> to vector<3x1xf32>
    %158 = tpu.reciprocal %157 {approx = true} : vector<3x1xf32> -> vector<3x1xf32>
    %159 = vector.broadcast %158 : vector<3x1xf32> to vector<3x3xf32>
    %160 = arith.mulf %155, %159 : vector<3x3xf32>
    %cst_69 = arith.constant dense<0.000000e+00> : vector<3x32xf32>
    %161 = tpu.matmul %160, %150, %cst_69 {dimension_numbers = #tpu.dot_dimension_numbers<[1], [0], [0], [1], [0, 0, 1, 1], [], []>} : vector<3x3xf32>, vector<3x32xf32>, vector<3x32xf32> -> vector<3x32xf32>
    %162 = vector.broadcast %53 : f32 to vector<3x32xf32>
    %163 = arith.mulf %162, %161 : vector<3x32xf32>
    %164 = vector.extract_strided_slice %35 {offsets = [2, 0], sizes = [3, 32], strides = [1, 1]} : vector<10x32xf32> to vector<3x32xf32>
    %165 = vector.extract_strided_slice %52 {offsets = [4, 0], sizes = [3, 32], strides = [1, 1]} : vector<10x32xf32> to vector<3x32xf32>
    %166 = arith.mulf %164, %165 : vector<3x32xf32>
    %167 = vector.broadcast %54 : f32 to vector<3x32xf32>
    %168 = arith.mulf %167, %166 : vector<3x32xf32>
    %169 = arith.addf %163, %168 : vector<3x32xf32>
    %c0_70 = arith.constant 0 : index
    %c3 = arith.constant 3 : index
    %170 = memref.load %arg2[%c0_70, %c3] : memref<2x9xf32, #tpu.memory_space<smem>>
    %171 = vector.broadcast %170 : f32 to vector<3x32xf32>
    %172 = arith.mulf %171, %169 : vector<3x32xf32>
    %173 = arith.addf %148, %172 : vector<3x32xf32>
    %174 = vector.extract_strided_slice %55 {offsets = [4, 4], sizes = [3, 3], strides = [1, 1]} : vector<10x10xf32> to vector<3x3xf32>
    %175 = vector.extract_strided_slice %46 {offsets = [4, 0], sizes = [3, 32], strides = [1, 1]} : vector<10x32xf32> to vector<3x32xf32>
    %cst_71 = arith.constant dense<0xFF800000> : vector<3xf32>
    %176 = vector.multi_reduction <maximumf>, %174, %cst_71 [1] : vector<3x3xf32> to vector<3xf32>
    %177 = vector.shape_cast %176 : vector<3xf32> to vector<3x1xf32>
    %178 = vector.broadcast %177 : vector<3x1xf32> to vector<3x3xf32>
    %179 = arith.subf %174, %178 : vector<3x3xf32>
    %180 = math.exp %179 : vector<3x3xf32>
    %cst_72 = arith.constant dense<0.000000e+00> : vector<3xf32>
    %181 = vector.multi_reduction <add>, %180, %cst_72 [1] : vector<3x3xf32> to vector<3xf32>
    %182 = vector.shape_cast %181 : vector<3xf32> to vector<3x1xf32>
    %183 = tpu.reciprocal %182 {approx = true} : vector<3x1xf32> -> vector<3x1xf32>
    %184 = vector.broadcast %183 : vector<3x1xf32> to vector<3x3xf32>
    %185 = arith.mulf %180, %184 : vector<3x3xf32>
    %cst_73 = arith.constant dense<0.000000e+00> : vector<3x32xf32>
    %186 = tpu.matmul %185, %175, %cst_73 {dimension_numbers = #tpu.dot_dimension_numbers<[1], [0], [0], [1], [0, 0, 1, 1], [], []>} : vector<3x3xf32>, vector<3x32xf32>, vector<3x32xf32> -> vector<3x32xf32>
    %187 = vector.broadcast %53 : f32 to vector<3x32xf32>
    %188 = arith.mulf %187, %186 : vector<3x32xf32>
    %189 = vector.extract_strided_slice %35 {offsets = [4, 0], sizes = [3, 32], strides = [1, 1]} : vector<10x32xf32> to vector<3x32xf32>
    %190 = vector.extract_strided_slice %52 {offsets = [4, 0], sizes = [3, 32], strides = [1, 1]} : vector<10x32xf32> to vector<3x32xf32>
    %191 = arith.mulf %189, %190 : vector<3x32xf32>
    %192 = vector.broadcast %54 : f32 to vector<3x32xf32>
    %193 = arith.mulf %192, %191 : vector<3x32xf32>
    %194 = arith.addf %188, %193 : vector<3x32xf32>
    %c0_74 = arith.constant 0 : index
    %c4 = arith.constant 4 : index
    %195 = memref.load %arg2[%c0_74, %c4] : memref<2x9xf32, #tpu.memory_space<smem>>
    %196 = vector.broadcast %195 : f32 to vector<3x32xf32>
    %197 = arith.mulf %196, %194 : vector<3x32xf32>
    %198 = arith.addf %173, %197 : vector<3x32xf32>
    %199 = vector.extract_strided_slice %55 {offsets = [6, 4], sizes = [3, 3], strides = [1, 1]} : vector<10x10xf32> to vector<3x3xf32>
    %200 = vector.extract_strided_slice %46 {offsets = [4, 0], sizes = [3, 32], strides = [1, 1]} : vector<10x32xf32> to vector<3x32xf32>
    %cst_75 = arith.constant dense<0xFF800000> : vector<3xf32>
    %201 = vector.multi_reduction <maximumf>, %199, %cst_75 [1] : vector<3x3xf32> to vector<3xf32>
    %202 = vector.shape_cast %201 : vector<3xf32> to vector<3x1xf32>
    %203 = vector.broadcast %202 : vector<3x1xf32> to vector<3x3xf32>
    %204 = arith.subf %199, %203 : vector<3x3xf32>
    %205 = math.exp %204 : vector<3x3xf32>
    %cst_76 = arith.constant dense<0.000000e+00> : vector<3xf32>
    %206 = vector.multi_reduction <add>, %205, %cst_76 [1] : vector<3x3xf32> to vector<3xf32>
    %207 = vector.shape_cast %206 : vector<3xf32> to vector<3x1xf32>
    %208 = tpu.reciprocal %207 {approx = true} : vector<3x1xf32> -> vector<3x1xf32>
    %209 = vector.broadcast %208 : vector<3x1xf32> to vector<3x3xf32>
    %210 = arith.mulf %205, %209 : vector<3x3xf32>
    %cst_77 = arith.constant dense<0.000000e+00> : vector<3x32xf32>
    %211 = tpu.matmul %210, %200, %cst_77 {dimension_numbers = #tpu.dot_dimension_numbers<[1], [0], [0], [1], [0, 0, 1, 1], [], []>} : vector<3x3xf32>, vector<3x32xf32>, vector<3x32xf32> -> vector<3x32xf32>
    %212 = vector.broadcast %53 : f32 to vector<3x32xf32>
    %213 = arith.mulf %212, %211 : vector<3x32xf32>
    %214 = vector.extract_strided_slice %35 {offsets = [6, 0], sizes = [3, 32], strides = [1, 1]} : vector<10x32xf32> to vector<3x32xf32>
    %215 = vector.extract_strided_slice %52 {offsets = [4, 0], sizes = [3, 32], strides = [1, 1]} : vector<10x32xf32> to vector<3x32xf32>
    %216 = arith.mulf %214, %215 : vector<3x32xf32>
    %217 = vector.broadcast %54 : f32 to vector<3x32xf32>
    %218 = arith.mulf %217, %216 : vector<3x32xf32>
    %219 = arith.addf %213, %218 : vector<3x32xf32>
    %c0_78 = arith.constant 0 : index
    %c5 = arith.constant 5 : index
    %220 = memref.load %arg2[%c0_78, %c5] : memref<2x9xf32, #tpu.memory_space<smem>>
    %221 = vector.broadcast %220 : f32 to vector<3x32xf32>
    %222 = arith.mulf %221, %219 : vector<3x32xf32>
    %223 = arith.addf %198, %222 : vector<3x32xf32>
    %224 = vector.extract_strided_slice %55 {offsets = [2, 6], sizes = [3, 3], strides = [1, 1]} : vector<10x10xf32> to vector<3x3xf32>
    %225 = vector.extract_strided_slice %46 {offsets = [6, 0], sizes = [3, 32], strides = [1, 1]} : vector<10x32xf32> to vector<3x32xf32>
    %cst_79 = arith.constant dense<0xFF800000> : vector<3xf32>
    %226 = vector.multi_reduction <maximumf>, %224, %cst_79 [1] : vector<3x3xf32> to vector<3xf32>
    %227 = vector.shape_cast %226 : vector<3xf32> to vector<3x1xf32>
    %228 = vector.broadcast %227 : vector<3x1xf32> to vector<3x3xf32>
    %229 = arith.subf %224, %228 : vector<3x3xf32>
    %230 = math.exp %229 : vector<3x3xf32>
    %cst_80 = arith.constant dense<0.000000e+00> : vector<3xf32>
    %231 = vector.multi_reduction <add>, %230, %cst_80 [1] : vector<3x3xf32> to vector<3xf32>
    %232 = vector.shape_cast %231 : vector<3xf32> to vector<3x1xf32>
    %233 = tpu.reciprocal %232 {approx = true} : vector<3x1xf32> -> vector<3x1xf32>
    %234 = vector.broadcast %233 : vector<3x1xf32> to vector<3x3xf32>
    %235 = arith.mulf %230, %234 : vector<3x3xf32>
    %cst_81 = arith.constant dense<0.000000e+00> : vector<3x32xf32>
    %236 = tpu.matmul %235, %225, %cst_81 {dimension_numbers = #tpu.dot_dimension_numbers<[1], [0], [0], [1], [0, 0, 1, 1], [], []>} : vector<3x3xf32>, vector<3x32xf32>, vector<3x32xf32> -> vector<3x32xf32>
    %237 = vector.broadcast %53 : f32 to vector<3x32xf32>
    %238 = arith.mulf %237, %236 : vector<3x32xf32>
    %239 = vector.extract_strided_slice %35 {offsets = [2, 0], sizes = [3, 32], strides = [1, 1]} : vector<10x32xf32> to vector<3x32xf32>
    %240 = vector.extract_strided_slice %52 {offsets = [6, 0], sizes = [3, 32], strides = [1, 1]} : vector<10x32xf32> to vector<3x32xf32>
    %241 = arith.mulf %239, %240 : vector<3x32xf32>
    %242 = vector.broadcast %54 : f32 to vector<3x32xf32>
    %243 = arith.mulf %242, %241 : vector<3x32xf32>
    %244 = arith.addf %238, %243 : vector<3x32xf32>
    %c0_82 = arith.constant 0 : index
    %c6 = arith.constant 6 : index
    %245 = memref.load %arg2[%c0_82, %c6] : memref<2x9xf32, #tpu.memory_space<smem>>
    %246 = vector.broadcast %245 : f32 to vector<3x32xf32>
    %247 = arith.mulf %246, %244 : vector<3x32xf32>
    %248 = arith.addf %223, %247 : vector<3x32xf32>
    %249 = vector.extract_strided_slice %55 {offsets = [4, 6], sizes = [3, 3], strides = [1, 1]} : vector<10x10xf32> to vector<3x3xf32>
    %250 = vector.extract_strided_slice %46 {offsets = [6, 0], sizes = [3, 32], strides = [1, 1]} : vector<10x32xf32> to vector<3x32xf32>
    %cst_83 = arith.constant dense<0xFF800000> : vector<3xf32>
    %251 = vector.multi_reduction <maximumf>, %249, %cst_83 [1] : vector<3x3xf32> to vector<3xf32>
    %252 = vector.shape_cast %251 : vector<3xf32> to vector<3x1xf32>
    %253 = vector.broadcast %252 : vector<3x1xf32> to vector<3x3xf32>
    %254 = arith.subf %249, %253 : vector<3x3xf32>
    %255 = math.exp %254 : vector<3x3xf32>
    %cst_84 = arith.constant dense<0.000000e+00> : vector<3xf32>
    %256 = vector.multi_reduction <add>, %255, %cst_84 [1] : vector<3x3xf32> to vector<3xf32>
    %257 = vector.shape_cast %256 : vector<3xf32> to vector<3x1xf32>
    %258 = tpu.reciprocal %257 {approx = true} : vector<3x1xf32> -> vector<3x1xf32>
    %259 = vector.broadcast %258 : vector<3x1xf32> to vector<3x3xf32>
    %260 = arith.mulf %255, %259 : vector<3x3xf32>
    %cst_85 = arith.constant dense<0.000000e+00> : vector<3x32xf32>
    %261 = tpu.matmul %260, %250, %cst_85 {dimension_numbers = #tpu.dot_dimension_numbers<[1], [0], [0], [1], [0, 0, 1, 1], [], []>} : vector<3x3xf32>, vector<3x32xf32>, vector<3x32xf32> -> vector<3x32xf32>
    %262 = vector.broadcast %53 : f32 to vector<3x32xf32>
    %263 = arith.mulf %262, %261 : vector<3x32xf32>
    %264 = vector.extract_strided_slice %35 {offsets = [4, 0], sizes = [3, 32], strides = [1, 1]} : vector<10x32xf32> to vector<3x32xf32>
    %265 = vector.extract_strided_slice %52 {offsets = [6, 0], sizes = [3, 32], strides = [1, 1]} : vector<10x32xf32> to vector<3x32xf32>
    %266 = arith.mulf %264, %265 : vector<3x32xf32>
    %267 = vector.broadcast %54 : f32 to vector<3x32xf32>
    %268 = arith.mulf %267, %266 : vector<3x32xf32>
    %269 = arith.addf %263, %268 : vector<3x32xf32>
    %c0_86 = arith.constant 0 : index
    %c7 = arith.constant 7 : index
    %270 = memref.load %arg2[%c0_86, %c7] : memref<2x9xf32, #tpu.memory_space<smem>>
    %271 = vector.broadcast %270 : f32 to vector<3x32xf32>
    %272 = arith.mulf %271, %269 : vector<3x32xf32>
    %273 = arith.addf %248, %272 : vector<3x32xf32>
    %274 = vector.extract_strided_slice %55 {offsets = [6, 6], sizes = [3, 3], strides = [1, 1]} : vector<10x10xf32> to vector<3x3xf32>
    %275 = vector.extract_strided_slice %46 {offsets = [6, 0], sizes = [3, 32], strides = [1, 1]} : vector<10x32xf32> to vector<3x32xf32>
    %cst_87 = arith.constant dense<0xFF800000> : vector<3xf32>
    %276 = vector.multi_reduction <maximumf>, %274, %cst_87 [1] : vector<3x3xf32> to vector<3xf32>
    %277 = vector.shape_cast %276 : vector<3xf32> to vector<3x1xf32>
    %278 = vector.broadcast %277 : vector<3x1xf32> to vector<3x3xf32>
    %279 = arith.subf %274, %278 : vector<3x3xf32>
    %280 = math.exp %279 : vector<3x3xf32>
    %cst_88 = arith.constant dense<0.000000e+00> : vector<3xf32>
    %281 = vector.multi_reduction <add>, %280, %cst_88 [1] : vector<3x3xf32> to vector<3xf32>
    %282 = vector.shape_cast %281 : vector<3xf32> to vector<3x1xf32>
    %283 = tpu.reciprocal %282 {approx = true} : vector<3x1xf32> -> vector<3x1xf32>
    %284 = vector.broadcast %283 : vector<3x1xf32> to vector<3x3xf32>
    %285 = arith.mulf %280, %284 : vector<3x3xf32>
    %cst_89 = arith.constant dense<0.000000e+00> : vector<3x32xf32>
    %286 = tpu.matmul %285, %275, %cst_89 {dimension_numbers = #tpu.dot_dimension_numbers<[1], [0], [0], [1], [0, 0, 1, 1], [], []>} : vector<3x3xf32>, vector<3x32xf32>, vector<3x32xf32> -> vector<3x32xf32>
    %287 = vector.broadcast %53 : f32 to vector<3x32xf32>
    %288 = arith.mulf %287, %286 : vector<3x32xf32>
    %289 = vector.extract_strided_slice %35 {offsets = [6, 0], sizes = [3, 32], strides = [1, 1]} : vector<10x32xf32> to vector<3x32xf32>
    %290 = vector.extract_strided_slice %52 {offsets = [6, 0], sizes = [3, 32], strides = [1, 1]} : vector<10x32xf32> to vector<3x32xf32>
    %291 = arith.mulf %289, %290 : vector<3x32xf32>
    %292 = vector.broadcast %54 : f32 to vector<3x32xf32>
    %293 = arith.mulf %292, %291 : vector<3x32xf32>
    %294 = arith.addf %288, %293 : vector<3x32xf32>
    %c0_90 = arith.constant 0 : index
    %c8 = arith.constant 8 : index
    %295 = memref.load %arg2[%c0_90, %c8] : memref<2x9xf32, #tpu.memory_space<smem>>
    %296 = vector.broadcast %295 : f32 to vector<3x32xf32>
    %297 = arith.mulf %296, %294 : vector<3x32xf32>
    %298 = arith.addf %273, %297 : vector<3x32xf32>
    %c0_91 = arith.constant 0 : index
    %c0_92 = arith.constant 0 : index
    %299 = memref.load %arg3[%c0_91, %c0_92] : memref<2x2xf32, #tpu.memory_space<smem>>
    %cst_93 = arith.constant dense<0.000000e+00> : vector<10x32xf32>
    %300 = tpu.matmul %0, %298, %cst_93 {dimension_numbers = #tpu.dot_dimension_numbers<[1], [0], [0], [1], [0, 0, 1, 1], [], []>} : vector<10x3xf32>, vector<3x32xf32>, vector<10x32xf32> -> vector<10x32xf32>
    %301 = vector.broadcast %299 : f32 to vector<10x32xf32>
    %302 = arith.mulf %301, %300 : vector<10x32xf32>
    %303 = arith.addf %72, %302 : vector<10x32xf32>
    %cst_94 = arith.constant 0.000000e+00 : f32
    %304 = vector.broadcast %cst_94 : f32 to vector<5x32xf32>
    %305 = vector.extract_strided_slice %55 {offsets = [1, 1], sizes = [5, 5], strides = [1, 1]} : vector<10x10xf32> to vector<5x5xf32>
    %306 = vector.extract_strided_slice %46 {offsets = [1, 0], sizes = [5, 32], strides = [1, 1]} : vector<10x32xf32> to vector<5x32xf32>
    %cst_95 = arith.constant dense<0xFF800000> : vector<5xf32>
    %307 = vector.multi_reduction <maximumf>, %305, %cst_95 [1] : vector<5x5xf32> to vector<5xf32>
    %308 = vector.shape_cast %307 : vector<5xf32> to vector<5x1xf32>
    %309 = vector.broadcast %308 : vector<5x1xf32> to vector<5x5xf32>
    %310 = arith.subf %305, %309 : vector<5x5xf32>
    %311 = math.exp %310 : vector<5x5xf32>
    %cst_96 = arith.constant dense<0.000000e+00> : vector<5xf32>
    %312 = vector.multi_reduction <add>, %311, %cst_96 [1] : vector<5x5xf32> to vector<5xf32>
    %313 = vector.shape_cast %312 : vector<5xf32> to vector<5x1xf32>
    %314 = tpu.reciprocal %313 {approx = true} : vector<5x1xf32> -> vector<5x1xf32>
    %315 = vector.broadcast %314 : vector<5x1xf32> to vector<5x5xf32>
    %316 = arith.mulf %311, %315 : vector<5x5xf32>
    %cst_97 = arith.constant dense<0.000000e+00> : vector<5x32xf32>
    %317 = tpu.matmul %316, %306, %cst_97 {dimension_numbers = #tpu.dot_dimension_numbers<[1], [0], [0], [1], [0, 0, 1, 1], [], []>} : vector<5x5xf32>, vector<5x32xf32>, vector<5x32xf32> -> vector<5x32xf32>
    %318 = vector.broadcast %53 : f32 to vector<5x32xf32>
    %319 = arith.mulf %318, %317 : vector<5x32xf32>
    %320 = vector.extract_strided_slice %35 {offsets = [1, 0], sizes = [5, 32], strides = [1, 1]} : vector<10x32xf32> to vector<5x32xf32>
    %321 = vector.extract_strided_slice %52 {offsets = [1, 0], sizes = [5, 32], strides = [1, 1]} : vector<10x32xf32> to vector<5x32xf32>
    %322 = arith.mulf %320, %321 : vector<5x32xf32>
    %323 = vector.broadcast %54 : f32 to vector<5x32xf32>
    %324 = arith.mulf %323, %322 : vector<5x32xf32>
    %325 = arith.addf %319, %324 : vector<5x32xf32>
    %c0_98 = arith.constant 0 : index
    %c0_99 = arith.constant 0 : index
    %326 = memref.load %arg2[%c0_98, %c0_99] : memref<2x9xf32, #tpu.memory_space<smem>>
    %327 = vector.broadcast %326 : f32 to vector<5x32xf32>
    %328 = arith.mulf %327, %325 : vector<5x32xf32>
    %329 = arith.addf %304, %328 : vector<5x32xf32>
    %330 = vector.extract_strided_slice %55 {offsets = [3, 1], sizes = [5, 5], strides = [1, 1]} : vector<10x10xf32> to vector<5x5xf32>
    %331 = vector.extract_strided_slice %46 {offsets = [1, 0], sizes = [5, 32], strides = [1, 1]} : vector<10x32xf32> to vector<5x32xf32>
    %cst_100 = arith.constant dense<0xFF800000> : vector<5xf32>
    %332 = vector.multi_reduction <maximumf>, %330, %cst_100 [1] : vector<5x5xf32> to vector<5xf32>
    %333 = vector.shape_cast %332 : vector<5xf32> to vector<5x1xf32>
    %334 = vector.broadcast %333 : vector<5x1xf32> to vector<5x5xf32>
    %335 = arith.subf %330, %334 : vector<5x5xf32>
    %336 = math.exp %335 : vector<5x5xf32>
    %cst_101 = arith.constant dense<0.000000e+00> : vector<5xf32>
    %337 = vector.multi_reduction <add>, %336, %cst_101 [1] : vector<5x5xf32> to vector<5xf32>
    %338 = vector.shape_cast %337 : vector<5xf32> to vector<5x1xf32>
    %339 = tpu.reciprocal %338 {approx = true} : vector<5x1xf32> -> vector<5x1xf32>
    %340 = vector.broadcast %339 : vector<5x1xf32> to vector<5x5xf32>
    %341 = arith.mulf %336, %340 : vector<5x5xf32>
    %cst_102 = arith.constant dense<0.000000e+00> : vector<5x32xf32>
    %342 = tpu.matmul %341, %331, %cst_102 {dimension_numbers = #tpu.dot_dimension_numbers<[1], [0], [0], [1], [0, 0, 1, 1], [], []>} : vector<5x5xf32>, vector<5x32xf32>, vector<5x32xf32> -> vector<5x32xf32>
    %343 = vector.broadcast %53 : f32 to vector<5x32xf32>
    %344 = arith.mulf %343, %342 : vector<5x32xf32>
    %345 = vector.extract_strided_slice %35 {offsets = [3, 0], sizes = [5, 32], strides = [1, 1]} : vector<10x32xf32> to vector<5x32xf32>
    %346 = vector.extract_strided_slice %52 {offsets = [1, 0], sizes = [5, 32], strides = [1, 1]} : vector<10x32xf32> to vector<5x32xf32>
    %347 = arith.mulf %345, %346 : vector<5x32xf32>
    %348 = vector.broadcast %54 : f32 to vector<5x32xf32>
    %349 = arith.mulf %348, %347 : vector<5x32xf32>
    %350 = arith.addf %344, %349 : vector<5x32xf32>
    %c0_103 = arith.constant 0 : index
    %c1_104 = arith.constant 1 : index
    %351 = memref.load %arg2[%c0_103, %c1_104] : memref<2x9xf32, #tpu.memory_space<smem>>
    %352 = vector.broadcast %351 : f32 to vector<5x32xf32>
    %353 = arith.mulf %352, %350 : vector<5x32xf32>
    %354 = arith.addf %329, %353 : vector<5x32xf32>
    %355 = vector.extract_strided_slice %55 {offsets = [5, 1], sizes = [5, 5], strides = [1, 1]} : vector<10x10xf32> to vector<5x5xf32>
    %356 = vector.extract_strided_slice %46 {offsets = [1, 0], sizes = [5, 32], strides = [1, 1]} : vector<10x32xf32> to vector<5x32xf32>
    %cst_105 = arith.constant dense<0xFF800000> : vector<5xf32>
    %357 = vector.multi_reduction <maximumf>, %355, %cst_105 [1] : vector<5x5xf32> to vector<5xf32>
    %358 = vector.shape_cast %357 : vector<5xf32> to vector<5x1xf32>
    %359 = vector.broadcast %358 : vector<5x1xf32> to vector<5x5xf32>
    %360 = arith.subf %355, %359 : vector<5x5xf32>
    %361 = math.exp %360 : vector<5x5xf32>
    %cst_106 = arith.constant dense<0.000000e+00> : vector<5xf32>
    %362 = vector.multi_reduction <add>, %361, %cst_106 [1] : vector<5x5xf32> to vector<5xf32>
    %363 = vector.shape_cast %362 : vector<5xf32> to vector<5x1xf32>
    %364 = tpu.reciprocal %363 {approx = true} : vector<5x1xf32> -> vector<5x1xf32>
    %365 = vector.broadcast %364 : vector<5x1xf32> to vector<5x5xf32>
    %366 = arith.mulf %361, %365 : vector<5x5xf32>
    %cst_107 = arith.constant dense<0.000000e+00> : vector<5x32xf32>
    %367 = tpu.matmul %366, %356, %cst_107 {dimension_numbers = #tpu.dot_dimension_numbers<[1], [0], [0], [1], [0, 0, 1, 1], [], []>} : vector<5x5xf32>, vector<5x32xf32>, vector<5x32xf32> -> vector<5x32xf32>
    %368 = vector.broadcast %53 : f32 to vector<5x32xf32>
    %369 = arith.mulf %368, %367 : vector<5x32xf32>
    %370 = vector.extract_strided_slice %35 {offsets = [5, 0], sizes = [5, 32], strides = [1, 1]} : vector<10x32xf32> to vector<5x32xf32>
    %371 = vector.extract_strided_slice %52 {offsets = [1, 0], sizes = [5, 32], strides = [1, 1]} : vector<10x32xf32> to vector<5x32xf32>
    %372 = arith.mulf %370, %371 : vector<5x32xf32>
    %373 = vector.broadcast %54 : f32 to vector<5x32xf32>
    %374 = arith.mulf %373, %372 : vector<5x32xf32>
    %375 = arith.addf %369, %374 : vector<5x32xf32>
    %c0_108 = arith.constant 0 : index
    %c2_109 = arith.constant 2 : index
    %376 = memref.load %arg2[%c0_108, %c2_109] : memref<2x9xf32, #tpu.memory_space<smem>>
    %377 = vector.broadcast %376 : f32 to vector<5x32xf32>
    %378 = arith.mulf %377, %375 : vector<5x32xf32>
    %379 = arith.addf %354, %378 : vector<5x32xf32>
    %380 = vector.extract_strided_slice %55 {offsets = [1, 3], sizes = [5, 5], strides = [1, 1]} : vector<10x10xf32> to vector<5x5xf32>
    %381 = vector.extract_strided_slice %46 {offsets = [3, 0], sizes = [5, 32], strides = [1, 1]} : vector<10x32xf32> to vector<5x32xf32>
    %cst_110 = arith.constant dense<0xFF800000> : vector<5xf32>
    %382 = vector.multi_reduction <maximumf>, %380, %cst_110 [1] : vector<5x5xf32> to vector<5xf32>
    %383 = vector.shape_cast %382 : vector<5xf32> to vector<5x1xf32>
    %384 = vector.broadcast %383 : vector<5x1xf32> to vector<5x5xf32>
    %385 = arith.subf %380, %384 : vector<5x5xf32>
    %386 = math.exp %385 : vector<5x5xf32>
    %cst_111 = arith.constant dense<0.000000e+00> : vector<5xf32>
    %387 = vector.multi_reduction <add>, %386, %cst_111 [1] : vector<5x5xf32> to vector<5xf32>
    %388 = vector.shape_cast %387 : vector<5xf32> to vector<5x1xf32>
    %389 = tpu.reciprocal %388 {approx = true} : vector<5x1xf32> -> vector<5x1xf32>
    %390 = vector.broadcast %389 : vector<5x1xf32> to vector<5x5xf32>
    %391 = arith.mulf %386, %390 : vector<5x5xf32>
    %cst_112 = arith.constant dense<0.000000e+00> : vector<5x32xf32>
    %392 = tpu.matmul %391, %381, %cst_112 {dimension_numbers = #tpu.dot_dimension_numbers<[1], [0], [0], [1], [0, 0, 1, 1], [], []>} : vector<5x5xf32>, vector<5x32xf32>, vector<5x32xf32> -> vector<5x32xf32>
    %393 = vector.broadcast %53 : f32 to vector<5x32xf32>
    %394 = arith.mulf %393, %392 : vector<5x32xf32>
    %395 = vector.extract_strided_slice %35 {offsets = [1, 0], sizes = [5, 32], strides = [1, 1]} : vector<10x32xf32> to vector<5x32xf32>
    %396 = vector.extract_strided_slice %52 {offsets = [3, 0], sizes = [5, 32], strides = [1, 1]} : vector<10x32xf32> to vector<5x32xf32>
    %397 = arith.mulf %395, %396 : vector<5x32xf32>
    %398 = vector.broadcast %54 : f32 to vector<5x32xf32>
    %399 = arith.mulf %398, %397 : vector<5x32xf32>
    %400 = arith.addf %394, %399 : vector<5x32xf32>
    %c0_113 = arith.constant 0 : index
    %c3_114 = arith.constant 3 : index
    %401 = memref.load %arg2[%c0_113, %c3_114] : memref<2x9xf32, #tpu.memory_space<smem>>
    %402 = vector.broadcast %401 : f32 to vector<5x32xf32>
    %403 = arith.mulf %402, %400 : vector<5x32xf32>
    %404 = arith.addf %379, %403 : vector<5x32xf32>
    %405 = vector.extract_strided_slice %55 {offsets = [3, 3], sizes = [5, 5], strides = [1, 1]} : vector<10x10xf32> to vector<5x5xf32>
    %406 = vector.extract_strided_slice %46 {offsets = [3, 0], sizes = [5, 32], strides = [1, 1]} : vector<10x32xf32> to vector<5x32xf32>
    %cst_115 = arith.constant dense<0xFF800000> : vector<5xf32>
    %407 = vector.multi_reduction <maximumf>, %405, %cst_115 [1] : vector<5x5xf32> to vector<5xf32>
    %408 = vector.shape_cast %407 : vector<5xf32> to vector<5x1xf32>
    %409 = vector.broadcast %408 : vector<5x1xf32> to vector<5x5xf32>
    %410 = arith.subf %405, %409 : vector<5x5xf32>
    %411 = math.exp %410 : vector<5x5xf32>
    %cst_116 = arith.constant dense<0.000000e+00> : vector<5xf32>
    %412 = vector.multi_reduction <add>, %411, %cst_116 [1] : vector<5x5xf32> to vector<5xf32>
    %413 = vector.shape_cast %412 : vector<5xf32> to vector<5x1xf32>
    %414 = tpu.reciprocal %413 {approx = true} : vector<5x1xf32> -> vector<5x1xf32>
    %415 = vector.broadcast %414 : vector<5x1xf32> to vector<5x5xf32>
    %416 = arith.mulf %411, %415 : vector<5x5xf32>
    %cst_117 = arith.constant dense<0.000000e+00> : vector<5x32xf32>
    %417 = tpu.matmul %416, %406, %cst_117 {dimension_numbers = #tpu.dot_dimension_numbers<[1], [0], [0], [1], [0, 0, 1, 1], [], []>} : vector<5x5xf32>, vector<5x32xf32>, vector<5x32xf32> -> vector<5x32xf32>
    %418 = vector.broadcast %53 : f32 to vector<5x32xf32>
    %419 = arith.mulf %418, %417 : vector<5x32xf32>
    %420 = vector.extract_strided_slice %35 {offsets = [3, 0], sizes = [5, 32], strides = [1, 1]} : vector<10x32xf32> to vector<5x32xf32>
    %421 = vector.extract_strided_slice %52 {offsets = [3, 0], sizes = [5, 32], strides = [1, 1]} : vector<10x32xf32> to vector<5x32xf32>
    %422 = arith.mulf %420, %421 : vector<5x32xf32>
    %423 = vector.broadcast %54 : f32 to vector<5x32xf32>
    %424 = arith.mulf %423, %422 : vector<5x32xf32>
    %425 = arith.addf %419, %424 : vector<5x32xf32>
    %c0_118 = arith.constant 0 : index
    %c4_119 = arith.constant 4 : index
    %426 = memref.load %arg2[%c0_118, %c4_119] : memref<2x9xf32, #tpu.memory_space<smem>>
    %427 = vector.broadcast %426 : f32 to vector<5x32xf32>
    %428 = arith.mulf %427, %425 : vector<5x32xf32>
    %429 = arith.addf %404, %428 : vector<5x32xf32>
    %430 = vector.extract_strided_slice %55 {offsets = [5, 3], sizes = [5, 5], strides = [1, 1]} : vector<10x10xf32> to vector<5x5xf32>
    %431 = vector.extract_strided_slice %46 {offsets = [3, 0], sizes = [5, 32], strides = [1, 1]} : vector<10x32xf32> to vector<5x32xf32>
    %cst_120 = arith.constant dense<0xFF800000> : vector<5xf32>
    %432 = vector.multi_reduction <maximumf>, %430, %cst_120 [1] : vector<5x5xf32> to vector<5xf32>
    %433 = vector.shape_cast %432 : vector<5xf32> to vector<5x1xf32>
    %434 = vector.broadcast %433 : vector<5x1xf32> to vector<5x5xf32>
    %435 = arith.subf %430, %434 : vector<5x5xf32>
    %436 = math.exp %435 : vector<5x5xf32>
    %cst_121 = arith.constant dense<0.000000e+00> : vector<5xf32>
    %437 = vector.multi_reduction <add>, %436, %cst_121 [1] : vector<5x5xf32> to vector<5xf32>
    %438 = vector.shape_cast %437 : vector<5xf32> to vector<5x1xf32>
    %439 = tpu.reciprocal %438 {approx = true} : vector<5x1xf32> -> vector<5x1xf32>
    %440 = vector.broadcast %439 : vector<5x1xf32> to vector<5x5xf32>
    %441 = arith.mulf %436, %440 : vector<5x5xf32>
    %cst_122 = arith.constant dense<0.000000e+00> : vector<5x32xf32>
    %442 = tpu.matmul %441, %431, %cst_122 {dimension_numbers = #tpu.dot_dimension_numbers<[1], [0], [0], [1], [0, 0, 1, 1], [], []>} : vector<5x5xf32>, vector<5x32xf32>, vector<5x32xf32> -> vector<5x32xf32>
    %443 = vector.broadcast %53 : f32 to vector<5x32xf32>
    %444 = arith.mulf %443, %442 : vector<5x32xf32>
    %445 = vector.extract_strided_slice %35 {offsets = [5, 0], sizes = [5, 32], strides = [1, 1]} : vector<10x32xf32> to vector<5x32xf32>
    %446 = vector.extract_strided_slice %52 {offsets = [3, 0], sizes = [5, 32], strides = [1, 1]} : vector<10x32xf32> to vector<5x32xf32>
    %447 = arith.mulf %445, %446 : vector<5x32xf32>
    %448 = vector.broadcast %54 : f32 to vector<5x32xf32>
    %449 = arith.mulf %448, %447 : vector<5x32xf32>
    %450 = arith.addf %444, %449 : vector<5x32xf32>
    %c0_123 = arith.constant 0 : index
    %c5_124 = arith.constant 5 : index
    %451 = memref.load %arg2[%c0_123, %c5_124] : memref<2x9xf32, #tpu.memory_space<smem>>
    %452 = vector.broadcast %451 : f32 to vector<5x32xf32>
    %453 = arith.mulf %452, %450 : vector<5x32xf32>
    %454 = arith.addf %429, %453 : vector<5x32xf32>
    %455 = vector.extract_strided_slice %55 {offsets = [1, 5], sizes = [5, 5], strides = [1, 1]} : vector<10x10xf32> to vector<5x5xf32>
    %456 = vector.extract_strided_slice %46 {offsets = [5, 0], sizes = [5, 32], strides = [1, 1]} : vector<10x32xf32> to vector<5x32xf32>
    %cst_125 = arith.constant dense<0xFF800000> : vector<5xf32>
    %457 = vector.multi_reduction <maximumf>, %455, %cst_125 [1] : vector<5x5xf32> to vector<5xf32>
    %458 = vector.shape_cast %457 : vector<5xf32> to vector<5x1xf32>
    %459 = vector.broadcast %458 : vector<5x1xf32> to vector<5x5xf32>
    %460 = arith.subf %455, %459 : vector<5x5xf32>
    %461 = math.exp %460 : vector<5x5xf32>
    %cst_126 = arith.constant dense<0.000000e+00> : vector<5xf32>
    %462 = vector.multi_reduction <add>, %461, %cst_126 [1] : vector<5x5xf32> to vector<5xf32>
    %463 = vector.shape_cast %462 : vector<5xf32> to vector<5x1xf32>
    %464 = tpu.reciprocal %463 {approx = true} : vector<5x1xf32> -> vector<5x1xf32>
    %465 = vector.broadcast %464 : vector<5x1xf32> to vector<5x5xf32>
    %466 = arith.mulf %461, %465 : vector<5x5xf32>
    %cst_127 = arith.constant dense<0.000000e+00> : vector<5x32xf32>
    %467 = tpu.matmul %466, %456, %cst_127 {dimension_numbers = #tpu.dot_dimension_numbers<[1], [0], [0], [1], [0, 0, 1, 1], [], []>} : vector<5x5xf32>, vector<5x32xf32>, vector<5x32xf32> -> vector<5x32xf32>
    %468 = vector.broadcast %53 : f32 to vector<5x32xf32>
    %469 = arith.mulf %468, %467 : vector<5x32xf32>
    %470 = vector.extract_strided_slice %35 {offsets = [1, 0], sizes = [5, 32], strides = [1, 1]} : vector<10x32xf32> to vector<5x32xf32>
    %471 = vector.extract_strided_slice %52 {offsets = [5, 0], sizes = [5, 32], strides = [1, 1]} : vector<10x32xf32> to vector<5x32xf32>
    %472 = arith.mulf %470, %471 : vector<5x32xf32>
    %473 = vector.broadcast %54 : f32 to vector<5x32xf32>
    %474 = arith.mulf %473, %472 : vector<5x32xf32>
    %475 = arith.addf %469, %474 : vector<5x32xf32>
    %c0_128 = arith.constant 0 : index
    %c6_129 = arith.constant 6 : index
    %476 = memref.load %arg2[%c0_128, %c6_129] : memref<2x9xf32, #tpu.memory_space<smem>>
    %477 = vector.broadcast %476 : f32 to vector<5x32xf32>
    %478 = arith.mulf %477, %475 : vector<5x32xf32>
    %479 = arith.addf %454, %478 : vector<5x32xf32>
    %480 = vector.extract_strided_slice %55 {offsets = [3, 5], sizes = [5, 5], strides = [1, 1]} : vector<10x10xf32> to vector<5x5xf32>
    %481 = vector.extract_strided_slice %46 {offsets = [5, 0], sizes = [5, 32], strides = [1, 1]} : vector<10x32xf32> to vector<5x32xf32>
    %cst_130 = arith.constant dense<0xFF800000> : vector<5xf32>
    %482 = vector.multi_reduction <maximumf>, %480, %cst_130 [1] : vector<5x5xf32> to vector<5xf32>
    %483 = vector.shape_cast %482 : vector<5xf32> to vector<5x1xf32>
    %484 = vector.broadcast %483 : vector<5x1xf32> to vector<5x5xf32>
    %485 = arith.subf %480, %484 : vector<5x5xf32>
    %486 = math.exp %485 : vector<5x5xf32>
    %cst_131 = arith.constant dense<0.000000e+00> : vector<5xf32>
    %487 = vector.multi_reduction <add>, %486, %cst_131 [1] : vector<5x5xf32> to vector<5xf32>
    %488 = vector.shape_cast %487 : vector<5xf32> to vector<5x1xf32>
    %489 = tpu.reciprocal %488 {approx = true} : vector<5x1xf32> -> vector<5x1xf32>
    %490 = vector.broadcast %489 : vector<5x1xf32> to vector<5x5xf32>
    %491 = arith.mulf %486, %490 : vector<5x5xf32>
    %cst_132 = arith.constant dense<0.000000e+00> : vector<5x32xf32>
    %492 = tpu.matmul %491, %481, %cst_132 {dimension_numbers = #tpu.dot_dimension_numbers<[1], [0], [0], [1], [0, 0, 1, 1], [], []>} : vector<5x5xf32>, vector<5x32xf32>, vector<5x32xf32> -> vector<5x32xf32>
    %493 = vector.broadcast %53 : f32 to vector<5x32xf32>
    %494 = arith.mulf %493, %492 : vector<5x32xf32>
    %495 = vector.extract_strided_slice %35 {offsets = [3, 0], sizes = [5, 32], strides = [1, 1]} : vector<10x32xf32> to vector<5x32xf32>
    %496 = vector.extract_strided_slice %52 {offsets = [5, 0], sizes = [5, 32], strides = [1, 1]} : vector<10x32xf32> to vector<5x32xf32>
    %497 = arith.mulf %495, %496 : vector<5x32xf32>
    %498 = vector.broadcast %54 : f32 to vector<5x32xf32>
    %499 = arith.mulf %498, %497 : vector<5x32xf32>
    %500 = arith.addf %494, %499 : vector<5x32xf32>
    %c0_133 = arith.constant 0 : index
    %c7_134 = arith.constant 7 : index
    %501 = memref.load %arg2[%c0_133, %c7_134] : memref<2x9xf32, #tpu.memory_space<smem>>
    %502 = vector.broadcast %501 : f32 to vector<5x32xf32>
    %503 = arith.mulf %502, %500 : vector<5x32xf32>
    %504 = arith.addf %479, %503 : vector<5x32xf32>
    %505 = vector.extract_strided_slice %55 {offsets = [5, 5], sizes = [5, 5], strides = [1, 1]} : vector<10x10xf32> to vector<5x5xf32>
    %506 = vector.extract_strided_slice %46 {offsets = [5, 0], sizes = [5, 32], strides = [1, 1]} : vector<10x32xf32> to vector<5x32xf32>
    %cst_135 = arith.constant dense<0xFF800000> : vector<5xf32>
    %507 = vector.multi_reduction <maximumf>, %505, %cst_135 [1] : vector<5x5xf32> to vector<5xf32>
    %508 = vector.shape_cast %507 : vector<5xf32> to vector<5x1xf32>
    %509 = vector.broadcast %508 : vector<5x1xf32> to vector<5x5xf32>
    %510 = arith.subf %505, %509 : vector<5x5xf32>
    %511 = math.exp %510 : vector<5x5xf32>
    %cst_136 = arith.constant dense<0.000000e+00> : vector<5xf32>
    %512 = vector.multi_reduction <add>, %511, %cst_136 [1] : vector<5x5xf32> to vector<5xf32>
    %513 = vector.shape_cast %512 : vector<5xf32> to vector<5x1xf32>
    %514 = tpu.reciprocal %513 {approx = true} : vector<5x1xf32> -> vector<5x1xf32>
    %515 = vector.broadcast %514 : vector<5x1xf32> to vector<5x5xf32>
    %516 = arith.mulf %511, %515 : vector<5x5xf32>
    %cst_137 = arith.constant dense<0.000000e+00> : vector<5x32xf32>
    %517 = tpu.matmul %516, %506, %cst_137 {dimension_numbers = #tpu.dot_dimension_numbers<[1], [0], [0], [1], [0, 0, 1, 1], [], []>} : vector<5x5xf32>, vector<5x32xf32>, vector<5x32xf32> -> vector<5x32xf32>
    %518 = vector.broadcast %53 : f32 to vector<5x32xf32>
    %519 = arith.mulf %518, %517 : vector<5x32xf32>
    %520 = vector.extract_strided_slice %35 {offsets = [5, 0], sizes = [5, 32], strides = [1, 1]} : vector<10x32xf32> to vector<5x32xf32>
    %521 = vector.extract_strided_slice %52 {offsets = [5, 0], sizes = [5, 32], strides = [1, 1]} : vector<10x32xf32> to vector<5x32xf32>
    %522 = arith.mulf %520, %521 : vector<5x32xf32>
    %523 = vector.broadcast %54 : f32 to vector<5x32xf32>
    %524 = arith.mulf %523, %522 : vector<5x32xf32>
    %525 = arith.addf %519, %524 : vector<5x32xf32>
    %c0_138 = arith.constant 0 : index
    %c8_139 = arith.constant 8 : index
    %526 = memref.load %arg2[%c0_138, %c8_139] : memref<2x9xf32, #tpu.memory_space<smem>>
    %527 = vector.broadcast %526 : f32 to vector<5x32xf32>
    %528 = arith.mulf %527, %525 : vector<5x32xf32>
    %529 = arith.addf %504, %528 : vector<5x32xf32>
    %c0_140 = arith.constant 0 : index
    %c1_141 = arith.constant 1 : index
    %530 = memref.load %arg3[%c0_140, %c1_141] : memref<2x2xf32, #tpu.memory_space<smem>>
    %cst_142 = arith.constant dense<0.000000e+00> : vector<10x32xf32>
    %531 = tpu.matmul %1, %529, %cst_142 {dimension_numbers = #tpu.dot_dimension_numbers<[1], [0], [0], [1], [0, 0, 1, 1], [], []>} : vector<10x5xf32>, vector<5x32xf32>, vector<10x32xf32> -> vector<10x32xf32>
    %532 = vector.broadcast %530 : f32 to vector<10x32xf32>
    %533 = arith.mulf %532, %531 : vector<10x32xf32>
    %534 = arith.addf %303, %533 : vector<10x32xf32>
    %cst_143 = arith.constant 0.000000e+00 : f32
    %535 = vector.broadcast %cst_143 : f32 to vector<10x32xf32>
    %cst_144 = arith.constant 0.000000e+00 : f32
    %536 = vector.broadcast %cst_144 : f32 to vector<10x32xf32>
    %c2_145 = arith.constant 2 : index
    %c0_146 = arith.constant 0 : index
    %537 = memref.load %arg1[%c2_145, %c0_146] : memref<4x4xf32, #tpu.memory_space<smem>>
    %538 = vector.broadcast %537 : f32 to vector<10x32xf32>
    %539 = arith.mulf %538, %3 : vector<10x32xf32>
    %540 = arith.addf %535, %539 : vector<10x32xf32>
    %c3_147 = arith.constant 3 : index
    %c0_148 = arith.constant 0 : index
    %541 = memref.load %arg1[%c3_147, %c0_148] : memref<4x4xf32, #tpu.memory_space<smem>>
    %542 = vector.broadcast %541 : f32 to vector<10x32xf32>
    %543 = arith.mulf %542, %9 : vector<10x32xf32>
    %544 = arith.addf %536, %543 : vector<10x32xf32>
    %c2_149 = arith.constant 2 : index
    %c1_150 = arith.constant 1 : index
    %545 = memref.load %arg1[%c2_149, %c1_150] : memref<4x4xf32, #tpu.memory_space<smem>>
    %546 = vector.broadcast %545 : f32 to vector<10x32xf32>
    %547 = arith.mulf %546, %5 : vector<10x32xf32>
    %548 = arith.addf %540, %547 : vector<10x32xf32>
    %c3_151 = arith.constant 3 : index
    %c1_152 = arith.constant 1 : index
    %549 = memref.load %arg1[%c3_151, %c1_152] : memref<4x4xf32, #tpu.memory_space<smem>>
    %550 = vector.broadcast %549 : f32 to vector<10x32xf32>
    %551 = arith.mulf %550, %11 : vector<10x32xf32>
    %552 = arith.addf %544, %551 : vector<10x32xf32>
    %c2_153 = arith.constant 2 : index
    %c2_154 = arith.constant 2 : index
    %553 = memref.load %arg1[%c2_153, %c2_154] : memref<4x4xf32, #tpu.memory_space<smem>>
    %554 = vector.broadcast %553 : f32 to vector<10x32xf32>
    %555 = arith.mulf %554, %7 : vector<10x32xf32>
    %556 = arith.addf %548, %555 : vector<10x32xf32>
    %c3_155 = arith.constant 3 : index
    %c2_156 = arith.constant 2 : index
    %557 = memref.load %arg1[%c3_155, %c2_156] : memref<4x4xf32, #tpu.memory_space<smem>>
    %558 = vector.broadcast %557 : f32 to vector<10x32xf32>
    %559 = arith.mulf %558, %13 : vector<10x32xf32>
    %560 = arith.addf %552, %559 : vector<10x32xf32>
    %c2_157 = arith.constant 2 : index
    %c3_158 = arith.constant 3 : index
    %561 = memref.load %arg1[%c2_157, %c3_158] : memref<4x4xf32, #tpu.memory_space<smem>>
    %562 = vector.broadcast %561 : f32 to vector<10x32xf32>
    %563 = arith.mulf %562, %534 : vector<10x32xf32>
    %564 = arith.addf %556, %563 : vector<10x32xf32>
    %c3_159 = arith.constant 3 : index
    %c3_160 = arith.constant 3 : index
    %565 = memref.load %arg1[%c3_159, %c3_160] : memref<4x4xf32, #tpu.memory_space<smem>>
    %566 = vector.broadcast %565 : f32 to vector<10x32xf32>
    %567 = arith.mulf %566, %534 : vector<10x32xf32>
    %568 = arith.addf %560, %567 : vector<10x32xf32>
    %569 = tpu.concatenate %564, %568 in 0 : vector<10x32xf32>, vector<10x32xf32> -> vector<20x32xf32>
    %c1_161 = arith.constant 1 : index
    %c0_162 = arith.constant 0 : index
    %c0_163 = arith.constant 0 : index
    %570 = vector.load %arg7[%c1_161, %c0_162, %c0_163] : memref<2x32x128xf32, #tpu.memory_space<vmem>>, vector<1x32x128xf32>
    %571 = vector.shape_cast %570 : vector<1x32x128xf32> to vector<32x128xf32>
    %cst_164 = arith.constant dense<0.000000e+00> : vector<20x128xf32>
    %572 = tpu.matmul %569, %571, %cst_164 {dimension_numbers = #tpu.dot_dimension_numbers<[1], [0], [0], [1], [0, 0, 1, 1], [], []>} : vector<20x32xf32>, vector<32x128xf32>, vector<20x128xf32> -> vector<20x128xf32>
    %573 = vector.extract_strided_slice %572 {offsets = [0, 0], sizes = [10, 32], strides = [1, 1]} : vector<20x128xf32> to vector<10x32xf32>
    %574 = vector.extract_strided_slice %572 {offsets = [10, 32], sizes = [10, 32], strides = [1, 1]} : vector<20x128xf32> to vector<10x32xf32>
    %575 = vector.extract_strided_slice %572 {offsets = [10, 64], sizes = [10, 32], strides = [1, 1]} : vector<20x128xf32> to vector<10x32xf32>
    %576 = vector.extract_strided_slice %572 {offsets = [10, 96], sizes = [10, 32], strides = [1, 1]} : vector<20x128xf32> to vector<10x32xf32>
    %577 = arith.negf %576 : vector<10x32xf32>
    %578 = math.exp %577 : vector<10x32xf32>
    %cst_165 = arith.constant 1.000000e+00 : f32
    %579 = vector.broadcast %cst_165 : f32 to vector<10x32xf32>
    %580 = arith.addf %579, %578 : vector<10x32xf32>
    %581 = arith.divf %579, %580 : vector<10x32xf32>
    %c1_166 = arith.constant 1 : index
    %c0_167 = arith.constant 0 : index
    %582 = memref.load %arg4[%c1_166, %c0_167] : memref<2x2xf32, #tpu.memory_space<smem>>
    %c1_168 = arith.constant 1 : index
    %c1_169 = arith.constant 1 : index
    %583 = memref.load %arg4[%c1_168, %c1_169] : memref<2x2xf32, #tpu.memory_space<smem>>
    %cst_170 = arith.constant dense<0.000000e+00> : vector<10x10xf32>
    %584 = tpu.matmul %573, %574, %cst_170 {dimension_numbers = #tpu.dot_dimension_numbers<[1], [1], [0], [0], [0, 0, 1, 0], [], []>} : vector<10x32xf32>, vector<10x32xf32>, vector<10x10xf32> -> vector<10x10xf32>
    %cst_171 = arith.constant dense<0xFF800000> : vector<10xf32>
    %585 = vector.multi_reduction <maximumf>, %584, %cst_171 [1] : vector<10x10xf32> to vector<10xf32>
    %586 = vector.shape_cast %585 : vector<10xf32> to vector<10x1xf32>
    %587 = vector.broadcast %586 : vector<10x1xf32> to vector<10x10xf32>
    %588 = arith.subf %584, %587 : vector<10x10xf32>
    %589 = math.exp %588 : vector<10x10xf32>
    %cst_172 = arith.constant dense<0.000000e+00> : vector<10xf32>
    %590 = vector.multi_reduction <add>, %589, %cst_172 [1] : vector<10x10xf32> to vector<10xf32>
    %591 = vector.shape_cast %590 : vector<10xf32> to vector<10x1xf32>
    %592 = tpu.reciprocal %591 {approx = true} : vector<10x1xf32> -> vector<10x1xf32>
    %593 = vector.broadcast %592 : vector<10x1xf32> to vector<10x10xf32>
    %594 = arith.mulf %589, %593 : vector<10x10xf32>
    %cst_173 = arith.constant dense<0.000000e+00> : vector<10x32xf32>
    %595 = tpu.matmul %594, %575, %cst_173 {dimension_numbers = #tpu.dot_dimension_numbers<[1], [0], [0], [1], [0, 0, 1, 1], [], []>} : vector<10x10xf32>, vector<10x32xf32>, vector<10x32xf32> -> vector<10x32xf32>
    %596 = vector.broadcast %582 : f32 to vector<10x32xf32>
    %597 = arith.mulf %596, %595 : vector<10x32xf32>
    %598 = arith.mulf %564, %581 : vector<10x32xf32>
    %599 = vector.broadcast %583 : f32 to vector<10x32xf32>
    %600 = arith.mulf %599, %598 : vector<10x32xf32>
    %601 = arith.addf %597, %600 : vector<10x32xf32>
    %cst_174 = arith.constant 0.000000e+00 : f32
    %602 = vector.broadcast %cst_174 : f32 to vector<3x32xf32>
    %603 = vector.extract_strided_slice %584 {offsets = [2, 2], sizes = [3, 3], strides = [1, 1]} : vector<10x10xf32> to vector<3x3xf32>
    %604 = vector.extract_strided_slice %575 {offsets = [2, 0], sizes = [3, 32], strides = [1, 1]} : vector<10x32xf32> to vector<3x32xf32>
    %cst_175 = arith.constant dense<0xFF800000> : vector<3xf32>
    %605 = vector.multi_reduction <maximumf>, %603, %cst_175 [1] : vector<3x3xf32> to vector<3xf32>
    %606 = vector.shape_cast %605 : vector<3xf32> to vector<3x1xf32>
    %607 = vector.broadcast %606 : vector<3x1xf32> to vector<3x3xf32>
    %608 = arith.subf %603, %607 : vector<3x3xf32>
    %609 = math.exp %608 : vector<3x3xf32>
    %cst_176 = arith.constant dense<0.000000e+00> : vector<3xf32>
    %610 = vector.multi_reduction <add>, %609, %cst_176 [1] : vector<3x3xf32> to vector<3xf32>
    %611 = vector.shape_cast %610 : vector<3xf32> to vector<3x1xf32>
    %612 = tpu.reciprocal %611 {approx = true} : vector<3x1xf32> -> vector<3x1xf32>
    %613 = vector.broadcast %612 : vector<3x1xf32> to vector<3x3xf32>
    %614 = arith.mulf %609, %613 : vector<3x3xf32>
    %cst_177 = arith.constant dense<0.000000e+00> : vector<3x32xf32>
    %615 = tpu.matmul %614, %604, %cst_177 {dimension_numbers = #tpu.dot_dimension_numbers<[1], [0], [0], [1], [0, 0, 1, 1], [], []>} : vector<3x3xf32>, vector<3x32xf32>, vector<3x32xf32> -> vector<3x32xf32>
    %616 = vector.broadcast %582 : f32 to vector<3x32xf32>
    %617 = arith.mulf %616, %615 : vector<3x32xf32>
    %618 = vector.extract_strided_slice %564 {offsets = [2, 0], sizes = [3, 32], strides = [1, 1]} : vector<10x32xf32> to vector<3x32xf32>
    %619 = vector.extract_strided_slice %581 {offsets = [2, 0], sizes = [3, 32], strides = [1, 1]} : vector<10x32xf32> to vector<3x32xf32>
    %620 = arith.mulf %618, %619 : vector<3x32xf32>
    %621 = vector.broadcast %583 : f32 to vector<3x32xf32>
    %622 = arith.mulf %621, %620 : vector<3x32xf32>
    %623 = arith.addf %617, %622 : vector<3x32xf32>
    %c1_178 = arith.constant 1 : index
    %c0_179 = arith.constant 0 : index
    %624 = memref.load %arg2[%c1_178, %c0_179] : memref<2x9xf32, #tpu.memory_space<smem>>
    %625 = vector.broadcast %624 : f32 to vector<3x32xf32>
    %626 = arith.mulf %625, %623 : vector<3x32xf32>
    %627 = arith.addf %602, %626 : vector<3x32xf32>
    %628 = vector.extract_strided_slice %584 {offsets = [4, 2], sizes = [3, 3], strides = [1, 1]} : vector<10x10xf32> to vector<3x3xf32>
    %629 = vector.extract_strided_slice %575 {offsets = [2, 0], sizes = [3, 32], strides = [1, 1]} : vector<10x32xf32> to vector<3x32xf32>
    %cst_180 = arith.constant dense<0xFF800000> : vector<3xf32>
    %630 = vector.multi_reduction <maximumf>, %628, %cst_180 [1] : vector<3x3xf32> to vector<3xf32>
    %631 = vector.shape_cast %630 : vector<3xf32> to vector<3x1xf32>
    %632 = vector.broadcast %631 : vector<3x1xf32> to vector<3x3xf32>
    %633 = arith.subf %628, %632 : vector<3x3xf32>
    %634 = math.exp %633 : vector<3x3xf32>
    %cst_181 = arith.constant dense<0.000000e+00> : vector<3xf32>
    %635 = vector.multi_reduction <add>, %634, %cst_181 [1] : vector<3x3xf32> to vector<3xf32>
    %636 = vector.shape_cast %635 : vector<3xf32> to vector<3x1xf32>
    %637 = tpu.reciprocal %636 {approx = true} : vector<3x1xf32> -> vector<3x1xf32>
    %638 = vector.broadcast %637 : vector<3x1xf32> to vector<3x3xf32>
    %639 = arith.mulf %634, %638 : vector<3x3xf32>
    %cst_182 = arith.constant dense<0.000000e+00> : vector<3x32xf32>
    %640 = tpu.matmul %639, %629, %cst_182 {dimension_numbers = #tpu.dot_dimension_numbers<[1], [0], [0], [1], [0, 0, 1, 1], [], []>} : vector<3x3xf32>, vector<3x32xf32>, vector<3x32xf32> -> vector<3x32xf32>
    %641 = vector.broadcast %582 : f32 to vector<3x32xf32>
    %642 = arith.mulf %641, %640 : vector<3x32xf32>
    %643 = vector.extract_strided_slice %564 {offsets = [4, 0], sizes = [3, 32], strides = [1, 1]} : vector<10x32xf32> to vector<3x32xf32>
    %644 = vector.extract_strided_slice %581 {offsets = [2, 0], sizes = [3, 32], strides = [1, 1]} : vector<10x32xf32> to vector<3x32xf32>
    %645 = arith.mulf %643, %644 : vector<3x32xf32>
    %646 = vector.broadcast %583 : f32 to vector<3x32xf32>
    %647 = arith.mulf %646, %645 : vector<3x32xf32>
    %648 = arith.addf %642, %647 : vector<3x32xf32>
    %c1_183 = arith.constant 1 : index
    %c1_184 = arith.constant 1 : index
    %649 = memref.load %arg2[%c1_183, %c1_184] : memref<2x9xf32, #tpu.memory_space<smem>>
    %650 = vector.broadcast %649 : f32 to vector<3x32xf32>
    %651 = arith.mulf %650, %648 : vector<3x32xf32>
    %652 = arith.addf %627, %651 : vector<3x32xf32>
    %653 = vector.extract_strided_slice %584 {offsets = [6, 2], sizes = [3, 3], strides = [1, 1]} : vector<10x10xf32> to vector<3x3xf32>
    %654 = vector.extract_strided_slice %575 {offsets = [2, 0], sizes = [3, 32], strides = [1, 1]} : vector<10x32xf32> to vector<3x32xf32>
    %cst_185 = arith.constant dense<0xFF800000> : vector<3xf32>
    %655 = vector.multi_reduction <maximumf>, %653, %cst_185 [1] : vector<3x3xf32> to vector<3xf32>
    %656 = vector.shape_cast %655 : vector<3xf32> to vector<3x1xf32>
    %657 = vector.broadcast %656 : vector<3x1xf32> to vector<3x3xf32>
    %658 = arith.subf %653, %657 : vector<3x3xf32>
    %659 = math.exp %658 : vector<3x3xf32>
    %cst_186 = arith.constant dense<0.000000e+00> : vector<3xf32>
    %660 = vector.multi_reduction <add>, %659, %cst_186 [1] : vector<3x3xf32> to vector<3xf32>
    %661 = vector.shape_cast %660 : vector<3xf32> to vector<3x1xf32>
    %662 = tpu.reciprocal %661 {approx = true} : vector<3x1xf32> -> vector<3x1xf32>
    %663 = vector.broadcast %662 : vector<3x1xf32> to vector<3x3xf32>
    %664 = arith.mulf %659, %663 : vector<3x3xf32>
    %cst_187 = arith.constant dense<0.000000e+00> : vector<3x32xf32>
    %665 = tpu.matmul %664, %654, %cst_187 {dimension_numbers = #tpu.dot_dimension_numbers<[1], [0], [0], [1], [0, 0, 1, 1], [], []>} : vector<3x3xf32>, vector<3x32xf32>, vector<3x32xf32> -> vector<3x32xf32>
    %666 = vector.broadcast %582 : f32 to vector<3x32xf32>
    %667 = arith.mulf %666, %665 : vector<3x32xf32>
    %668 = vector.extract_strided_slice %564 {offsets = [6, 0], sizes = [3, 32], strides = [1, 1]} : vector<10x32xf32> to vector<3x32xf32>
    %669 = vector.extract_strided_slice %581 {offsets = [2, 0], sizes = [3, 32], strides = [1, 1]} : vector<10x32xf32> to vector<3x32xf32>
    %670 = arith.mulf %668, %669 : vector<3x32xf32>
    %671 = vector.broadcast %583 : f32 to vector<3x32xf32>
    %672 = arith.mulf %671, %670 : vector<3x32xf32>
    %673 = arith.addf %667, %672 : vector<3x32xf32>
    %c1_188 = arith.constant 1 : index
    %c2_189 = arith.constant 2 : index
    %674 = memref.load %arg2[%c1_188, %c2_189] : memref<2x9xf32, #tpu.memory_space<smem>>
    %675 = vector.broadcast %674 : f32 to vector<3x32xf32>
    %676 = arith.mulf %675, %673 : vector<3x32xf32>
    %677 = arith.addf %652, %676 : vector<3x32xf32>
    %678 = vector.extract_strided_slice %584 {offsets = [2, 4], sizes = [3, 3], strides = [1, 1]} : vector<10x10xf32> to vector<3x3xf32>
    %679 = vector.extract_strided_slice %575 {offsets = [4, 0], sizes = [3, 32], strides = [1, 1]} : vector<10x32xf32> to vector<3x32xf32>
    %cst_190 = arith.constant dense<0xFF800000> : vector<3xf32>
    %680 = vector.multi_reduction <maximumf>, %678, %cst_190 [1] : vector<3x3xf32> to vector<3xf32>
    %681 = vector.shape_cast %680 : vector<3xf32> to vector<3x1xf32>
    %682 = vector.broadcast %681 : vector<3x1xf32> to vector<3x3xf32>
    %683 = arith.subf %678, %682 : vector<3x3xf32>
    %684 = math.exp %683 : vector<3x3xf32>
    %cst_191 = arith.constant dense<0.000000e+00> : vector<3xf32>
    %685 = vector.multi_reduction <add>, %684, %cst_191 [1] : vector<3x3xf32> to vector<3xf32>
    %686 = vector.shape_cast %685 : vector<3xf32> to vector<3x1xf32>
    %687 = tpu.reciprocal %686 {approx = true} : vector<3x1xf32> -> vector<3x1xf32>
    %688 = vector.broadcast %687 : vector<3x1xf32> to vector<3x3xf32>
    %689 = arith.mulf %684, %688 : vector<3x3xf32>
    %cst_192 = arith.constant dense<0.000000e+00> : vector<3x32xf32>
    %690 = tpu.matmul %689, %679, %cst_192 {dimension_numbers = #tpu.dot_dimension_numbers<[1], [0], [0], [1], [0, 0, 1, 1], [], []>} : vector<3x3xf32>, vector<3x32xf32>, vector<3x32xf32> -> vector<3x32xf32>
    %691 = vector.broadcast %582 : f32 to vector<3x32xf32>
    %692 = arith.mulf %691, %690 : vector<3x32xf32>
    %693 = vector.extract_strided_slice %564 {offsets = [2, 0], sizes = [3, 32], strides = [1, 1]} : vector<10x32xf32> to vector<3x32xf32>
    %694 = vector.extract_strided_slice %581 {offsets = [4, 0], sizes = [3, 32], strides = [1, 1]} : vector<10x32xf32> to vector<3x32xf32>
    %695 = arith.mulf %693, %694 : vector<3x32xf32>
    %696 = vector.broadcast %583 : f32 to vector<3x32xf32>
    %697 = arith.mulf %696, %695 : vector<3x32xf32>
    %698 = arith.addf %692, %697 : vector<3x32xf32>
    %c1_193 = arith.constant 1 : index
    %c3_194 = arith.constant 3 : index
    %699 = memref.load %arg2[%c1_193, %c3_194] : memref<2x9xf32, #tpu.memory_space<smem>>
    %700 = vector.broadcast %699 : f32 to vector<3x32xf32>
    %701 = arith.mulf %700, %698 : vector<3x32xf32>
    %702 = arith.addf %677, %701 : vector<3x32xf32>
    %703 = vector.extract_strided_slice %584 {offsets = [4, 4], sizes = [3, 3], strides = [1, 1]} : vector<10x10xf32> to vector<3x3xf32>
    %704 = vector.extract_strided_slice %575 {offsets = [4, 0], sizes = [3, 32], strides = [1, 1]} : vector<10x32xf32> to vector<3x32xf32>
    %cst_195 = arith.constant dense<0xFF800000> : vector<3xf32>
    %705 = vector.multi_reduction <maximumf>, %703, %cst_195 [1] : vector<3x3xf32> to vector<3xf32>
    %706 = vector.shape_cast %705 : vector<3xf32> to vector<3x1xf32>
    %707 = vector.broadcast %706 : vector<3x1xf32> to vector<3x3xf32>
    %708 = arith.subf %703, %707 : vector<3x3xf32>
    %709 = math.exp %708 : vector<3x3xf32>
    %cst_196 = arith.constant dense<0.000000e+00> : vector<3xf32>
    %710 = vector.multi_reduction <add>, %709, %cst_196 [1] : vector<3x3xf32> to vector<3xf32>
    %711 = vector.shape_cast %710 : vector<3xf32> to vector<3x1xf32>
    %712 = tpu.reciprocal %711 {approx = true} : vector<3x1xf32> -> vector<3x1xf32>
    %713 = vector.broadcast %712 : vector<3x1xf32> to vector<3x3xf32>
    %714 = arith.mulf %709, %713 : vector<3x3xf32>
    %cst_197 = arith.constant dense<0.000000e+00> : vector<3x32xf32>
    %715 = tpu.matmul %714, %704, %cst_197 {dimension_numbers = #tpu.dot_dimension_numbers<[1], [0], [0], [1], [0, 0, 1, 1], [], []>} : vector<3x3xf32>, vector<3x32xf32>, vector<3x32xf32> -> vector<3x32xf32>
    %716 = vector.broadcast %582 : f32 to vector<3x32xf32>
    %717 = arith.mulf %716, %715 : vector<3x32xf32>
    %718 = vector.extract_strided_slice %564 {offsets = [4, 0], sizes = [3, 32], strides = [1, 1]} : vector<10x32xf32> to vector<3x32xf32>
    %719 = vector.extract_strided_slice %581 {offsets = [4, 0], sizes = [3, 32], strides = [1, 1]} : vector<10x32xf32> to vector<3x32xf32>
    %720 = arith.mulf %718, %719 : vector<3x32xf32>
    %721 = vector.broadcast %583 : f32 to vector<3x32xf32>
    %722 = arith.mulf %721, %720 : vector<3x32xf32>
    %723 = arith.addf %717, %722 : vector<3x32xf32>
    %c1_198 = arith.constant 1 : index
    %c4_199 = arith.constant 4 : index
    %724 = memref.load %arg2[%c1_198, %c4_199] : memref<2x9xf32, #tpu.memory_space<smem>>
    %725 = vector.broadcast %724 : f32 to vector<3x32xf32>
    %726 = arith.mulf %725, %723 : vector<3x32xf32>
    %727 = arith.addf %702, %726 : vector<3x32xf32>
    %728 = vector.extract_strided_slice %584 {offsets = [6, 4], sizes = [3, 3], strides = [1, 1]} : vector<10x10xf32> to vector<3x3xf32>
    %729 = vector.extract_strided_slice %575 {offsets = [4, 0], sizes = [3, 32], strides = [1, 1]} : vector<10x32xf32> to vector<3x32xf32>
    %cst_200 = arith.constant dense<0xFF800000> : vector<3xf32>
    %730 = vector.multi_reduction <maximumf>, %728, %cst_200 [1] : vector<3x3xf32> to vector<3xf32>
    %731 = vector.shape_cast %730 : vector<3xf32> to vector<3x1xf32>
    %732 = vector.broadcast %731 : vector<3x1xf32> to vector<3x3xf32>
    %733 = arith.subf %728, %732 : vector<3x3xf32>
    %734 = math.exp %733 : vector<3x3xf32>
    %cst_201 = arith.constant dense<0.000000e+00> : vector<3xf32>
    %735 = vector.multi_reduction <add>, %734, %cst_201 [1] : vector<3x3xf32> to vector<3xf32>
    %736 = vector.shape_cast %735 : vector<3xf32> to vector<3x1xf32>
    %737 = tpu.reciprocal %736 {approx = true} : vector<3x1xf32> -> vector<3x1xf32>
    %738 = vector.broadcast %737 : vector<3x1xf32> to vector<3x3xf32>
    %739 = arith.mulf %734, %738 : vector<3x3xf32>
    %cst_202 = arith.constant dense<0.000000e+00> : vector<3x32xf32>
    %740 = tpu.matmul %739, %729, %cst_202 {dimension_numbers = #tpu.dot_dimension_numbers<[1], [0], [0], [1], [0, 0, 1, 1], [], []>} : vector<3x3xf32>, vector<3x32xf32>, vector<3x32xf32> -> vector<3x32xf32>
    %741 = vector.broadcast %582 : f32 to vector<3x32xf32>
    %742 = arith.mulf %741, %740 : vector<3x32xf32>
    %743 = vector.extract_strided_slice %564 {offsets = [6, 0], sizes = [3, 32], strides = [1, 1]} : vector<10x32xf32> to vector<3x32xf32>
    %744 = vector.extract_strided_slice %581 {offsets = [4, 0], sizes = [3, 32], strides = [1, 1]} : vector<10x32xf32> to vector<3x32xf32>
    %745 = arith.mulf %743, %744 : vector<3x32xf32>
    %746 = vector.broadcast %583 : f32 to vector<3x32xf32>
    %747 = arith.mulf %746, %745 : vector<3x32xf32>
    %748 = arith.addf %742, %747 : vector<3x32xf32>
    %c1_203 = arith.constant 1 : index
    %c5_204 = arith.constant 5 : index
    %749 = memref.load %arg2[%c1_203, %c5_204] : memref<2x9xf32, #tpu.memory_space<smem>>
    %750 = vector.broadcast %749 : f32 to vector<3x32xf32>
    %751 = arith.mulf %750, %748 : vector<3x32xf32>
    %752 = arith.addf %727, %751 : vector<3x32xf32>
    %753 = vector.extract_strided_slice %584 {offsets = [2, 6], sizes = [3, 3], strides = [1, 1]} : vector<10x10xf32> to vector<3x3xf32>
    %754 = vector.extract_strided_slice %575 {offsets = [6, 0], sizes = [3, 32], strides = [1, 1]} : vector<10x32xf32> to vector<3x32xf32>
    %cst_205 = arith.constant dense<0xFF800000> : vector<3xf32>
    %755 = vector.multi_reduction <maximumf>, %753, %cst_205 [1] : vector<3x3xf32> to vector<3xf32>
    %756 = vector.shape_cast %755 : vector<3xf32> to vector<3x1xf32>
    %757 = vector.broadcast %756 : vector<3x1xf32> to vector<3x3xf32>
    %758 = arith.subf %753, %757 : vector<3x3xf32>
    %759 = math.exp %758 : vector<3x3xf32>
    %cst_206 = arith.constant dense<0.000000e+00> : vector<3xf32>
    %760 = vector.multi_reduction <add>, %759, %cst_206 [1] : vector<3x3xf32> to vector<3xf32>
    %761 = vector.shape_cast %760 : vector<3xf32> to vector<3x1xf32>
    %762 = tpu.reciprocal %761 {approx = true} : vector<3x1xf32> -> vector<3x1xf32>
    %763 = vector.broadcast %762 : vector<3x1xf32> to vector<3x3xf32>
    %764 = arith.mulf %759, %763 : vector<3x3xf32>
    %cst_207 = arith.constant dense<0.000000e+00> : vector<3x32xf32>
    %765 = tpu.matmul %764, %754, %cst_207 {dimension_numbers = #tpu.dot_dimension_numbers<[1], [0], [0], [1], [0, 0, 1, 1], [], []>} : vector<3x3xf32>, vector<3x32xf32>, vector<3x32xf32> -> vector<3x32xf32>
    %766 = vector.broadcast %582 : f32 to vector<3x32xf32>
    %767 = arith.mulf %766, %765 : vector<3x32xf32>
    %768 = vector.extract_strided_slice %564 {offsets = [2, 0], sizes = [3, 32], strides = [1, 1]} : vector<10x32xf32> to vector<3x32xf32>
    %769 = vector.extract_strided_slice %581 {offsets = [6, 0], sizes = [3, 32], strides = [1, 1]} : vector<10x32xf32> to vector<3x32xf32>
    %770 = arith.mulf %768, %769 : vector<3x32xf32>
    %771 = vector.broadcast %583 : f32 to vector<3x32xf32>
    %772 = arith.mulf %771, %770 : vector<3x32xf32>
    %773 = arith.addf %767, %772 : vector<3x32xf32>
    %c1_208 = arith.constant 1 : index
    %c6_209 = arith.constant 6 : index
    %774 = memref.load %arg2[%c1_208, %c6_209] : memref<2x9xf32, #tpu.memory_space<smem>>
    %775 = vector.broadcast %774 : f32 to vector<3x32xf32>
    %776 = arith.mulf %775, %773 : vector<3x32xf32>
    %777 = arith.addf %752, %776 : vector<3x32xf32>
    %778 = vector.extract_strided_slice %584 {offsets = [4, 6], sizes = [3, 3], strides = [1, 1]} : vector<10x10xf32> to vector<3x3xf32>
    %779 = vector.extract_strided_slice %575 {offsets = [6, 0], sizes = [3, 32], strides = [1, 1]} : vector<10x32xf32> to vector<3x32xf32>
    %cst_210 = arith.constant dense<0xFF800000> : vector<3xf32>
    %780 = vector.multi_reduction <maximumf>, %778, %cst_210 [1] : vector<3x3xf32> to vector<3xf32>
    %781 = vector.shape_cast %780 : vector<3xf32> to vector<3x1xf32>
    %782 = vector.broadcast %781 : vector<3x1xf32> to vector<3x3xf32>
    %783 = arith.subf %778, %782 : vector<3x3xf32>
    %784 = math.exp %783 : vector<3x3xf32>
    %cst_211 = arith.constant dense<0.000000e+00> : vector<3xf32>
    %785 = vector.multi_reduction <add>, %784, %cst_211 [1] : vector<3x3xf32> to vector<3xf32>
    %786 = vector.shape_cast %785 : vector<3xf32> to vector<3x1xf32>
    %787 = tpu.reciprocal %786 {approx = true} : vector<3x1xf32> -> vector<3x1xf32>
    %788 = vector.broadcast %787 : vector<3x1xf32> to vector<3x3xf32>
    %789 = arith.mulf %784, %788 : vector<3x3xf32>
    %cst_212 = arith.constant dense<0.000000e+00> : vector<3x32xf32>
    %790 = tpu.matmul %789, %779, %cst_212 {dimension_numbers = #tpu.dot_dimension_numbers<[1], [0], [0], [1], [0, 0, 1, 1], [], []>} : vector<3x3xf32>, vector<3x32xf32>, vector<3x32xf32> -> vector<3x32xf32>
    %791 = vector.broadcast %582 : f32 to vector<3x32xf32>
    %792 = arith.mulf %791, %790 : vector<3x32xf32>
    %793 = vector.extract_strided_slice %564 {offsets = [4, 0], sizes = [3, 32], strides = [1, 1]} : vector<10x32xf32> to vector<3x32xf32>
    %794 = vector.extract_strided_slice %581 {offsets = [6, 0], sizes = [3, 32], strides = [1, 1]} : vector<10x32xf32> to vector<3x32xf32>
    %795 = arith.mulf %793, %794 : vector<3x32xf32>
    %796 = vector.broadcast %583 : f32 to vector<3x32xf32>
    %797 = arith.mulf %796, %795 : vector<3x32xf32>
    %798 = arith.addf %792, %797 : vector<3x32xf32>
    %c1_213 = arith.constant 1 : index
    %c7_214 = arith.constant 7 : index
    %799 = memref.load %arg2[%c1_213, %c7_214] : memref<2x9xf32, #tpu.memory_space<smem>>
    %800 = vector.broadcast %799 : f32 to vector<3x32xf32>
    %801 = arith.mulf %800, %798 : vector<3x32xf32>
    %802 = arith.addf %777, %801 : vector<3x32xf32>
    %803 = vector.extract_strided_slice %584 {offsets = [6, 6], sizes = [3, 3], strides = [1, 1]} : vector<10x10xf32> to vector<3x3xf32>
    %804 = vector.extract_strided_slice %575 {offsets = [6, 0], sizes = [3, 32], strides = [1, 1]} : vector<10x32xf32> to vector<3x32xf32>
    %cst_215 = arith.constant dense<0xFF800000> : vector<3xf32>
    %805 = vector.multi_reduction <maximumf>, %803, %cst_215 [1] : vector<3x3xf32> to vector<3xf32>
    %806 = vector.shape_cast %805 : vector<3xf32> to vector<3x1xf32>
    %807 = vector.broadcast %806 : vector<3x1xf32> to vector<3x3xf32>
    %808 = arith.subf %803, %807 : vector<3x3xf32>
    %809 = math.exp %808 : vector<3x3xf32>
    %cst_216 = arith.constant dense<0.000000e+00> : vector<3xf32>
    %810 = vector.multi_reduction <add>, %809, %cst_216 [1] : vector<3x3xf32> to vector<3xf32>
    %811 = vector.shape_cast %810 : vector<3xf32> to vector<3x1xf32>
    %812 = tpu.reciprocal %811 {approx = true} : vector<3x1xf32> -> vector<3x1xf32>
    %813 = vector.broadcast %812 : vector<3x1xf32> to vector<3x3xf32>
    %814 = arith.mulf %809, %813 : vector<3x3xf32>
    %cst_217 = arith.constant dense<0.000000e+00> : vector<3x32xf32>
    %815 = tpu.matmul %814, %804, %cst_217 {dimension_numbers = #tpu.dot_dimension_numbers<[1], [0], [0], [1], [0, 0, 1, 1], [], []>} : vector<3x3xf32>, vector<3x32xf32>, vector<3x32xf32> -> vector<3x32xf32>
    %816 = vector.broadcast %582 : f32 to vector<3x32xf32>
    %817 = arith.mulf %816, %815 : vector<3x32xf32>
    %818 = vector.extract_strided_slice %564 {offsets = [6, 0], sizes = [3, 32], strides = [1, 1]} : vector<10x32xf32> to vector<3x32xf32>
    %819 = vector.extract_strided_slice %581 {offsets = [6, 0], sizes = [3, 32], strides = [1, 1]} : vector<10x32xf32> to vector<3x32xf32>
    %820 = arith.mulf %818, %819 : vector<3x32xf32>
    %821 = vector.broadcast %583 : f32 to vector<3x32xf32>
    %822 = arith.mulf %821, %820 : vector<3x32xf32>
    %823 = arith.addf %817, %822 : vector<3x32xf32>
    %c1_218 = arith.constant 1 : index
    %c8_219 = arith.constant 8 : index
    %824 = memref.load %arg2[%c1_218, %c8_219] : memref<2x9xf32, #tpu.memory_space<smem>>
    %825 = vector.broadcast %824 : f32 to vector<3x32xf32>
    %826 = arith.mulf %825, %823 : vector<3x32xf32>
    %827 = arith.addf %802, %826 : vector<3x32xf32>
    %c1_220 = arith.constant 1 : index
    %c0_221 = arith.constant 0 : index
    %828 = memref.load %arg3[%c1_220, %c0_221] : memref<2x2xf32, #tpu.memory_space<smem>>
    %cst_222 = arith.constant dense<0.000000e+00> : vector<10x32xf32>
    %829 = tpu.matmul %0, %827, %cst_222 {dimension_numbers = #tpu.dot_dimension_numbers<[1], [0], [0], [1], [0, 0, 1, 1], [], []>} : vector<10x3xf32>, vector<3x32xf32>, vector<10x32xf32> -> vector<10x32xf32>
    %830 = vector.broadcast %828 : f32 to vector<10x32xf32>
    %831 = arith.mulf %830, %829 : vector<10x32xf32>
    %832 = arith.addf %601, %831 : vector<10x32xf32>
    %cst_223 = arith.constant 0.000000e+00 : f32
    %833 = vector.broadcast %cst_223 : f32 to vector<5x32xf32>
    %834 = vector.extract_strided_slice %584 {offsets = [1, 1], sizes = [5, 5], strides = [1, 1]} : vector<10x10xf32> to vector<5x5xf32>
    %835 = vector.extract_strided_slice %575 {offsets = [1, 0], sizes = [5, 32], strides = [1, 1]} : vector<10x32xf32> to vector<5x32xf32>
    %cst_224 = arith.constant dense<0xFF800000> : vector<5xf32>
    %836 = vector.multi_reduction <maximumf>, %834, %cst_224 [1] : vector<5x5xf32> to vector<5xf32>
    %837 = vector.shape_cast %836 : vector<5xf32> to vector<5x1xf32>
    %838 = vector.broadcast %837 : vector<5x1xf32> to vector<5x5xf32>
    %839 = arith.subf %834, %838 : vector<5x5xf32>
    %840 = math.exp %839 : vector<5x5xf32>
    %cst_225 = arith.constant dense<0.000000e+00> : vector<5xf32>
    %841 = vector.multi_reduction <add>, %840, %cst_225 [1] : vector<5x5xf32> to vector<5xf32>
    %842 = vector.shape_cast %841 : vector<5xf32> to vector<5x1xf32>
    %843 = tpu.reciprocal %842 {approx = true} : vector<5x1xf32> -> vector<5x1xf32>
    %844 = vector.broadcast %843 : vector<5x1xf32> to vector<5x5xf32>
    %845 = arith.mulf %840, %844 : vector<5x5xf32>
    %cst_226 = arith.constant dense<0.000000e+00> : vector<5x32xf32>
    %846 = tpu.matmul %845, %835, %cst_226 {dimension_numbers = #tpu.dot_dimension_numbers<[1], [0], [0], [1], [0, 0, 1, 1], [], []>} : vector<5x5xf32>, vector<5x32xf32>, vector<5x32xf32> -> vector<5x32xf32>
    %847 = vector.broadcast %582 : f32 to vector<5x32xf32>
    %848 = arith.mulf %847, %846 : vector<5x32xf32>
    %849 = vector.extract_strided_slice %564 {offsets = [1, 0], sizes = [5, 32], strides = [1, 1]} : vector<10x32xf32> to vector<5x32xf32>
    %850 = vector.extract_strided_slice %581 {offsets = [1, 0], sizes = [5, 32], strides = [1, 1]} : vector<10x32xf32> to vector<5x32xf32>
    %851 = arith.mulf %849, %850 : vector<5x32xf32>
    %852 = vector.broadcast %583 : f32 to vector<5x32xf32>
    %853 = arith.mulf %852, %851 : vector<5x32xf32>
    %854 = arith.addf %848, %853 : vector<5x32xf32>
    %c1_227 = arith.constant 1 : index
    %c0_228 = arith.constant 0 : index
    %855 = memref.load %arg2[%c1_227, %c0_228] : memref<2x9xf32, #tpu.memory_space<smem>>
    %856 = vector.broadcast %855 : f32 to vector<5x32xf32>
    %857 = arith.mulf %856, %854 : vector<5x32xf32>
    %858 = arith.addf %833, %857 : vector<5x32xf32>
    %859 = vector.extract_strided_slice %584 {offsets = [3, 1], sizes = [5, 5], strides = [1, 1]} : vector<10x10xf32> to vector<5x5xf32>
    %860 = vector.extract_strided_slice %575 {offsets = [1, 0], sizes = [5, 32], strides = [1, 1]} : vector<10x32xf32> to vector<5x32xf32>
    %cst_229 = arith.constant dense<0xFF800000> : vector<5xf32>
    %861 = vector.multi_reduction <maximumf>, %859, %cst_229 [1] : vector<5x5xf32> to vector<5xf32>
    %862 = vector.shape_cast %861 : vector<5xf32> to vector<5x1xf32>
    %863 = vector.broadcast %862 : vector<5x1xf32> to vector<5x5xf32>
    %864 = arith.subf %859, %863 : vector<5x5xf32>
    %865 = math.exp %864 : vector<5x5xf32>
    %cst_230 = arith.constant dense<0.000000e+00> : vector<5xf32>
    %866 = vector.multi_reduction <add>, %865, %cst_230 [1] : vector<5x5xf32> to vector<5xf32>
    %867 = vector.shape_cast %866 : vector<5xf32> to vector<5x1xf32>
    %868 = tpu.reciprocal %867 {approx = true} : vector<5x1xf32> -> vector<5x1xf32>
    %869 = vector.broadcast %868 : vector<5x1xf32> to vector<5x5xf32>
    %870 = arith.mulf %865, %869 : vector<5x5xf32>
    %cst_231 = arith.constant dense<0.000000e+00> : vector<5x32xf32>
    %871 = tpu.matmul %870, %860, %cst_231 {dimension_numbers = #tpu.dot_dimension_numbers<[1], [0], [0], [1], [0, 0, 1, 1], [], []>} : vector<5x5xf32>, vector<5x32xf32>, vector<5x32xf32> -> vector<5x32xf32>
    %872 = vector.broadcast %582 : f32 to vector<5x32xf32>
    %873 = arith.mulf %872, %871 : vector<5x32xf32>
    %874 = vector.extract_strided_slice %564 {offsets = [3, 0], sizes = [5, 32], strides = [1, 1]} : vector<10x32xf32> to vector<5x32xf32>
    %875 = vector.extract_strided_slice %581 {offsets = [1, 0], sizes = [5, 32], strides = [1, 1]} : vector<10x32xf32> to vector<5x32xf32>
    %876 = arith.mulf %874, %875 : vector<5x32xf32>
    %877 = vector.broadcast %583 : f32 to vector<5x32xf32>
    %878 = arith.mulf %877, %876 : vector<5x32xf32>
    %879 = arith.addf %873, %878 : vector<5x32xf32>
    %c1_232 = arith.constant 1 : index
    %c1_233 = arith.constant 1 : index
    %880 = memref.load %arg2[%c1_232, %c1_233] : memref<2x9xf32, #tpu.memory_space<smem>>
    %881 = vector.broadcast %880 : f32 to vector<5x32xf32>
    %882 = arith.mulf %881, %879 : vector<5x32xf32>
    %883 = arith.addf %858, %882 : vector<5x32xf32>
    %884 = vector.extract_strided_slice %584 {offsets = [5, 1], sizes = [5, 5], strides = [1, 1]} : vector<10x10xf32> to vector<5x5xf32>
    %885 = vector.extract_strided_slice %575 {offsets = [1, 0], sizes = [5, 32], strides = [1, 1]} : vector<10x32xf32> to vector<5x32xf32>
    %cst_234 = arith.constant dense<0xFF800000> : vector<5xf32>
    %886 = vector.multi_reduction <maximumf>, %884, %cst_234 [1] : vector<5x5xf32> to vector<5xf32>
    %887 = vector.shape_cast %886 : vector<5xf32> to vector<5x1xf32>
    %888 = vector.broadcast %887 : vector<5x1xf32> to vector<5x5xf32>
    %889 = arith.subf %884, %888 : vector<5x5xf32>
    %890 = math.exp %889 : vector<5x5xf32>
    %cst_235 = arith.constant dense<0.000000e+00> : vector<5xf32>
    %891 = vector.multi_reduction <add>, %890, %cst_235 [1] : vector<5x5xf32> to vector<5xf32>
    %892 = vector.shape_cast %891 : vector<5xf32> to vector<5x1xf32>
    %893 = tpu.reciprocal %892 {approx = true} : vector<5x1xf32> -> vector<5x1xf32>
    %894 = vector.broadcast %893 : vector<5x1xf32> to vector<5x5xf32>
    %895 = arith.mulf %890, %894 : vector<5x5xf32>
    %cst_236 = arith.constant dense<0.000000e+00> : vector<5x32xf32>
    %896 = tpu.matmul %895, %885, %cst_236 {dimension_numbers = #tpu.dot_dimension_numbers<[1], [0], [0], [1], [0, 0, 1, 1], [], []>} : vector<5x5xf32>, vector<5x32xf32>, vector<5x32xf32> -> vector<5x32xf32>
    %897 = vector.broadcast %582 : f32 to vector<5x32xf32>
    %898 = arith.mulf %897, %896 : vector<5x32xf32>
    %899 = vector.extract_strided_slice %564 {offsets = [5, 0], sizes = [5, 32], strides = [1, 1]} : vector<10x32xf32> to vector<5x32xf32>
    %900 = vector.extract_strided_slice %581 {offsets = [1, 0], sizes = [5, 32], strides = [1, 1]} : vector<10x32xf32> to vector<5x32xf32>
    %901 = arith.mulf %899, %900 : vector<5x32xf32>
    %902 = vector.broadcast %583 : f32 to vector<5x32xf32>
    %903 = arith.mulf %902, %901 : vector<5x32xf32>
    %904 = arith.addf %898, %903 : vector<5x32xf32>
    %c1_237 = arith.constant 1 : index
    %c2_238 = arith.constant 2 : index
    %905 = memref.load %arg2[%c1_237, %c2_238] : memref<2x9xf32, #tpu.memory_space<smem>>
    %906 = vector.broadcast %905 : f32 to vector<5x32xf32>
    %907 = arith.mulf %906, %904 : vector<5x32xf32>
    %908 = arith.addf %883, %907 : vector<5x32xf32>
    %909 = vector.extract_strided_slice %584 {offsets = [1, 3], sizes = [5, 5], strides = [1, 1]} : vector<10x10xf32> to vector<5x5xf32>
    %910 = vector.extract_strided_slice %575 {offsets = [3, 0], sizes = [5, 32], strides = [1, 1]} : vector<10x32xf32> to vector<5x32xf32>
    %cst_239 = arith.constant dense<0xFF800000> : vector<5xf32>
    %911 = vector.multi_reduction <maximumf>, %909, %cst_239 [1] : vector<5x5xf32> to vector<5xf32>
    %912 = vector.shape_cast %911 : vector<5xf32> to vector<5x1xf32>
    %913 = vector.broadcast %912 : vector<5x1xf32> to vector<5x5xf32>
    %914 = arith.subf %909, %913 : vector<5x5xf32>
    %915 = math.exp %914 : vector<5x5xf32>
    %cst_240 = arith.constant dense<0.000000e+00> : vector<5xf32>
    %916 = vector.multi_reduction <add>, %915, %cst_240 [1] : vector<5x5xf32> to vector<5xf32>
    %917 = vector.shape_cast %916 : vector<5xf32> to vector<5x1xf32>
    %918 = tpu.reciprocal %917 {approx = true} : vector<5x1xf32> -> vector<5x1xf32>
    %919 = vector.broadcast %918 : vector<5x1xf32> to vector<5x5xf32>
    %920 = arith.mulf %915, %919 : vector<5x5xf32>
    %cst_241 = arith.constant dense<0.000000e+00> : vector<5x32xf32>
    %921 = tpu.matmul %920, %910, %cst_241 {dimension_numbers = #tpu.dot_dimension_numbers<[1], [0], [0], [1], [0, 0, 1, 1], [], []>} : vector<5x5xf32>, vector<5x32xf32>, vector<5x32xf32> -> vector<5x32xf32>
    %922 = vector.broadcast %582 : f32 to vector<5x32xf32>
    %923 = arith.mulf %922, %921 : vector<5x32xf32>
    %924 = vector.extract_strided_slice %564 {offsets = [1, 0], sizes = [5, 32], strides = [1, 1]} : vector<10x32xf32> to vector<5x32xf32>
    %925 = vector.extract_strided_slice %581 {offsets = [3, 0], sizes = [5, 32], strides = [1, 1]} : vector<10x32xf32> to vector<5x32xf32>
    %926 = arith.mulf %924, %925 : vector<5x32xf32>
    %927 = vector.broadcast %583 : f32 to vector<5x32xf32>
    %928 = arith.mulf %927, %926 : vector<5x32xf32>
    %929 = arith.addf %923, %928 : vector<5x32xf32>
    %c1_242 = arith.constant 1 : index
    %c3_243 = arith.constant 3 : index
    %930 = memref.load %arg2[%c1_242, %c3_243] : memref<2x9xf32, #tpu.memory_space<smem>>
    %931 = vector.broadcast %930 : f32 to vector<5x32xf32>
    %932 = arith.mulf %931, %929 : vector<5x32xf32>
    %933 = arith.addf %908, %932 : vector<5x32xf32>
    %934 = vector.extract_strided_slice %584 {offsets = [3, 3], sizes = [5, 5], strides = [1, 1]} : vector<10x10xf32> to vector<5x5xf32>
    %935 = vector.extract_strided_slice %575 {offsets = [3, 0], sizes = [5, 32], strides = [1, 1]} : vector<10x32xf32> to vector<5x32xf32>
    %cst_244 = arith.constant dense<0xFF800000> : vector<5xf32>
    %936 = vector.multi_reduction <maximumf>, %934, %cst_244 [1] : vector<5x5xf32> to vector<5xf32>
    %937 = vector.shape_cast %936 : vector<5xf32> to vector<5x1xf32>
    %938 = vector.broadcast %937 : vector<5x1xf32> to vector<5x5xf32>
    %939 = arith.subf %934, %938 : vector<5x5xf32>
    %940 = math.exp %939 : vector<5x5xf32>
    %cst_245 = arith.constant dense<0.000000e+00> : vector<5xf32>
    %941 = vector.multi_reduction <add>, %940, %cst_245 [1] : vector<5x5xf32> to vector<5xf32>
    %942 = vector.shape_cast %941 : vector<5xf32> to vector<5x1xf32>
    %943 = tpu.reciprocal %942 {approx = true} : vector<5x1xf32> -> vector<5x1xf32>
    %944 = vector.broadcast %943 : vector<5x1xf32> to vector<5x5xf32>
    %945 = arith.mulf %940, %944 : vector<5x5xf32>
    %cst_246 = arith.constant dense<0.000000e+00> : vector<5x32xf32>
    %946 = tpu.matmul %945, %935, %cst_246 {dimension_numbers = #tpu.dot_dimension_numbers<[1], [0], [0], [1], [0, 0, 1, 1], [], []>} : vector<5x5xf32>, vector<5x32xf32>, vector<5x32xf32> -> vector<5x32xf32>
    %947 = vector.broadcast %582 : f32 to vector<5x32xf32>
    %948 = arith.mulf %947, %946 : vector<5x32xf32>
    %949 = vector.extract_strided_slice %564 {offsets = [3, 0], sizes = [5, 32], strides = [1, 1]} : vector<10x32xf32> to vector<5x32xf32>
    %950 = vector.extract_strided_slice %581 {offsets = [3, 0], sizes = [5, 32], strides = [1, 1]} : vector<10x32xf32> to vector<5x32xf32>
    %951 = arith.mulf %949, %950 : vector<5x32xf32>
    %952 = vector.broadcast %583 : f32 to vector<5x32xf32>
    %953 = arith.mulf %952, %951 : vector<5x32xf32>
    %954 = arith.addf %948, %953 : vector<5x32xf32>
    %c1_247 = arith.constant 1 : index
    %c4_248 = arith.constant 4 : index
    %955 = memref.load %arg2[%c1_247, %c4_248] : memref<2x9xf32, #tpu.memory_space<smem>>
    %956 = vector.broadcast %955 : f32 to vector<5x32xf32>
    %957 = arith.mulf %956, %954 : vector<5x32xf32>
    %958 = arith.addf %933, %957 : vector<5x32xf32>
    %959 = vector.extract_strided_slice %584 {offsets = [5, 3], sizes = [5, 5], strides = [1, 1]} : vector<10x10xf32> to vector<5x5xf32>
    %960 = vector.extract_strided_slice %575 {offsets = [3, 0], sizes = [5, 32], strides = [1, 1]} : vector<10x32xf32> to vector<5x32xf32>
    %cst_249 = arith.constant dense<0xFF800000> : vector<5xf32>
    %961 = vector.multi_reduction <maximumf>, %959, %cst_249 [1] : vector<5x5xf32> to vector<5xf32>
    %962 = vector.shape_cast %961 : vector<5xf32> to vector<5x1xf32>
    %963 = vector.broadcast %962 : vector<5x1xf32> to vector<5x5xf32>
    %964 = arith.subf %959, %963 : vector<5x5xf32>
    %965 = math.exp %964 : vector<5x5xf32>
    %cst_250 = arith.constant dense<0.000000e+00> : vector<5xf32>
    %966 = vector.multi_reduction <add>, %965, %cst_250 [1] : vector<5x5xf32> to vector<5xf32>
    %967 = vector.shape_cast %966 : vector<5xf32> to vector<5x1xf32>
    %968 = tpu.reciprocal %967 {approx = true} : vector<5x1xf32> -> vector<5x1xf32>
    %969 = vector.broadcast %968 : vector<5x1xf32> to vector<5x5xf32>
    %970 = arith.mulf %965, %969 : vector<5x5xf32>
    %cst_251 = arith.constant dense<0.000000e+00> : vector<5x32xf32>
    %971 = tpu.matmul %970, %960, %cst_251 {dimension_numbers = #tpu.dot_dimension_numbers<[1], [0], [0], [1], [0, 0, 1, 1], [], []>} : vector<5x5xf32>, vector<5x32xf32>, vector<5x32xf32> -> vector<5x32xf32>
    %972 = vector.broadcast %582 : f32 to vector<5x32xf32>
    %973 = arith.mulf %972, %971 : vector<5x32xf32>
    %974 = vector.extract_strided_slice %564 {offsets = [5, 0], sizes = [5, 32], strides = [1, 1]} : vector<10x32xf32> to vector<5x32xf32>
    %975 = vector.extract_strided_slice %581 {offsets = [3, 0], sizes = [5, 32], strides = [1, 1]} : vector<10x32xf32> to vector<5x32xf32>
    %976 = arith.mulf %974, %975 : vector<5x32xf32>
    %977 = vector.broadcast %583 : f32 to vector<5x32xf32>
    %978 = arith.mulf %977, %976 : vector<5x32xf32>
    %979 = arith.addf %973, %978 : vector<5x32xf32>
    %c1_252 = arith.constant 1 : index
    %c5_253 = arith.constant 5 : index
    %980 = memref.load %arg2[%c1_252, %c5_253] : memref<2x9xf32, #tpu.memory_space<smem>>
    %981 = vector.broadcast %980 : f32 to vector<5x32xf32>
    %982 = arith.mulf %981, %979 : vector<5x32xf32>
    %983 = arith.addf %958, %982 : vector<5x32xf32>
    %984 = vector.extract_strided_slice %584 {offsets = [1, 5], sizes = [5, 5], strides = [1, 1]} : vector<10x10xf32> to vector<5x5xf32>
    %985 = vector.extract_strided_slice %575 {offsets = [5, 0], sizes = [5, 32], strides = [1, 1]} : vector<10x32xf32> to vector<5x32xf32>
    %cst_254 = arith.constant dense<0xFF800000> : vector<5xf32>
    %986 = vector.multi_reduction <maximumf>, %984, %cst_254 [1] : vector<5x5xf32> to vector<5xf32>
    %987 = vector.shape_cast %986 : vector<5xf32> to vector<5x1xf32>
    %988 = vector.broadcast %987 : vector<5x1xf32> to vector<5x5xf32>
    %989 = arith.subf %984, %988 : vector<5x5xf32>
    %990 = math.exp %989 : vector<5x5xf32>
    %cst_255 = arith.constant dense<0.000000e+00> : vector<5xf32>
    %991 = vector.multi_reduction <add>, %990, %cst_255 [1] : vector<5x5xf32> to vector<5xf32>
    %992 = vector.shape_cast %991 : vector<5xf32> to vector<5x1xf32>
    %993 = tpu.reciprocal %992 {approx = true} : vector<5x1xf32> -> vector<5x1xf32>
    %994 = vector.broadcast %993 : vector<5x1xf32> to vector<5x5xf32>
    %995 = arith.mulf %990, %994 : vector<5x5xf32>
    %cst_256 = arith.constant dense<0.000000e+00> : vector<5x32xf32>
    %996 = tpu.matmul %995, %985, %cst_256 {dimension_numbers = #tpu.dot_dimension_numbers<[1], [0], [0], [1], [0, 0, 1, 1], [], []>} : vector<5x5xf32>, vector<5x32xf32>, vector<5x32xf32> -> vector<5x32xf32>
    %997 = vector.broadcast %582 : f32 to vector<5x32xf32>
    %998 = arith.mulf %997, %996 : vector<5x32xf32>
    %999 = vector.extract_strided_slice %564 {offsets = [1, 0], sizes = [5, 32], strides = [1, 1]} : vector<10x32xf32> to vector<5x32xf32>
    %1000 = vector.extract_strided_slice %581 {offsets = [5, 0], sizes = [5, 32], strides = [1, 1]} : vector<10x32xf32> to vector<5x32xf32>
    %1001 = arith.mulf %999, %1000 : vector<5x32xf32>
    %1002 = vector.broadcast %583 : f32 to vector<5x32xf32>
    %1003 = arith.mulf %1002, %1001 : vector<5x32xf32>
    %1004 = arith.addf %998, %1003 : vector<5x32xf32>
    %c1_257 = arith.constant 1 : index
    %c6_258 = arith.constant 6 : index
    %1005 = memref.load %arg2[%c1_257, %c6_258] : memref<2x9xf32, #tpu.memory_space<smem>>
    %1006 = vector.broadcast %1005 : f32 to vector<5x32xf32>
    %1007 = arith.mulf %1006, %1004 : vector<5x32xf32>
    %1008 = arith.addf %983, %1007 : vector<5x32xf32>
    %1009 = vector.extract_strided_slice %584 {offsets = [3, 5], sizes = [5, 5], strides = [1, 1]} : vector<10x10xf32> to vector<5x5xf32>
    %1010 = vector.extract_strided_slice %575 {offsets = [5, 0], sizes = [5, 32], strides = [1, 1]} : vector<10x32xf32> to vector<5x32xf32>
    %cst_259 = arith.constant dense<0xFF800000> : vector<5xf32>
    %1011 = vector.multi_reduction <maximumf>, %1009, %cst_259 [1] : vector<5x5xf32> to vector<5xf32>
    %1012 = vector.shape_cast %1011 : vector<5xf32> to vector<5x1xf32>
    %1013 = vector.broadcast %1012 : vector<5x1xf32> to vector<5x5xf32>
    %1014 = arith.subf %1009, %1013 : vector<5x5xf32>
    %1015 = math.exp %1014 : vector<5x5xf32>
    %cst_260 = arith.constant dense<0.000000e+00> : vector<5xf32>
    %1016 = vector.multi_reduction <add>, %1015, %cst_260 [1] : vector<5x5xf32> to vector<5xf32>
    %1017 = vector.shape_cast %1016 : vector<5xf32> to vector<5x1xf32>
    %1018 = tpu.reciprocal %1017 {approx = true} : vector<5x1xf32> -> vector<5x1xf32>
    %1019 = vector.broadcast %1018 : vector<5x1xf32> to vector<5x5xf32>
    %1020 = arith.mulf %1015, %1019 : vector<5x5xf32>
    %cst_261 = arith.constant dense<0.000000e+00> : vector<5x32xf32>
    %1021 = tpu.matmul %1020, %1010, %cst_261 {dimension_numbers = #tpu.dot_dimension_numbers<[1], [0], [0], [1], [0, 0, 1, 1], [], []>} : vector<5x5xf32>, vector<5x32xf32>, vector<5x32xf32> -> vector<5x32xf32>
    %1022 = vector.broadcast %582 : f32 to vector<5x32xf32>
    %1023 = arith.mulf %1022, %1021 : vector<5x32xf32>
    %1024 = vector.extract_strided_slice %564 {offsets = [3, 0], sizes = [5, 32], strides = [1, 1]} : vector<10x32xf32> to vector<5x32xf32>
    %1025 = vector.extract_strided_slice %581 {offsets = [5, 0], sizes = [5, 32], strides = [1, 1]} : vector<10x32xf32> to vector<5x32xf32>
    %1026 = arith.mulf %1024, %1025 : vector<5x32xf32>
    %1027 = vector.broadcast %583 : f32 to vector<5x32xf32>
    %1028 = arith.mulf %1027, %1026 : vector<5x32xf32>
    %1029 = arith.addf %1023, %1028 : vector<5x32xf32>
    %c1_262 = arith.constant 1 : index
    %c7_263 = arith.constant 7 : index
    %1030 = memref.load %arg2[%c1_262, %c7_263] : memref<2x9xf32, #tpu.memory_space<smem>>
    %1031 = vector.broadcast %1030 : f32 to vector<5x32xf32>
    %1032 = arith.mulf %1031, %1029 : vector<5x32xf32>
    %1033 = arith.addf %1008, %1032 : vector<5x32xf32>
    %1034 = vector.extract_strided_slice %584 {offsets = [5, 5], sizes = [5, 5], strides = [1, 1]} : vector<10x10xf32> to vector<5x5xf32>
    %1035 = vector.extract_strided_slice %575 {offsets = [5, 0], sizes = [5, 32], strides = [1, 1]} : vector<10x32xf32> to vector<5x32xf32>
    %cst_264 = arith.constant dense<0xFF800000> : vector<5xf32>
    %1036 = vector.multi_reduction <maximumf>, %1034, %cst_264 [1] : vector<5x5xf32> to vector<5xf32>
    %1037 = vector.shape_cast %1036 : vector<5xf32> to vector<5x1xf32>
    %1038 = vector.broadcast %1037 : vector<5x1xf32> to vector<5x5xf32>
    %1039 = arith.subf %1034, %1038 : vector<5x5xf32>
    %1040 = math.exp %1039 : vector<5x5xf32>
    %cst_265 = arith.constant dense<0.000000e+00> : vector<5xf32>
    %1041 = vector.multi_reduction <add>, %1040, %cst_265 [1] : vector<5x5xf32> to vector<5xf32>
    %1042 = vector.shape_cast %1041 : vector<5xf32> to vector<5x1xf32>
    %1043 = tpu.reciprocal %1042 {approx = true} : vector<5x1xf32> -> vector<5x1xf32>
    %1044 = vector.broadcast %1043 : vector<5x1xf32> to vector<5x5xf32>
    %1045 = arith.mulf %1040, %1044 : vector<5x5xf32>
    %cst_266 = arith.constant dense<0.000000e+00> : vector<5x32xf32>
    %1046 = tpu.matmul %1045, %1035, %cst_266 {dimension_numbers = #tpu.dot_dimension_numbers<[1], [0], [0], [1], [0, 0, 1, 1], [], []>} : vector<5x5xf32>, vector<5x32xf32>, vector<5x32xf32> -> vector<5x32xf32>
    %1047 = vector.broadcast %582 : f32 to vector<5x32xf32>
    %1048 = arith.mulf %1047, %1046 : vector<5x32xf32>
    %1049 = vector.extract_strided_slice %564 {offsets = [5, 0], sizes = [5, 32], strides = [1, 1]} : vector<10x32xf32> to vector<5x32xf32>
    %1050 = vector.extract_strided_slice %581 {offsets = [5, 0], sizes = [5, 32], strides = [1, 1]} : vector<10x32xf32> to vector<5x32xf32>
    %1051 = arith.mulf %1049, %1050 : vector<5x32xf32>
    %1052 = vector.broadcast %583 : f32 to vector<5x32xf32>
    %1053 = arith.mulf %1052, %1051 : vector<5x32xf32>
    %1054 = arith.addf %1048, %1053 : vector<5x32xf32>
    %c1_267 = arith.constant 1 : index
    %c8_268 = arith.constant 8 : index
    %1055 = memref.load %arg2[%c1_267, %c8_268] : memref<2x9xf32, #tpu.memory_space<smem>>
    %1056 = vector.broadcast %1055 : f32 to vector<5x32xf32>
    %1057 = arith.mulf %1056, %1054 : vector<5x32xf32>
    %1058 = arith.addf %1033, %1057 : vector<5x32xf32>
    %c1_269 = arith.constant 1 : index
    %c1_270 = arith.constant 1 : index
    %1059 = memref.load %arg3[%c1_269, %c1_270] : memref<2x2xf32, #tpu.memory_space<smem>>
    %cst_271 = arith.constant dense<0.000000e+00> : vector<10x32xf32>
    %1060 = tpu.matmul %1, %1058, %cst_271 {dimension_numbers = #tpu.dot_dimension_numbers<[1], [0], [0], [1], [0, 0, 1, 1], [], []>} : vector<10x5xf32>, vector<5x32xf32>, vector<10x32xf32> -> vector<10x32xf32>
    %1061 = vector.broadcast %1059 : f32 to vector<10x32xf32>
    %1062 = arith.mulf %1061, %1060 : vector<10x32xf32>
    %1063 = arith.addf %832, %1062 : vector<10x32xf32>
    %1064 = tpu.concatenate %534, %1063 in 1 : vector<10x32xf32>, vector<10x32xf32> -> vector<10x64xf32>
    %c0_272 = arith.constant 0 : index
    %c0_273 = arith.constant 0 : index
    %1065 = vector.load %arg10[%c0_272, %c0_273] : memref<64x32xf32, #tpu.memory_space<vmem>>, vector<64x32xf32>
    %cst_274 = arith.constant dense<0.000000e+00> : vector<10x32xf32>
    %1066 = tpu.matmul %1064, %1065, %cst_274 {dimension_numbers = #tpu.dot_dimension_numbers<[1], [0], [0], [1], [0, 0, 1, 1], [], []>} : vector<10x64xf32>, vector<64x32xf32>, vector<10x32xf32> -> vector<10x32xf32>
    %c0_275 = arith.constant 0 : index
    %c0_276 = arith.constant 0 : index
    %1067 = vector.load %arg11[%c0_275, %c0_276] : memref<1x32xf32, #tpu.memory_space<vmem>>, vector<1x32xf32>
    %1068 = vector.broadcast %1067 : vector<1x32xf32> to vector<10x32xf32>
    %1069 = arith.addf %1066, %1068 : vector<10x32xf32>
    %1070 = vector.shape_cast %1069 : vector<10x32xf32> to vector<1x10x32xf32>
    %cst_277 = arith.constant dense<0.000000e+00> : vector<1xf32>
    %1071 = vector.multi_reduction <add>, %1070, %cst_277 [1, 2] : vector<1x10x32xf32> to vector<1xf32>
    %1072 = vector.shape_cast %1071 : vector<1xf32> to vector<1x1x1xf32>
    %1073 = vector.extract %1072[0, 0, 0] : f32 from vector<1x1x1xf32>
    %cst_278 = arith.constant 3.200000e+02 : f32
    %1074 = arith.divf %1073, %cst_278 : f32
    %1075 = vector.broadcast %1074 : f32 to vector<10x32xf32>
    %1076 = arith.subf %1069, %1075 : vector<10x32xf32>
    %1077 = vector.broadcast %1074 : f32 to vector<10x32xf32>
    %1078 = arith.subf %1069, %1077 : vector<10x32xf32>
    %1079 = arith.mulf %1076, %1078 : vector<10x32xf32>
    %1080 = vector.shape_cast %1079 : vector<10x32xf32> to vector<1x10x32xf32>
    %cst_279 = arith.constant dense<0.000000e+00> : vector<1xf32>
    %1081 = vector.multi_reduction <add>, %1080, %cst_279 [1, 2] : vector<1x10x32xf32> to vector<1xf32>
    %1082 = vector.shape_cast %1081 : vector<1xf32> to vector<1x1x1xf32>
    %1083 = vector.extract %1082[0, 0, 0] : f32 from vector<1x1x1xf32>
    %cst_280 = arith.constant 3.200000e+02 : f32
    %1084 = arith.divf %1083, %cst_280 : f32
    %1085 = vector.broadcast %1074 : f32 to vector<10x32xf32>
    %1086 = arith.subf %1069, %1085 : vector<10x32xf32>
    %cst_281 = arith.constant 9.99999974E-6 : f32
    %1087 = arith.addf %1084, %cst_281 : f32
    %1088 = math.rsqrt %1087 : f32
    %1089 = vector.broadcast %1088 : f32 to vector<10x32xf32>
    %1090 = arith.mulf %1086, %1089 : vector<10x32xf32>
    %c0_282 = arith.constant 0 : index
    %c0_283 = arith.constant 0 : index
    %1091 = vector.load %arg12[%c0_282, %c0_283] : memref<10x32xf32, #tpu.memory_space<vmem>>, vector<10x32xf32>
    %1092 = arith.mulf %1090, %1091 : vector<10x32xf32>
    %c0_284 = arith.constant 0 : index
    %c0_285 = arith.constant 0 : index
    %1093 = vector.load %arg13[%c0_284, %c0_285] : memref<10x32xf32, #tpu.memory_space<vmem>>, vector<10x32xf32>
    %1094 = arith.addf %1092, %1093 : vector<10x32xf32>
    %cst_286 = arith.constant 0.000000e+00 : f32
    %1095 = vector.broadcast %cst_286 : f32 to vector<10x32xf32>
    %1096 = arith.maximumf %1094, %1095 : vector<10x32xf32>
    %c0_287 = arith.constant 0 : index
    %c0_288 = arith.constant 0 : index
    %c0_289 = arith.constant 0 : index
    %1097 = vector.load %arg14[%c0_287, %c0_288, %c0_289] : memref<1x10x32xf32, #tpu.memory_space<vmem>>, vector<1x10x32xf32>
    %1098 = vector.shape_cast %1097 : vector<1x10x32xf32> to vector<10x32xf32>
    %1099 = vector.shape_cast %1096 : vector<10x32xf32> to vector<1x10x32xf32>
    tpu.vector_store %arg14[%c0_287, %c0_288, %c0_289], %1099 {strides = array<i32>} : memref<1x10x32xf32, #tpu.memory_space<vmem>>, vector<1x10x32xf32>,
    return
  }
  func.func @transform_0(%arg0: i32) -> (i32, i32) {
    %c0_i32 = arith.constant 0 : i32
    %c0_i32_0 = arith.constant 0 : i32
    %c0_i32_1 = arith.constant 0 : i32
    return %c0_i32, %c0_i32_0 : i32, i32
  }
  func.func @transform_1(%arg0: i32) -> (i32, i32) {
    %c0_i32 = arith.constant 0 : i32
    %c0_i32_0 = arith.constant 0 : i32
    %c0_i32_1 = arith.constant 0 : i32
    return %c0_i32, %c0_i32_0 : i32, i32
  }
  func.func @transform_2(%arg0: i32) -> (i32, i32) {
    %c0_i32 = arith.constant 0 : i32
    %c0_i32_0 = arith.constant 0 : i32
    %c0_i32_1 = arith.constant 0 : i32
    return %c0_i32, %c0_i32_0 : i32, i32
  }
  func.func @transform_3(%arg0: i32) -> (i32, i32) {
    %c0_i32 = arith.constant 0 : i32
    %c0_i32_0 = arith.constant 0 : i32
    %c0_i32_1 = arith.constant 0 : i32
    return %c0_i32, %c0_i32_0 : i32, i32
  }
  func.func @transform_4(%arg0: i32) -> (i32, i32, i32, i32) {
    %c0_i32 = arith.constant 0 : i32
    %c0_i32_0 = arith.constant 0 : i32
    %c0_i32_1 = arith.constant 0 : i32
    %c0_i32_2 = arith.constant 0 : i32
    return %c0_i32, %arg0, %c0_i32_0, %c0_i32_1 : i32, i32, i32, i32
  }
  func.func @transform_5(%arg0: i32) -> (i32, i32, i32, i32) {
    %c0_i32 = arith.constant 0 : i32
    %c0_i32_0 = arith.constant 0 : i32
    %c0_i32_1 = arith.constant 0 : i32
    %c0_i32_2 = arith.constant 0 : i32
    return %c0_i32, %arg0, %c0_i32_0, %c0_i32_1 : i32, i32, i32, i32
  }
  func.func @transform_6(%arg0: i32) -> (i32, i32, i32) {
    %c0_i32 = arith.constant 0 : i32
    %c0_i32_0 = arith.constant 0 : i32
    %c0_i32_1 = arith.constant 0 : i32
    %c0_i32_2 = arith.constant 0 : i32
    return %c0_i32, %c0_i32_0, %c0_i32_1 : i32, i32, i32
  }
  func.func @transform_7(%arg0: i32) -> (i32, i32) {
    %c0_i32 = arith.constant 0 : i32
    %c0_i32_0 = arith.constant 0 : i32
    %c0_i32_1 = arith.constant 0 : i32
    return %c0_i32, %c0_i32_0 : i32, i32
  }
  func.func @transform_8(%arg0: i32) -> (i32, i32) {
    %c0_i32 = arith.constant 0 : i32
    %c0_i32_0 = arith.constant 0 : i32
    %c0_i32_1 = arith.constant 0 : i32
    return %c0_i32, %c0_i32_0 : i32, i32
  }
  func.func @transform_9(%arg0: i32) -> (i32, i32) {
    %c0_i32 = arith.constant 0 : i32
    %c0_i32_0 = arith.constant 0 : i32
    %c0_i32_1 = arith.constant 0 : i32
    return %c0_i32, %c0_i32_0 : i32, i32
  }
  func.func @transform_10(%arg0: i32) -> (i32, i32) {
    %c0_i32 = arith.constant 0 : i32
    %c0_i32_0 = arith.constant 0 : i32
    %c0_i32_1 = arith.constant 0 : i32
    return %c0_i32, %c0_i32_0 : i32, i32
  }
  func.func @transform_11(%arg0: i32) -> (i32, i32) {
    %c0_i32 = arith.constant 0 : i32
    %c0_i32_0 = arith.constant 0 : i32
    %c0_i32_1 = arith.constant 0 : i32
    return %c0_i32, %c0_i32_0 : i32, i32
  }
  func.func @transform_12(%arg0: i32) -> (i32, i32) {
    %c0_i32 = arith.constant 0 : i32
    %c0_i32_0 = arith.constant 0 : i32
    %c0_i32_1 = arith.constant 0 : i32
    return %c0_i32, %c0_i32_0 : i32, i32
  }
  func.func @transform_13(%arg0: i32) -> (i32, i32, i32) {
    %c0_i32 = arith.constant 0 : i32
    %c0_i32_0 = arith.constant 0 : i32
    %c0_i32_1 = arith.constant 0 : i32
    return %arg0, %c0_i32, %c0_i32_0 : i32, i32, i32
  }
}

</mosaic_0001>

<llo_original>
// kernel: tpu_custom_call.1
$region0: #{tpu_custom_call.1}
  #allocation0 [shape = 'u32[]', space=smem, size = 0x4, offset = 0x4, fixed_abs, tag = 'smem constant byte address 0x4 - core index']
  #allocation1 [shape = 'u32[72,128]{1,0:T(1,128)}', space=vmem, size = 0x9000, scoped, tag = 'internal scratch']
  %s0 = inlined_call_operand.vmem [shape: f32[4,4], index: 0, kind: input, shape index: {}]
  %s1 = inlined_call_operand.vmem [shape: f32[2,9], index: 1, kind: input, shape index: {}]
  %s2 = inlined_call_operand.vmem [shape: f32[2,2], index: 2, kind: input, shape index: {}]
  %s3 = inlined_call_operand.vmem [shape: f32[2,2], index: 3, kind: input, shape index: {}]
  %s4 = inlined_call_operand.vmem [shape: f32[3,2,10,32], index: 4, kind: input, shape index: {}]
  %s5 = inlined_call_operand.vmem [shape: f32[3,2,10,32], index: 5, kind: input, shape index: {}]
  %s6 = inlined_call_operand.vmem [shape: f32[2,32,128], index: 6, kind: input, shape index: {}]
  %s7 = inlined_call_operand.vmem [shape: f32[10,3], index: 7, kind: input, shape index: {}]
  %s8 = inlined_call_operand.vmem [shape: f32[10,5], index: 8, kind: input, shape index: {}]
  %s9 = inlined_call_operand.vmem [shape: f32[64,32], index: 9, kind: input, shape index: {}]
  %s10 = inlined_call_operand.vmem [shape: f32[1,32], index: 10, kind: input, shape index: {}]
  %s11 = inlined_call_operand.vmem [shape: f32[10,32], index: 11, kind: input, shape index: {}]
  %s12 = inlined_call_operand.vmem [shape: f32[10,32], index: 12, kind: input, shape index: {}]
  %s13 = inlined_call_operand.vmem [shape: f32[2,10,32], index: 13, kind: output, shape index: {}]
  %s14 = sld [smem:[#allocation0]]
  $region177: #{tpu_custom_call.1} parent=0
    _
  %s16 = ssub.s32 1, %s14
  %s17 = scalar_select 0, %s16, %s14
  $region1: #{tpu_custom_call.1} parent=0
    #allocation2 [shape = 'u8[2048]{0}', space=smem, size = 0x800, scoped, tag = 'input window, operand 0, single buffered']
    #allocation3 [shape = 's32[2]{0}', space=sflag, size = 0x8, scoped, tag = 'scoped memory for tpu_custom_call.1']
    #allocation4 [shape = 'u8[1024]{0}', space=smem, size = 0x400, scoped, tag = 'input window, operand 1, single buffered']
    #allocation5 [shape = 's32[1]{0}', space=sflag, size = 0x4, scoped, tag = 'scoped memory for tpu_custom_call.1']
    #allocation6 [shape = 'u8[1024]{0}', space=smem, size = 0x400, scoped, tag = 'input window, operand 2, single buffered']
    #allocation7 [shape = 'u8[1024]{0}', space=smem, size = 0x400, scoped, tag = 'input window, operand 3, single buffered']
    #allocation8 [shape = 's32[1]{0}', space=sflag, size = 0x4, scoped, tag = 'scoped memory for tpu_custom_call.1']
    #allocation9 [shape = 'u8[49152]{0}', space=vmem, size = 0xc000, scoped, tag = 'input window, operand 4']
    #allocation10 [shape = 'u8[49152]{0}', space=vmem, size = 0xc000, scoped, tag = 'input window, operand 5']
    %18 = vsyncpa [#allocation3], 0
    %19 = vsyncpa [#allocation5], 0
    %20 = vsyncpa [#allocation8], 0
    loop: start=0, step=1, limit=4
    $region2: #{tpu_custom_call.1} parent=1 // loop_pre_header
      _
    $region3: #{tpu_custom_call.1} parent=1 // loop_header
      %s22 = sphi 0, %s26
      %p23 = scmp.ge.s32.totalorder %s22, 4
      %s30 = sphi 0, %s30
      %s32 = sphi 0, %s30
      %s33 = sphi 0, %s32
      %s47 = sphi 0, %s33
      %s51 = sphi 0, %s51
      %s53 = sphi 0, %s51
      %s54 = sphi 0, %s53
      %s68 = sphi 0, %s54
      %s72 = sphi 0, %s72
      %s74 = sphi 0, %s72
      %s75 = sphi 0, %s74
      %s89 = sphi 0, %s75
      %s93 = sphi 0, %s93
      %s95 = sphi 0, %s93
      %s96 = sphi 0, %s95
      %s110 = sphi 0, %s96
      %s116 = sphi 0, %s118
      %s119 = sphi 0, %s116
      %s120 = sphi 0, %s119
      %s136 = sphi 0, %s120
      %s142 = sphi 0, %s144
      %s145 = sphi 0, %s142
      %s146 = sphi 0, %s145
      %s162 = sphi 0, %s146
      %s166 = sphi 0, %s166
      %s168 = sphi 0, %s166
      %s169 = sphi 0, %s168
      %s183 = sphi 0, %s169
      %s187 = sphi 0, %s187
      %s189 = sphi 0, %s187
      %s190 = sphi 0, %s189
      %s204 = sphi 0, %s190
      %s208 = sphi 0, %s208
      %s210 = sphi 0, %s208
      %s211 = sphi 0, %s210
      %s225 = sphi 0, %s211
      %s229 = sphi 0, %s229
      %s231 = sphi 0, %s229
      %s232 = sphi 0, %s231
      %s246 = sphi 0, %s232
      %s250 = sphi 0, %s250
      %s252 = sphi 0, %s250
      %s253 = sphi 0, %s252
      %s267 = sphi 0, %s253
      %s271 = sphi 0, %s271
      %s273 = sphi 0, %s271
      %s274 = sphi 0, %s273
      %s288 = sphi 0, %s274
      %s292 = sphi 0, %s292
      %s294 = sphi 0, %s292
      %s295 = sphi 0, %s294
      %s309 = sphi 0, %s295
      %s315 = sphi 0, %s317
      %s318 = sphi 0, %s315
      %s319 = sphi 0, %s318
      %s335 = sphi 0, %s319
    $region4: #{tpu_custom_call.1} parent=1 // loop_header_branch
      %25 = sbr.rel (%p23) target = $region8
    $region5: #{tpu_custom_call.1} parent=1 // loop_body
      %s27 = ssub.s32 %s22, 1
      %s28 = ssub.s32 %s22, 2
      %s29 = sadd.s32 %s22, 1
      %s31 = sadd.s32 %s30, 1
      %p34 = scmp.eq.s32.totalorder %s22, 1
      %p35 = scmp.ne.s32.totalorder %s30, %s32
      %p36 = scmp.eq.s32.totalorder %s22, 0
      %p37 = por %p35, %p36
      %p38 = scmp.ne.s32.totalorder %s30, %s32
      %p39 = scmp.eq.s32.totalorder %s27, 1
      %p40 = por %p38, %p39
      %p41 = scmp.ne.s32.totalorder %s32, %s33
      %p42 = scmp.eq.s32.totalorder %s27, 0
      %p43 = por %p41, %p42
      %p44 = scmp.ne.s32.totalorder %s32, %s33
      %p45 = scmp.eq.s32.totalorder %s28, 1
      %p46 = por %p44, %p45
      %p48 = scmp.ne.s32.totalorder %s33, %s47
      %p49 = scmp.eq.s32.totalorder %s28, 0
      %p50 = por %p48, %p49
      %s52 = sadd.s32 %s51, 1
      %p55 = scmp.eq.s32.totalorder %s22, 1
      %p56 = scmp.ne.s32.totalorder %s51, %s53
      %p57 = scmp.eq.s32.totalorder %s22, 0
      %p58 = por %p56, %p57
      %p59 = scmp.ne.s32.totalorder %s51, %s53
      %p60 = scmp.eq.s32.totalorder %s27, 1
      %p61 = por %p59, %p60
      %p62 = scmp.ne.s32.totalorder %s53, %s54
      %p63 = scmp.eq.s32.totalorder %s27, 0
      %p64 = por %p62, %p63
      %p65 = scmp.ne.s32.totalorder %s53, %s54
      %p66 = scmp.eq.s32.totalorder %s28, 1
      %p67 = por %p65, %p66
      %p69 = scmp.ne.s32.totalorder %s54, %s68
      %p70 = scmp.eq.s32.totalorder %s28, 0
      %p71 = por %p69, %p70
      %s73 = sadd.s32 %s72, 1
      %p76 = scmp.eq.s32.totalorder %s22, 1
      %p77 = scmp.ne.s32.totalorder %s72, %s74
      %p78 = scmp.eq.s32.totalorder %s22, 0
      %p79 = por %p77, %p78
      %p80 = scmp.ne.s32.totalorder %s72, %s74
      %p81 = scmp.eq.s32.totalorder %s27, 1
      %p82 = por %p80, %p81
      %p83 = scmp.ne.s32.totalorder %s74, %s75
      %p84 = scmp.eq.s32.totalorder %s27, 0
      %p85 = por %p83, %p84
      %p86 = scmp.ne.s32.totalorder %s74, %s75
      %p87 = scmp.eq.s32.totalorder %s28, 1
      %p88 = por %p86, %p87
      %p90 = scmp.ne.s32.totalorder %s75, %s89
      %p91 = scmp.eq.s32.totalorder %s28, 0
      %p92 = por %p90, %p91
      %s94 = sadd.s32 %s93, 1
      %p97 = scmp.eq.s32.totalorder %s22, 1
      %p98 = scmp.ne.s32.totalorder %s93, %s95
      %p99 = scmp.eq.s32.totalorder %s22, 0
      %p100 = por %p98, %p99
      %p101 = scmp.ne.s32.totalorder %s93, %s95
      %p102 = scmp.eq.s32.totalorder %s27, 1
      %p103 = por %p101, %p102
      %p104 = scmp.ne.s32.totalorder %s95, %s96
      %p105 = scmp.eq.s32.totalorder %s27, 0
      %p106 = por %p104, %p105
      %p107 = scmp.ne.s32.totalorder %s95, %s96
      %p108 = scmp.eq.s32.totalorder %s28, 1
      %p109 = por %p107, %p108
      %p111 = scmp.ne.s32.totalorder %s96, %s110
      %p112 = scmp.eq.s32.totalorder %s28, 0
      %p113 = por %p111, %p112
      %s114 = ssub.s32 %s22, %s29
      %p115 = scmp.eq.s32.totalorder %s114, 0
      %s117 = sadd.s32 %s116, 1
      %s118 = scalar_select %p115, %s116, %s117
      %p121 = pneg %p115
      %p122 = scmp.eq.s32.totalorder %s22, 1
      %p123 = por %p121, %p122
      %p124 = scmp.ne.s32.totalorder %s116, %s119
      %p125 = scmp.eq.s32.totalorder %s22, 0
      %p126 = por %p124, %p125
      %p127 = scmp.ne.s32.totalorder %s116, %s119
      %p128 = scmp.eq.s32.totalorder %s27, 1
      %p129 = por %p127, %p128
      %p130 = scmp.ne.s32.totalorder %s119, %s120
      %p131 = scmp.eq.s32.totalorder %s27, 0
      %p132 = por %p130, %p131
      %p133 = scmp.ne.s32.totalorder %s119, %s120
      %p134 = scmp.eq.s32.totalorder %s28, 1
      %p135 = por %p133, %p134
      %p137 = scmp.ne.s32.totalorder %s120, %s136
      %p138 = scmp.eq.s32.totalorder %s28, 0
      %p139 = por %p137, %p138
      %s140 = ssub.s32 %s22, %s29
      %p141 = scmp.eq.s32.totalorder %s140, 0
      %s143 = sadd.s32 %s142, 1
      %s144 = scalar_select %p141, %s142, %s143
      %p147 = pneg %p141
      %p148 = scmp.eq.s32.totalorder %s22, 1
      %p149 = por %p147, %p148
      %p150 = scmp.ne.s32.totalorder %s142, %s145
      %p151 = scmp.eq.s32.totalorder %s22, 0
      %p152 = por %p150, %p151
      %p153 = scmp.ne.s32.totalorder %s142, %s145
      %p154 = scmp.eq.s32.totalorder %s27, 1
      %p155 = por %p153, %p154
      %p156 = scmp.ne.s32.totalorder %s145, %s146
      %p157 = scmp.eq.s32.totalorder %s27, 0
      %p158 = por %p156, %p157
      %p159 = scmp.ne.s32.totalorder %s145, %s146
      %p160 = scmp.eq.s32.totalorder %s28, 1
      %p161 = por %p159, %p160
      %p163 = scmp.ne.s32.totalorder %s146, %s162
      %p164 = scmp.eq.s32.totalorder %s28, 0
      %p165 = por %p163, %p164
      %s167 = sadd.s32 %s166, 1
      %p170 = scmp.eq.s32.totalorder %s22, 1
      %p171 = scmp.ne.s32.totalorder %s166, %s168
      %p172 = scmp.eq.s32.totalorder %s22, 0
      %p173 = por %p171, %p172
      %p174 = scmp.ne.s32.totalorder %s166, %s168
      %p175 = scmp.eq.s32.totalorder %s27, 1
      %p176 = por %p174, %p175
      %p177 = scmp.ne.s32.totalorder %s168, %s169
      %p178 = scmp.eq.s32.totalorder %s27, 0
      %p179 = por %p177, %p178
      %p180 = scmp.ne.s32.totalorder %s168, %s169
      %p181 = scmp.eq.s32.totalorder %s28, 1
      %p182 = por %p180, %p181
      %p184 = scmp.ne.s32.totalorder %s169, %s183
      %p185 = scmp.eq.s32.totalorder %s28, 0
      %p186 = por %p184, %p185
      %s188 = sadd.s32 %s187, 1
      %p191 = scmp.eq.s32.totalorder %s22, 1
      %p192 = scmp.ne.s32.totalorder %s187, %s189
      %p193 = scmp.eq.s32.totalorder %s22, 0
      %p194 = por %p192, %p193
      %p195 = scmp.ne.s32.totalorder %s187, %s189
      %p196 = scmp.eq.s32.totalorder %s27, 1
      %p197 = por %p195, %p196
      %p198 = scmp.ne.s32.totalorder %s189, %s190
      %p199 = scmp.eq.s32.totalorder %s27, 0
      %p200 = por %p198, %p199
      %p201 = scmp.ne.s32.totalorder %s189, %s190
      %p202 = scmp.eq.s32.totalorder %s28, 1
      %p203 = por %p201, %p202
      %p205 = scmp.ne.s32.totalorder %s190, %s204
      %p206 = scmp.eq.s32.totalorder %s28, 0
      %p207 = por %p205, %p206
      %s209 = sadd.s32 %s208, 1
      %p212 = scmp.eq.s32.totalorder %s22, 1
      %p213 = scmp.ne.s32.totalorder %s208, %s210
      %p214 = scmp.eq.s32.totalorder %s22, 0
      %p215 = por %p213, %p214
      %p216 = scmp.ne.s32.totalorder %s208, %s210
      %p217 = scmp.eq.s32.totalorder %s27, 1
      %p218 = por %p216, %p217
      %p219 = scmp.ne.s32.totalorder %s210, %s211
      %p220 = scmp.eq.s32.totalorder %s27, 0
      %p221 = por %p219, %p220
      %p222 = scmp.ne.s32.totalorder %s210, %s211
      %p223 = scmp.eq.s32.totalorder %s28, 1
      %p224 = por %p222, %p223
      %p226 = scmp.ne.s32.totalorder %s211, %s225
      %p227 = scmp.eq.s32.totalorder %s28, 0
      %p228 = por %p226, %p227
      %s230 = sadd.s32 %s229, 1
      %p233 = scmp.eq.s32.totalorder %s22, 1
      %p234 = scmp.ne.s32.totalorder %s229, %s231
      %p235 = scmp.eq.s32.totalorder %s22, 0
      %p236 = por %p234, %p235
      %p237 = scmp.ne.s32.totalorder %s229, %s231
      %p238 = scmp.eq.s32.totalorder %s27, 1
      %p239 = por %p237, %p238
      %p240 = scmp.ne.s32.totalorder %s231, %s232
      %p241 = scmp.eq.s32.totalorder %s27, 0
      %p242 = por %p240, %p241
      %p243 = scmp.ne.s32.totalorder %s231, %s232
      %p244 = scmp.eq.s32.totalorder %s28, 1
      %p245 = por %p243, %p244
      %p247 = scmp.ne.s32.totalorder %s232, %s246
      %p248 = scmp.eq.s32.totalorder %s28, 0
      %p249 = por %p247, %p248
      %s251 = sadd.s32 %s250, 1
      %p254 = scmp.eq.s32.totalorder %s22, 1
      %p255 = scmp.ne.s32.totalorder %s250, %s252
      %p256 = scmp.eq.s32.totalorder %s22, 0
      %p257 = por %p255, %p256
      %p258 = scmp.ne.s32.totalorder %s250, %s252
      %p259 = scmp.eq.s32.totalorder %s27, 1
      %p260 = por %p258, %p259
      %p261 = scmp.ne.s32.totalorder %s252, %s253
      %p262 = scmp.eq.s32.totalorder %s27, 0
      %p263 = por %p261, %p262
      %p264 = scmp.ne.s32.totalorder %s252, %s253
      %p265 = scmp.eq.s32.totalorder %s28, 1
      %p266 = por %p264, %p265
      %p268 = scmp.ne.s32.totalorder %s253, %s267
      %p269 = scmp.eq.s32.totalorder %s28, 0
      %p270 = por %p268, %p269
      %s272 = sadd.s32 %s271, 1
      %p275 = scmp.eq.s32.totalorder %s22, 1
      %p276 = scmp.ne.s32.totalorder %s271, %s273
      %p277 = scmp.eq.s32.totalorder %s22, 0
      %p278 = por %p276, %p277
      %p279 = scmp.ne.s32.totalorder %s271, %s273
      %p280 = scmp.eq.s32.totalorder %s27, 1
      %p281 = por %p279, %p280
      %p282 = scmp.ne.s32.totalorder %s273, %s274
      %p283 = scmp.eq.s32.totalorder %s27, 0
      %p284 = por %p282, %p283
      %p285 = scmp.ne.s32.totalorder %s273, %s274
      %p286 = scmp.eq.s32.totalorder %s28, 1
      %p287 = por %p285, %p286
      %p289 = scmp.ne.s32.totalorder %s274, %s288
      %p290 = scmp.eq.s32.totalorder %s28, 0
      %p291 = por %p289, %p290
      %s293 = sadd.s32 %s292, 1
      %p296 = scmp.eq.s32.totalorder %s22, 1
      %p297 = scmp.ne.s32.totalorder %s292, %s294
      %p298 = scmp.eq.s32.totalorder %s22, 0
      %p299 = por %p297, %p298
      %p300 = scmp.ne.s32.totalorder %s292, %s294
      %p301 = scmp.eq.s32.totalorder %s27, 1
      %p302 = por %p300, %p301
      %p303 = scmp.ne.s32.totalorder %s294, %s295
      %p304 = scmp.eq.s32.totalorder %s27, 0
      %p305 = por %p303, %p304
      %p306 = scmp.ne.s32.totalorder %s294, %s295
      %p307 = scmp.eq.s32.totalorder %s28, 1
      %p308 = por %p306, %p307
      %p310 = scmp.ne.s32.totalorder %s295, %s309
      %p311 = scmp.eq.s32.totalorder %s28, 0
      %p312 = por %p310, %p311
      %s313 = ssub.s32 %s22, %s29
      %p314 = scmp.eq.s32.totalorder %s313, 0
      %s316 = sadd.s32 %s315, 1
      %s317 = scalar_select %p314, %s315, %s316
      %p320 = pneg %p314
      %p321 = scmp.eq.s32.totalorder %s22, 1
      %p322 = por %p320, %p321
      %p323 = scmp.ne.s32.totalorder %s315, %s318
      %p324 = scmp.eq.s32.totalorder %s22, 0
      %p325 = por %p323, %p324
      %p326 = scmp.ne.s32.totalorder %s315, %s318
      %p327 = scmp.eq.s32.totalorder %s27, 1
      %p328 = por %p326, %p327
      %p329 = scmp.ne.s32.totalorder %s318, %s319
      %p330 = scmp.eq.s32.totalorder %s27, 0
      %p331 = por %p329, %p330
      %p332 = scmp.ne.s32.totalorder %s318, %s319
      %p333 = scmp.eq.s32.totalorder %s28, 1
      %p334 = por %p332, %p333
      %p336 = scmp.ne.s32.totalorder %s319, %s335
      %p337 = scmp.eq.s32.totalorder %s28, 0
      %p338 = por %p336, %p337
      %p339 = scmp.le.s32.totalorder 1, %s22
      %p340 = scmp.lt.s32.totalorder %s22, 3
      %p341 = pnand %p339, %p340
      %p342 = pneg %p341
      // Predicated region
      $region9: #{tpu_custom_call.1} parent=5 // pred_check
        _
      $region10: #{tpu_custom_call.1} parent=5 // pred_check_branch
        %344 = sbr.rel (%p341) target = $region12
      $region11: #{tpu_custom_call.1} parent=5 // pred_region
        %s345 = ssub.s32 %s22, 1
        // Predicated region
        $region13: #{tpu_custom_call.1} parent=11 // pred_check
          %p346 = pneg %p43
        $region14: #{tpu_custom_call.1} parent=11 // pred_check_branch
          %348 = sbr.rel (%p346) target = $region16
        $region15: #{tpu_custom_call.1} parent=11 // pred_region
          %350 = vsyncadd [#allocation3], 0
          %s352 = sshll.u32 %s0, 4
          %s353 = int_to_ptr.vmem [resolvable:$true] %s352
          %355 = dma.vmem_to_smem %s353, 64, [#allocation2], [#allocation3]
        $region16: #{tpu_custom_call.1} parent=11 // pred_fallthru
          _
        // Predicated region
        $region17: #{tpu_custom_call.1} parent=11 // pred_check
          %p356 = pneg %p64
        $region18: #{tpu_custom_call.1} parent=11 // pred_check_branch
          %358 = sbr.rel (%p356) target = $region20
        $region19: #{tpu_custom_call.1} parent=11 // pred_region
          %360 = vsyncadd [#allocation5], 0
          %s362 = sshll.u32 %s1, 4
          %s363 = int_to_ptr.vmem [resolvable:$true] %s362
          %365 = dma.vmem_to_smem %s363, 32, [#allocation4], [#allocation5]
        $region20: #{tpu_custom_call.1} parent=11 // pred_fallthru
          _
        // Predicated region
        $region21: #{tpu_custom_call.1} parent=11 // pred_check
          %p366 = pneg %p85
        $region22: #{tpu_custom_call.1} parent=11 // pred_check_branch
          %368 = sbr.rel (%p366) target = $region24
        $region23: #{tpu_custom_call.1} parent=11 // pred_region
          %370 = vsyncadd [#allocation5], 0
          %s372 = sshll.u32 %s2, 4
          %s373 = int_to_ptr.vmem [resolvable:$true] %s372
          %375 = dma.vmem_to_smem %s373, 32, [#allocation6], [#allocation5]
        $region24: #{tpu_custom_call.1} parent=11 // pred_fallthru
          _
        // Predicated region
        $region25: #{tpu_custom_call.1} parent=11 // pred_check
          %p376 = pneg %p106
        $region26: #{tpu_custom_call.1} parent=11 // pred_check_branch
          %378 = sbr.rel (%p376) target = $region28
        $region27: #{tpu_custom_call.1} parent=11 // pred_region
          %380 = vsyncadd [#allocation8], 0
          %s382 = sshll.u32 %s3, 4
          %s383 = int_to_ptr.vmem [resolvable:$true] %s382
          %385 = dma.vmem_to_smem %s383, 32, [#allocation7], [#allocation8]
        $region28: #{tpu_custom_call.1} parent=11 // pred_fallthru
          _
        // Predicated region
        $region29: #{tpu_custom_call.1} parent=11 // pred_check
          %p386 = pneg %p179
        $region30: #{tpu_custom_call.1} parent=11 // pred_check_branch
          %388 = sbr.rel (%p386) target = $region32
        $region31: #{tpu_custom_call.1} parent=11 // pred_region
          _
        $region32: #{tpu_custom_call.1} parent=11 // pred_fallthru
          _
        // Predicated region
        $region33: #{tpu_custom_call.1} parent=11 // pred_check
          %p389 = pneg %p200
        $region34: #{tpu_custom_call.1} parent=11 // pred_check_branch
          %391 = sbr.rel (%p389) target = $region36
        $region35: #{tpu_custom_call.1} parent=11 // pred_region
          _
        $region36: #{tpu_custom_call.1} parent=11 // pred_fallthru
          _
        // Predicated region
        $region37: #{tpu_custom_call.1} parent=11 // pred_check
          %p392 = pneg %p221
        $region38: #{tpu_custom_call.1} parent=11 // pred_check_branch
          %394 = sbr.rel (%p392) target = $region40
        $region39: #{tpu_custom_call.1} parent=11 // pred_region
          _
        $region40: #{tpu_custom_call.1} parent=11 // pred_fallthru
          _
        // Predicated region
        $region41: #{tpu_custom_call.1} parent=11 // pred_check
          %p395 = pneg %p242
        $region42: #{tpu_custom_call.1} parent=11 // pred_check_branch
          %397 = sbr.rel (%p395) target = $region44
        $region43: #{tpu_custom_call.1} parent=11 // pred_region
          _
        $region44: #{tpu_custom_call.1} parent=11 // pred_fallthru
          _
        // Predicated region
        $region45: #{tpu_custom_call.1} parent=11 // pred_check
          %p398 = pneg %p263
        $region46: #{tpu_custom_call.1} parent=11 // pred_check_branch
          %400 = sbr.rel (%p398) target = $region48
        $region47: #{tpu_custom_call.1} parent=11 // pred_region
          _
        $region48: #{tpu_custom_call.1} parent=11 // pred_fallthru
          _
        // Predicated region
        $region49: #{tpu_custom_call.1} parent=11 // pred_check
          %p401 = pneg %p284
        $region50: #{tpu_custom_call.1} parent=11 // pred_check_branch
          %403 = sbr.rel (%p401) target = $region52
        $region51: #{tpu_custom_call.1} parent=11 // pred_region
          _
        $region52: #{tpu_custom_call.1} parent=11 // pred_fallthru
          _
        // Predicated region
        $region53: #{tpu_custom_call.1} parent=11 // pred_check
          %p404 = pneg %p305
        $region54: #{tpu_custom_call.1} parent=11 // pred_check_branch
          %406 = sbr.rel (%p404) target = $region56
        $region55: #{tpu_custom_call.1} parent=11 // pred_region
          _
        $region56: #{tpu_custom_call.1} parent=11 // pred_fallthru
          _
      $region12: #{tpu_custom_call.1} parent=5 // pred_fallthru
        _
      %p407 = scmp.lt.s32.totalorder %s22, 2
      // Predicated region
      $region57: #{tpu_custom_call.1} parent=5 // pred_check
        %p408 = pneg %p407
      $region58: #{tpu_custom_call.1} parent=5 // pred_check_branch
        %410 = sbr.rel (%p408) target = $region60
      $region59: #{tpu_custom_call.1} parent=5 // pred_region
        // Predicated region
        $region61: #{tpu_custom_call.1} parent=59 // pred_check
          %p411 = pneg %p126
        $region62: #{tpu_custom_call.1} parent=59 // pred_check_branch
          %413 = sbr.rel (%p411) target = $region64
        $region63: #{tpu_custom_call.1} parent=59 // pred_region
          %s414 = sand.u32 %s116, 1
          %s415 = sand.u32 %s116, 1
          %s416 = smul.addr %s415, 48
          %s417 = scalar_lea.vmem [#allocation9], %s416
          %s418 = smul.addr %s22, 2
          %s419 = smul.addr %s418, 8
          %s420 = scalar_lea.vmem %s4, %s419
          // Predicated region
          $region65: #{tpu_custom_call.1} parent=63 // pred_check
            _
          $region66: #{tpu_custom_call.1} parent=63 // pred_check_branch
            %422 = sbr.rel (0) target = $region68
          $region67: #{tpu_custom_call.1} parent=63 // pred_region
            // Predicated region
            $region69: #{tpu_custom_call.1} parent=67 // pred_check
              _
            $region70: #{tpu_custom_call.1} parent=67 // pred_check_branch
              %424 = sbr.rel (0) target = $region72
            $region71: #{tpu_custom_call.1} parent=67 // pred_region
              // Predicated region
              $region84: #{tpu_custom_call.1} parent=71 // pred_check
                _
              $region85: #{tpu_custom_call.1} parent=71 // pred_check_branch
                %450 = sbr.rel (0) target = $region87
              $region86: #{tpu_custom_call.1} parent=71 // pred_region
                loop: start=0, step=1, limit=1
                $region88: #{tpu_custom_call.1} parent=86 // loop_pre_header
                  _
                $region89: #{tpu_custom_call.1} parent=86 // loop_header
                  %s452 = sphi 0, %s456
                  %p453 = scmp.ge.s32.totalorder %s452, 1
                  %s457 = sphi %s420, %s420
                  %s458 = sphi %s417, %s417
                $region90: #{tpu_custom_call.1} parent=86 // loop_header_branch
                  %455 = sbr.rel (%p453) target = $region94
                $region91: #{tpu_custom_call.1} parent=86 // loop_body
                  %v459 = vld [vmem:[%s457] sm:$0xff]
                  %460 = vst [vmem:[%s458] sm:$0xff] %v459
                  %v461 = vld [vmem:[%s457 + $0x8] sm:$0xff]
                  %462 = vst [vmem:[%s458 + $0x8] sm:$0xff] %v461
                  %v463 = vld [vmem:[%s457 + $0x20] sm:$0xff]
                  %464 = vst [vmem:[%s458 + $0x10] sm:$0xff] %v463
                  %v465 = vld [vmem:[%s457 + $0x28] sm:$0xff]
                  %466 = vst [vmem:[%s458 + $0x18] sm:$0xff] %v465
                  %v467 = vld [vmem:[%s457 + $0x40] sm:$0xff]
                  %468 = vst [vmem:[%s458 + $0x20] sm:$0xff] %v467
                  %v469 = vld [vmem:[%s457 + $0x48] sm:$0xff]
                  %470 = vst [vmem:[%s458 + $0x28] sm:$0xff] %v469
                $region92: #{tpu_custom_call.1} parent=86 // loop_footer
                  %s456 = sadd.s32 1, %s452
                $region93: #{tpu_custom_call.1} parent=86 // loop_footer_branch
                  %451 = sbr.rel target = $region89
                $region94: #{tpu_custom_call.1} parent=86 // loop_exit
                  _
              $region87: #{tpu_custom_call.1} parent=71 // pred_fallthru
                _
              // Predicated region
              $region95: #{tpu_custom_call.1} parent=71 // pred_check
                _
              $region96: #{tpu_custom_call.1} parent=71 // pred_check_branch
                %472 = sbr.rel target = $region98
              $region97: #{tpu_custom_call.1} parent=71 // pred_region
                _
              $region98: #{tpu_custom_call.1} parent=71 // pred_fallthru
                _
            $region72: #{tpu_custom_call.1} parent=67 // pred_fallthru
              _
            // Predicated region
            $region73: #{tpu_custom_call.1} parent=67 // pred_check
              _
            $region74: #{tpu_custom_call.1} parent=67 // pred_check_branch
              %426 = sbr.rel target = $region76
            $region75: #{tpu_custom_call.1} parent=67 // pred_region
              %s428 = ssub.s32 256, 1
              loop: start=0, step=1, limit=1
              $region77: #{tpu_custom_call.1} parent=75 // loop_pre_header
                _
              $region78: #{tpu_custom_call.1} parent=75 // loop_header
                %s430 = sphi 0, %s434
                %p431 = scmp.ge.s32.totalorder %s430, 1
                %s435 = sphi %s420, %s420
                %s436 = sphi %s417, %s417
              $region79: #{tpu_custom_call.1} parent=75 // loop_header_branch
                %433 = sbr.rel (%p431) target = $region83
              $region80: #{tpu_custom_call.1} parent=75 // loop_body
                %v437 = vld [vmem:[%s435] sm:%s428]
                %438 = vst [vmem:[%s436] sm:%s428] %v437
                %v439 = vld [vmem:[%s435 + $0x8] sm:%s428]
                %440 = vst [vmem:[%s436 + $0x8] sm:%s428] %v439
                %v441 = vld [vmem:[%s435 + $0x20] sm:%s428]
                %442 = vst [vmem:[%s436 + $0x10] sm:%s428] %v441
                %v443 = vld [vmem:[%s435 + $0x28] sm:%s428]
                %444 = vst [vmem:[%s436 + $0x18] sm:%s428] %v443
                %v445 = vld [vmem:[%s435 + $0x40] sm:%s428]
                %446 = vst [vmem:[%s436 + $0x20] sm:%s428] %v445
                %v447 = vld [vmem:[%s435 + $0x48] sm:%s428]
                %448 = vst [vmem:[%s436 + $0x28] sm:%s428] %v447
              $region81: #{tpu_custom_call.1} parent=75 // loop_footer
                %s434 = sadd.s32 1, %s430
              $region82: #{tpu_custom_call.1} parent=75 // loop_footer_branch
                %429 = sbr.rel target = $region78
              $region83: #{tpu_custom_call.1} parent=75 // loop_exit
                _
            $region76: #{tpu_custom_call.1} parent=67 // pred_fallthru
              _
          $region68: #{tpu_custom_call.1} parent=63 // pred_fallthru
            _
          %473 = vnop
        $region64: #{tpu_custom_call.1} parent=59 // pred_fallthru
          _
        // Predicated region
        $region99: #{tpu_custom_call.1} parent=59 // pred_check
          %p474 = pneg %p152
        $region100: #{tpu_custom_call.1} parent=59 // pred_check_branch
          %476 = sbr.rel (%p474) target = $region102
        $region101: #{tpu_custom_call.1} parent=59 // pred_region
          %s477 = sand.u32 %s142, 1
          %s478 = sand.u32 %s142, 1
          %s479 = smul.addr %s478, 48
          %s480 = scalar_lea.vmem [#allocation10], %s479
          %s481 = smul.addr %s22, 2
          %s482 = smul.addr %s481, 8
          %s483 = scalar_lea.vmem %s5, %s482
          // Predicated region
          $region103: #{tpu_custom_call.1} parent=101 // pred_check
            _
          $region104: #{tpu_custom_call.1} parent=101 // pred_check_branch
            %485 = sbr.rel (0) target = $region106
          $region105: #{tpu_custom_call.1} parent=101 // pred_region
            // Predicated region
            $region107: #{tpu_custom_call.1} parent=105 // pred_check
              _
            $region108: #{tpu_custom_call.1} parent=105 // pred_check_branch
              %487 = sbr.rel (0) target = $region110
            $region109: #{tpu_custom_call.1} parent=105 // pred_region
              // Predicated region
              $region122: #{tpu_custom_call.1} parent=109 // pred_check
                _
              $region123: #{tpu_custom_call.1} parent=109 // pred_check_branch
                %513 = sbr.rel (0) target = $region125
              $region124: #{tpu_custom_call.1} parent=109 // pred_region
                loop: start=0, step=1, limit=1
                $region126: #{tpu_custom_call.1} parent=124 // loop_pre_header
                  _
                $region127: #{tpu_custom_call.1} parent=124 // loop_header
                  %s515 = sphi 0, %s519
                  %p516 = scmp.ge.s32.totalorder %s515, 1
                  %s520 = sphi %s483, %s483
                  %s521 = sphi %s480, %s480
                $region128: #{tpu_custom_call.1} parent=124 // loop_header_branch
                  %518 = sbr.rel (%p516) target = $region132
                $region129: #{tpu_custom_call.1} parent=124 // loop_body
                  %v522 = vld [vmem:[%s520] sm:$0xff]
                  %523 = vst [vmem:[%s521] sm:$0xff] %v522
                  %v524 = vld [vmem:[%s520 + $0x8] sm:$0xff]
                  %525 = vst [vmem:[%s521 + $0x8] sm:$0xff] %v524
                  %v526 = vld [vmem:[%s520 + $0x20] sm:$0xff]
                  %527 = vst [vmem:[%s521 + $0x10] sm:$0xff] %v526
                  %v528 = vld [vmem:[%s520 + $0x28] sm:$0xff]
                  %529 = vst [vmem:[%s521 + $0x18] sm:$0xff] %v528
                  %v530 = vld [vmem:[%s520 + $0x40] sm:$0xff]
                  %531 = vst [vmem:[%s521 + $0x20] sm:$0xff] %v530
                  %v532 = vld [vmem:[%s520 + $0x48] sm:$0xff]
                  %533 = vst [vmem:[%s521 + $0x28] sm:$0xff] %v532
                $region130: #{tpu_custom_call.1} parent=124 // loop_footer
                  %s519 = sadd.s32 1, %s515
                $region131: #{tpu_custom_call.1} parent=124 // loop_footer_branch
                  %514 = sbr.rel target = $region127
                $region132: #{tpu_custom_call.1} parent=124 // loop_exit
                  _
              $region125: #{tpu_custom_call.1} parent=109 // pred_fallthru
                _
              // Predicated region
              $region133: #{tpu_custom_call.1} parent=109 // pred_check
                _
              $region134: #{tpu_custom_call.1} parent=109 // pred_check_branch
                %535 = sbr.rel target = $region136
              $region135: #{tpu_custom_call.1} parent=109 // pred_region
                _
              $region136: #{tpu_custom_call.1} parent=109 // pred_fallthru
                _
            $region110: #{tpu_custom_call.1} parent=105 // pred_fallthru
              _
            // Predicated region
            $region111: #{tpu_custom_call.1} parent=105 // pred_check
              _
            $region112: #{tpu_custom_call.1} parent=105 // pred_check_branch
              %489 = sbr.rel target = $region114
            $region113: #{tpu_custom_call.1} parent=105 // pred_region
              %s491 = ssub.s32 256, 1
              loop: start=0, step=1, limit=1
              $region115: #{tpu_custom_call.1} parent=113 // loop_pre_header
                _
              $region116: #{tpu_custom_call.1} parent=113 // loop_header
                %s493 = sphi 0, %s497
                %p494 = scmp.ge.s32.totalorder %s493, 1
                %s498 = sphi %s483, %s483
                %s499 = sphi %s480, %s480
              $region117: #{tpu_custom_call.1} parent=113 // loop_header_branch
                %496 = sbr.rel (%p494) target = $region121
              $region118: #{tpu_custom_call.1} parent=113 // loop_body
                %v500 = vld [vmem:[%s498] sm:%s491]
                %501 = vst [vmem:[%s499] sm:%s491] %v500
                %v502 = vld [vmem:[%s498 + $0x8] sm:%s491]
                %503 = vst [vmem:[%s499 + $0x8] sm:%s491] %v502
                %v504 = vld [vmem:[%s498 + $0x20] sm:%s491]
                %505 = vst [vmem:[%s499 + $0x10] sm:%s491] %v504
                %v506 = vld [vmem:[%s498 + $0x28] sm:%s491]
                %507 = vst [vmem:[%s499 + $0x18] sm:%s491] %v506
                %v508 = vld [vmem:[%s498 + $0x40] sm:%s491]
                %509 = vst [vmem:[%s499 + $0x20] sm:%s491] %v508
                %v510 = vld [vmem:[%s498 + $0x48] sm:%s491]
                %511 = vst [vmem:[%s499 + $0x28] sm:%s491] %v510
              $region119: #{tpu_custom_call.1} parent=113 // loop_footer
                %s497 = sadd.s32 1, %s493
              $region120: #{tpu_custom_call.1} parent=113 // loop_footer_branch
                %492 = sbr.rel target = $region116
              $region121: #{tpu_custom_call.1} parent=113 // loop_exit
                _
            $region114: #{tpu_custom_call.1} parent=105 // pred_fallthru
              _
          $region106: #{tpu_custom_call.1} parent=101 // pred_fallthru
            _
          %536 = vnop
        $region102: #{tpu_custom_call.1} parent=59 // pred_fallthru
          _
      $region60: #{tpu_custom_call.1} parent=5 // pred_fallthru
        _
      %p537 = scmp.le.s32.totalorder 1, %s22
      %p538 = scmp.lt.s32.totalorder %s22, 3
      %p539 = pnand %p537, %p538
      %p540 = pneg %p539
      // Predicated region
      $region137: #{tpu_custom_call.1} parent=5 // pred_check
        _
      $region138: #{tpu_custom_call.1} parent=5 // pred_check_branch
        %542 = sbr.rel (%p539) target = $region140
      $region139: #{tpu_custom_call.1} parent=5 // pred_region
        %s543 = ssub.s32 %s22, 1
        // Predicated region
        $region141: #{tpu_custom_call.1} parent=139 // pred_check
          %p544 = pneg %p43
        $region142: #{tpu_custom_call.1} parent=139 // pred_check_branch
          %546 = sbr.rel (%p544) target = $region144
        $region143: #{tpu_custom_call.1} parent=139 // pred_region
          %548 = dma.done [#allocation3], 64
        $region144: #{tpu_custom_call.1} parent=139 // pred_fallthru
          _
        // Predicated region
        $region145: #{tpu_custom_call.1} parent=139 // pred_check
          %p549 = pneg %p64
        $region146: #{tpu_custom_call.1} parent=139 // pred_check_branch
          %551 = sbr.rel (%p549) target = $region148
        $region147: #{tpu_custom_call.1} parent=139 // pred_region
          %553 = dma.done [#allocation5], 32
        $region148: #{tpu_custom_call.1} parent=139 // pred_fallthru
          _
        // Predicated region
        $region149: #{tpu_custom_call.1} parent=139 // pred_check
          %p554 = pneg %p85
        $region150: #{tpu_custom_call.1} parent=139 // pred_check_branch
          %556 = sbr.rel (%p554) target = $region152
        $region151: #{tpu_custom_call.1} parent=139 // pred_region
          %558 = dma.done [#allocation5], 32
        $region152: #{tpu_custom_call.1} parent=139 // pred_fallthru
          _
        // Predicated region
        $region153: #{tpu_custom_call.1} parent=139 // pred_check
          %p559 = pneg %p106
        $region154: #{tpu_custom_call.1} parent=139 // pred_check_branch
          %561 = sbr.rel (%p559) target = $region156
        $region155: #{tpu_custom_call.1} parent=139 // pred_region
          %563 = dma.done [#allocation8], 32
        $region156: #{tpu_custom_call.1} parent=139 // pred_fallthru
          _
        %s564 = sand.u32 %s119, 1
        %s565 = sand.u32 %s119, 1
        %s566 = smul.addr %s565, 48
        %s567 = scalar_lea.vmem [#allocation9], %s566
        // Predicated region
        $region157: #{tpu_custom_call.1} parent=139 // pred_check
          %p568 = pneg %p132
        $region158: #{tpu_custom_call.1} parent=139 // pred_check_branch
          %570 = sbr.rel (%p568) target = $region160
        $region159: #{tpu_custom_call.1} parent=139 // pred_region
          _
        $region160: #{tpu_custom_call.1} parent=139 // pred_fallthru
          _
        %s571 = sand.u32 %s145, 1
        %s572 = sand.u32 %s145, 1
        %s573 = smul.addr %s572, 48
        %s574 = scalar_lea.vmem [#allocation10], %s573
        // Predicated region
        $region161: #{tpu_custom_call.1} parent=139 // pred_check
          %p575 = pneg %p158
        $region162: #{tpu_custom_call.1} parent=139 // pred_check_branch
          %577 = sbr.rel (%p575) target = $region164
        $region163: #{tpu_custom_call.1} parent=139 // pred_region
          _
        $region164: #{tpu_custom_call.1} parent=139 // pred_fallthru
          _
        %578 = sfence
        %p579 = pneg %p43
        %p580 = pneg %p40
        %p581 = pneg %p64
        %p582 = pneg %p61
        %p583 = pneg %p85
        %p584 = pneg %p82
        %p585 = pneg %p106
        %p586 = pneg %p103
        %s587 = sand.u32 %s119, 1
        %s588 = sand.u32 %s119, 1
        %s589 = smul.addr %s588, 48
        %s590 = scalar_lea.vmem [#allocation9], %s589
        %p591 = pneg %p132
        %p592 = pneg %p129
        %s593 = sand.u32 %s145, 1
        %s594 = sand.u32 %s145, 1
        %s595 = smul.addr %s594, 48
        %s596 = scalar_lea.vmem [#allocation10], %s595
        %p597 = pneg %p158
        %p598 = pneg %p155
        %p599 = pneg %p179
        %p600 = pneg %p176
        %p601 = pneg %p200
        %p602 = pneg %p197
        %p603 = pneg %p221
        %p604 = pneg %p218
        %p605 = pneg %p242
        %p606 = pneg %p239
        %p607 = pneg %p263
        %p608 = pneg %p260
        %p609 = pneg %p284
        %p610 = pneg %p281
        %p611 = pneg %p305
        %p612 = pneg %p302
        %p613 = pneg %p331
        %p614 = pneg %p328
        %p615 = scmp.lt.s32.totalorder %s27, 1
        %s616 = scalar_select %p615, %s27, 1
        %s617 = smul.addr %s616, 2
        %s618 = smul.addr %s617, 8
        %s619 = scalar_lea.vmem %s13, %s618
        %p620 = scmp.lt.s32.totalorder %s27, 1
        %s621 = scalar_select %p620, %s27, 1
        %s622 = smul.addr %s621, 2
        %s623 = smul.addr %s622, 8
        %s624 = scalar_lea.vmem %s13, %s623
        %v625 = vld [vmem:[%s7] sm:$0xff]
        %v626 = vld [vmem:[%s7 + $0x8] sm:$0x3]
        %v627 = vld [vmem:[%s8] sm:$0xff]
        %v628 = vld [vmem:[%s8 + $0x8] sm:$0x3]
        %v629 = vld [vmem:[%s567] sm:$0xff]
        %v630 = vld [vmem:[%s567 + $0x8] sm:$0x3]
        %s631 = scalar_lea.vmem %s567, 16 [#allocation9]
        %v632 = vld [vmem:[%s631] sm:$0xff]
        %v633 = vld [vmem:[%s631 + $0x8] sm:$0x3]
        %s634 = scalar_lea.vmem %s567, 32 [#allocation9]
        %v635 = vld [vmem:[%s634] sm:$0xff]
        %v636 = vld [vmem:[%s634 + $0x8] sm:$0x3]
        %v637 = vld [vmem:[%s574] sm:$0xff]
        %v638 = vld [vmem:[%s574 + $0x8] sm:$0x3]
        %s639 = scalar_lea.vmem %s574, 16 [#allocation10]
        %v640 = vld [vmem:[%s639] sm:$0xff]
        %v641 = vld [vmem:[%s639 + $0x8] sm:$0x3]
        %s642 = scalar_lea.vmem %s574, 32 [#allocation10]
        %v643 = vld [vmem:[%s642] sm:$0xff]
        %v644 = vld [vmem:[%s642 + $0x8] sm:$0x3]
        %s645 = sld [smem:[#allocation2]]
        %v646 = vstv %s645
        %v647 = vmul.f32 %v646, %v629
        %v648 = vmul.f32 %v646, %v630
        %v649 = vadd.f32 %v647, 0.0
        %v650 = vadd.f32 %v648, 0.0
        %s651 = sld [smem:[#allocation2 + $0x80]]
        %v652 = vstv %s651
        %v653 = vmul.f32 %v652, %v637
        %v654 = vmul.f32 %v652, %v638
        %v655 = vadd.f32 %v653, 0.0
        %v656 = vadd.f32 %v654, 0.0
        %s657 = sld [smem:[#allocation2 + $0x1]]
        %v658 = vstv %s657
        %v659 = vmul.f32 %v658, %v632
        %v660 = vmul.f32 %v658, %v633
        %v661 = vadd.f32 %v649, %v659
        %v662 = vadd.f32 %v650, %v660
        %s663 = sld [smem:[#allocation2 + $0x81]]
        %v664 = vstv %s663
        %v665 = vmul.f32 %v664, %v640
        %v666 = vmul.f32 %v664, %v641
        %v667 = vadd.f32 %v655, %v665
        %v668 = vadd.f32 %v656, %v666
        %s669 = sld [smem:[#allocation2 + $0x2]]
        %v670 = vstv %s669
        %v671 = vmul.f32 %v670, %v635
        %v672 = vmul.f32 %v670, %v636
        %v673 = vadd.f32 %v661, %v671
        %v674 = vadd.f32 %v662, %v672
        %s675 = sld [smem:[#allocation2 + $0x82]]
        %v676 = vstv %s675
        %v677 = vmul.f32 %v676, %v643
        %v678 = vmul.f32 %v676, %v644
        %v679 = vadd.f32 %v667, %v677
        %v680 = vadd.f32 %v668, %v678
        %vm683 = vcmask 1041408
        %v684 = vrot.slane %v679, 6
        %v685 = vrot.slane %v680, 6
        %v686 = vsel %vm683, %v684, %v685
        %v688 = vsel %vm683, %v674, %v684
        %v689 = vld [vmem:[%s6] sm:$0xff]
        %v690 = vld [vmem:[%s6 + $0x8] sm:$0xff]
        %v691 = vld [vmem:[%s6 + $0x10] sm:$0xff]
        %v692 = vld [vmem:[%s6 + $0x18] sm:$0xff]
        %vm693 = vcmask 261120
        %v695 = vsel %vm693, %v673, 0
        %v698 = vsel %vm693, %v688, 0
        %v700 = vsel %vm693, %v686, 0
        %702 = vmatpush.msra.mxu0 0.0
        %703 = vmatpush.msra.mxu0 0.0
        %704 = vmatpush.msra.mxu0 0.0
        %705 = vmatpush.msra.mxu0 0.0
        %706 = vmatpush.msra.mxu0 0.0
        %707 = vmatpush.msra.mxu0 0.0
        %708 = vmatpush.msra.mxu0 0.0
        %709 = vmatpush.msra.mxu0 0.0
        %710 = vmatpush.msra.mxu0 0.0
        %711 = vmatpush.msra.mxu0 0.0
        %712 = vmatpush.msra.mxu0 0.0
        %713 = vmatpush.msra.mxu0 0.0
        %714 = vmatpush.msra.mxu0 %v692
        %715 = vmatpush.msra.mxu0 %v691
        %716 = vmatpush.msra.mxu0 %v690
        %717 = vmatpush.msra.mxu0 %v689
        %718 = vmatmul.f32.gmra.mxu0 %v695
        %v719 = vpop.f32.mrf.mxu0
        %v720 = vadd.f32 0.0, %v719
        %721 = vmatmul.f32.gmra.mxu0 %v698
        %v722 = vpop.f32.mrf.mxu0
        %v723 = vadd.f32 0.0, %v722
        %724 = vmatmul.f32.gmra.mxu0 %v700
        %v725 = vpop.f32.mrf.mxu0
        %v726 = vadd.f32 0.0, %v725
        %727 = vdwg.mxu0
        %v728 = vxor.u32 %v723, 2147483648
        %v729 = vxor.u32 %v726, 2147483648
        %v730 = vmul.f32 %v728, 1.442695
        %v731 = vpow.pop %v730
        %v732 = vmul.f32 %v729, 1.442695
        %v733 = vpow.pop %v732
        %v734 = vadd.f32 %v731, 1.0
        %v735 = vadd.f32 %v733, 1.0
        %v736 = vrcp.pop %v734
        %v737 = vmul.f32 %v734, %v736
        %v738 = vsub.f32 1.0, %v737
        %v739 = vmul.f32 %v736, %v738
        %v740 = vadd.f32 %v736, %v739
        %vm741 = vweird.f32 %v734
        %vm742 = vweird.f32 %v736
        %vm743 = vmor %vm741, %vm742
        %v744 = vsel %vm743, %v736, %v740
        %v745 = vand.u32 2147483647, %v734
        %vm746 = vcmp.eq.f32.partialorder %v745, 8.507059e+37
        %v747 = vand.u32 %v734, 2147483648
        %v748 = vor.u32 1.1754944e-38, %v747
        %v749 = vsel %vm746, %v748, %v744
        %v750 = vmul.f32 1.0, %v749
        %v751 = vrcp.pop %v735
        %v752 = vmul.f32 %v735, %v751
        %v753 = vsub.f32 1.0, %v752
        %v754 = vmul.f32 %v751, %v753
        %v755 = vadd.f32 %v751, %v754
        %vm756 = vweird.f32 %v735
        %vm757 = vweird.f32 %v751
        %vm758 = vmor %vm756, %vm757
        %v759 = vsel %vm758, %v751, %v755
        %v760 = vand.u32 2147483647, %v735
        %vm761 = vcmp.eq.f32.partialorder %v760, 8.507059e+37
        %v762 = vand.u32 %v735, 2147483648
        %v763 = vor.u32 1.1754944e-38, %v762
        %v764 = vsel %vm761, %v763, %v759
        %v765 = vmul.f32 1.0, %v764
        %s766 = sld [smem:[#allocation7]]
        %s767 = sld [smem:[#allocation7 + $0x1]]
        %vm770 = vcmask 1045504
        %v771 = vrot.slane %v723, 2
        %v772 = vrot.slane %v726, 2
        %v773 = vsel %vm770, %v771, %v772
        %774 = vrot.lane.b32.xlu0 %v773, 96
        %v775 = vpop.permute.xlu0 %774
        %776 = vrot.lane.b32.xlu0 %v772, 96
        %v777 = vpop.permute.xlu0 %776
        %v779 = vsel %vm693, %v720, 0
        %v781 = vsel %vm693, %v723, 0
        %v783 = vsel %vm693, %v775, 0
        %v785 = vsel %vm693, %v777, 0
        %787 = vmatpush.xpose.msra.mxu0 0.0
        %788 = vmatpush.xpose.msra.mxu0 0.0
        %789 = vmatpush.xpose.msra.mxu0 0.0
        %790 = vmatpush.xpose.msra.mxu0 0.0
        %791 = vmatpush.xpose.msra.mxu0 0.0
        %792 = vmatpush.xpose.msra.mxu0 0.0
        %793 = vmatpush.xpose.msra.mxu0 0.0
        %794 = vmatpush.xpose.msra.mxu0 0.0
        %795 = vmatpush.xpose.msra.mxu0 0.0
        %796 = vmatpush.xpose.msra.mxu0 0.0
        %797 = vmatpush.xpose.msra.mxu0 0.0
        %798 = vmatpush.xpose.msra.mxu0 0.0
        %799 = vmatpush.xpose.msra.mxu0 0.0
        %800 = vmatpush.xpose.msra.mxu0 0.0
        %801 = vmatpush.xpose.msra.mxu0 %v785
        %802 = vmatpush.xpose.msra.mxu0 %v783
        %803 = vmatmul.f32.gmra.mxu0 %v779
        %v804 = vpop.f32.mrf.mxu0
        %v805 = vadd.f32 0.0, %v804
        %806 = vmatmul.f32.gmra.mxu0 %v781
        %v807 = vpop.f32.mrf.mxu0
        %v808 = vadd.f32 0.0, %v807
        %809 = vdwg.mxu0
        %vm810 = vcmask 80896
        %v811 = vsel %vm810, %v805, -inf
        %812 = vmax.xlane.f32.xlu0 %v811
        %v813 = vpop.xlane.xlu0 %812
        %vm814 = vcmask 74752
        %v815 = vsel %vm814, %v808, -inf
        %816 = vmax.xlane.f32.xlu0 %v815
        %v817 = vpop.xlane.xlu0 %816
        %v818 = vsub.f32 %v805, %v813
        %v819 = vsub.f32 %v808, %v817
        %v820 = vmul.f32 %v818, 1.442695
        %v821 = vpow.pop %v820
        %v822 = vmul.f32 %v819, 1.442695
        %v823 = vpow.pop %v822
        %v824 = vsel %vm810, %v821, 0.0
        %825 = vadd.xlane.f32.xlu0 %v824
        %v826 = vpop.xlane.xlu0 %825
        %v827 = vsel %vm814, %v823, 0.0
        %828 = vadd.xlane.f32.xlu0 %v827
        %v829 = vpop.xlane.xlu0 %828
        %v830 = vrcp.pop %v826
        %v831 = vrcp.pop %v829
        %v832 = vmul.f32 %v821, %v830
        %v833 = vmul.f32 %v823, %v831
        %834 = vrot.lane.b32.xlu0 %v773, 64
        %v835 = vpop.permute.xlu0 %834
        %836 = vrot.lane.b32.xlu0 %v772, 64
        %v837 = vpop.permute.xlu0 %836
        %v840 = vsel %vm810, %v832, 0
        %v843 = vsel %vm810, %v833, 0
        %v845 = vsel %vm683, %v837, 0
        %847 = vmatpush.msra.mxu0 0.0
        %848 = vmatpush.msra.mxu0 0.0
        %849 = vmatpush.msra.mxu0 0.0
        %850 = vmatpush.msra.mxu0 0.0
        %851 = vmatpush.msra.mxu0 0.0
        %852 = vmatpush.msra.mxu0 0.0
        %853 = vmatpush.msra.mxu0 0.0
        %854 = vmatpush.msra.mxu0 0.0
        %855 = vmatpush.msra.mxu0 0.0
        %856 = vmatpush.msra.mxu0 0.0
        %857 = vmatpush.msra.mxu0 0.0
        %858 = vmatpush.msra.mxu0 0.0
        %859 = vmatpush.msra.mxu0 0.0
        %860 = vmatpush.msra.mxu0 0.0
        %861 = vmatpush.msra.mxu0 %v845
        %862 = vmatpush.msra.mxu0 %v835
        %863 = vmatmul.f32.gmra.mxu0 %v840
        %v864 = vpop.f32.mrf.mxu0
        %v865 = vadd.f32 0.0, %v864
        %866 = vmatmul.f32.gmra.mxu0 %v843
        %v867 = vpop.f32.mrf.mxu0
        %v868 = vadd.f32 0.0, %v867
        %869 = vdwg.mxu0
        %v870 = vstv %s766
        %v871 = vmul.f32 %v870, %v865
        %v872 = vmul.f32 %v870, %v868
        %v875 = vrot.slane %v750, 2
        %v876 = vrot.slane %v765, 2
        %v877 = vsel %vm770, %v875, %v876
        %878 = vrot.lane.b32.xlu0 %v877, 32
        %v879 = vpop.permute.xlu0 %878
        %880 = vrot.lane.b32.xlu0 %v876, 32
        %v881 = vpop.permute.xlu0 %880
        %v884 = vmul.f32 %v673, %v879
        %v885 = vmul.f32 %v674, %v881
        %v886 = vstv %s767
        %v887 = vmul.f32 %v886, %v884
        %v888 = vmul.f32 %v886, %v885
        %v889 = vadd.f32 %v871, %v887
        %v890 = vadd.f32 %v872, %v888
        %vm891 = vcmask 36882
        %v892 = vsel %vm891, %v805, -inf
        %893 = vmax.xlane.f32.xlu0 %v892
        %v894 = vpop.xlane.xlu0 %893
        %v895 = vsub.f32 %v805, %v894
        %v896 = vmul.f32 %v895, 1.442695
        %v897 = vpow.pop %v896
        %899 = vrot.lane.b32.xlu0 %v897, 126
        %v900 = vpop.permute.xlu0 %899
        %vm902 = vcmask 20482
        %v903 = vsel %vm902, %v900, 0.0
        %904 = vadd.xlane.f32.xlu0 %v903
        %v905 = vpop.xlane.xlu0 %904
        %v906 = vrcp.pop %v905
        %v907 = vmul.f32 %v897, %v906
        %v909 = vrot.slane %v907, 2
        %910 = vrot.lane.b32.xlu0 %v909, 126
        %v911 = vpop.permute.xlu0 %910
        %v912 = vrot.slane %v723, 4
        %913 = vrot.lane.b32.xlu0 %v912, 64
        %v914 = vpop.permute.xlu0 %913
        %vm915 = vcmask 23552
        %v916 = vsel %vm915, %v911, 0
        %vm918 = vcmask 1042432
        %v919 = vsel %vm918, %v914, 0
        %921 = vmatpush.msra.mxu0 0.0
        %922 = vmatpush.msra.mxu0 0.0
        %923 = vmatpush.msra.mxu0 0.0
        %924 = vmatpush.msra.mxu0 0.0
        %925 = vmatpush.msra.mxu0 0.0
        %926 = vmatpush.msra.mxu0 0.0
        %927 = vmatpush.msra.mxu0 0.0
        %928 = vmatpush.msra.mxu0 0.0
        %929 = vmatpush.msra.mxu0 0.0
        %930 = vmatpush.msra.mxu0 0.0
        %931 = vmatpush.msra.mxu0 0.0
        %932 = vmatpush.msra.mxu0 0.0
        %933 = vmatpush.msra.mxu0 0.0
        %934 = vmatpush.msra.mxu0 0.0
        %935 = vmatpush.msra.mxu0 0.0
        %936 = vmatpush.msra.mxu0 %v919
        %937 = vmatmul.f32.gmra.mxu0 %v916
        %v938 = vpop.f32.mrf.mxu0
        %v939 = vadd.f32 0.0, %v938
        %940 = vdwg.mxu0
        %v941 = vmul.f32 %v870, %v939
        %942 = vrot.lane.b32.xlu0 %v875, 32
        %v943 = vpop.permute.xlu0 %942
        %v945 = vmul.f32 %v673, %v943
        %v946 = vmul.f32 %v886, %v945
        %v948 = vrot.slane %v946, 2
        %v950 = vadd.f32 %v941, %v948
        %s951 = sld [smem:[#allocation4]]
        %v952 = vstv %s951
        %v953 = vmul.f32 %v952, %v950
        %v954 = vadd.f32 %v953, 0.0
        %vm955 = vcmask 38932
        %v956 = vsel %vm955, %v805, -inf
        %957 = vmax.xlane.f32.xlu0 %v956
        %v958 = vpop.xlane.xlu0 %957
        %v959 = vsub.f32 %v805, %v958
        %v960 = vmul.f32 %v959, 1.442695
        %v961 = vpow.pop %v960
        %963 = vrot.lane.b32.xlu0 %v961, 126
        %v964 = vpop.permute.xlu0 %963
        %vm966 = vcmask 22532
        %v967 = vsel %vm966, %v964, 0.0
        %968 = vadd.xlane.f32.xlu0 %v967
        %v969 = vpop.xlane.xlu0 %968
        %v970 = vrcp.pop %v969
        %v971 = vmul.f32 %v961, %v970
        %v973 = vrot.slane %v971, 4
        %974 = vrot.lane.b32.xlu0 %v973, 126
        %v975 = vpop.permute.xlu0 %974
        %v976 = vsel %vm915, %v975, 0
        %978 = vmatpush.msra.mxu0 0.0
        %979 = vmatpush.msra.mxu0 0.0
        %980 = vmatpush.msra.mxu0 0.0
        %981 = vmatpush.msra.mxu0 0.0
        %982 = vmatpush.msra.mxu0 0.0
        %983 = vmatpush.msra.mxu0 0.0
        %984 = vmatpush.msra.mxu0 0.0
        %985 = vmatpush.msra.mxu0 0.0
        %986 = vmatpush.msra.mxu0 0.0
        %987 = vmatpush.msra.mxu0 0.0
        %988 = vmatpush.msra.mxu0 0.0
        %989 = vmatpush.msra.mxu0 0.0
        %990 = vmatpush.msra.mxu0 0.0
        %991 = vmatpush.msra.mxu0 0.0
        %992 = vmatpush.msra.mxu0 0.0
        %993 = vmatpush.msra.mxu0 %v919
        %994 = vmatmul.f32.gmra.mxu0 %v976
        %v995 = vpop.f32.mrf.mxu0
        %v996 = vadd.f32 0.0, %v995
        %997 = vdwg.mxu0
        %v998 = vmul.f32 %v870, %v996
        %999 = vrot.lane.b32.xlu0 %v750, 32
        %v1000 = vpop.permute.xlu0 %999
        %v1002 = vmul.f32 %v673, %v1000
        %v1003 = vmul.f32 %v886, %v1002
        %v1005 = vrot.slane %v1003, 4
        %v1007 = vadd.f32 %v998, %v1005
        %s1008 = sld [smem:[#allocation4 + $0x1]]
        %v1009 = vstv %s1008
        %v1010 = vmul.f32 %v1009, %v1007
        %v1011 = vadd.f32 %v954, %v1010
        %vm1012 = vcmask 39958
        %v1013 = vsel %vm1012, %v805, -inf
        %1014 = vmax.xlane.f32.xlu0 %v1013
        %v1015 = vpop.xlane.xlu0 %1014
        %vm1016 = vcmask 32784
        %v1017 = vsel %vm1016, %v808, -inf
        %1018 = vmax.xlane.f32.xlu0 %v1017
        %v1019 = vpop.xlane.xlu0 %1018
        %v1020 = vsub.f32 %v805, %v1015
        %v1021 = vsub.f32 %v808, %v1019
        %v1022 = vmul.f32 %v1020, 1.442695
        %v1023 = vpow.pop %v1022
        %v1024 = vmul.f32 %v1021, 1.442695
        %v1025 = vpow.pop %v1024
        %1028 = vrot.lane.b32.xlu0 %v1023, 126
        %v1029 = vpop.permute.xlu0 %1028
        %1030 = vrot.lane.b32.xlu0 %v1025, 126
        %v1031 = vpop.permute.xlu0 %1030
        %vm1034 = vcmask 23558
        %v1035 = vsel %vm1034, %v1029, 0.0
        %1036 = vadd.xlane.f32.xlu0 %v1035
        %v1037 = vpop.xlane.xlu0 %1036
        %vm1038 = vcmask 16384
        %v1039 = vsel %vm1038, %v1031, 0.0
        %1040 = vadd.xlane.f32.xlu0 %v1039
        %v1041 = vpop.xlane.xlu0 %1040
        %v1042 = vrcp.pop %v1037
        %v1043 = vrcp.pop %v1041
        %v1044 = vmul.f32 %v1023, %v1042
        %v1045 = vmul.f32 %v1025, %v1043
        %v1048 = vrot.slane %v1044, 6
        %v1049 = vrot.slane %v1045, 6
        %v1050 = vsel %vm683, %v1048, %v1049
        %1051 = vrot.lane.b32.xlu0 %v1050, 126
        %v1052 = vpop.permute.xlu0 %1051
        %v1053 = vsel %vm915, %v1052, 0
        %1055 = vmatpush.msra.mxu0 0.0
        %1056 = vmatpush.msra.mxu0 0.0
        %1057 = vmatpush.msra.mxu0 0.0
        %1058 = vmatpush.msra.mxu0 0.0
        %1059 = vmatpush.msra.mxu0 0.0
        %1060 = vmatpush.msra.mxu0 0.0
        %1061 = vmatpush.msra.mxu0 0.0
        %1062 = vmatpush.msra.mxu0 0.0
        %1063 = vmatpush.msra.mxu0 0.0
        %1064 = vmatpush.msra.mxu0 0.0
        %1065 = vmatpush.msra.mxu0 0.0
        %1066 = vmatpush.msra.mxu0 0.0
        %1067 = vmatpush.msra.mxu0 0.0
        %1068 = vmatpush.msra.mxu0 0.0
        %1069 = vmatpush.msra.mxu0 0.0
        %1070 = vmatpush.msra.mxu0 %v919
        %1071 = vmatmul.f32.gmra.mxu0 %v1053
        %v1072 = vpop.f32.mrf.mxu0
        %v1073 = vadd.f32 0.0, %v1072
        %1074 = vdwg.mxu0
        %v1075 = vmul.f32 %v870, %v1073
        %v1076 = vrot.slane %v750, 6
        %1077 = vrot.lane.b32.xlu0 %v1076, 32
        %v1078 = vpop.permute.xlu0 %1077
        %v1080 = vmul.f32 %v673, %v1078
        %v1081 = vmul.f32 %v674, %v1078
        %v1082 = vmul.f32 %v886, %v1080
        %v1083 = vmul.f32 %v886, %v1081
        %v1086 = vrot.slane %v1082, 6
        %v1087 = vrot.slane %v1083, 6
        %v1088 = vsel %vm683, %v1086, %v1087
        %v1090 = vadd.f32 %v1075, %v1088
        %s1091 = sld [smem:[#allocation4 + $0x2]]
        %v1092 = vstv %s1091
        %v1093 = vmul.f32 %v1092, %v1090
        %v1094 = vadd.f32 %v1011, %v1093
        %vm1095 = vcmask 53282
        %v1096 = vsel %vm1095, %v805, -inf
        %1097 = vmax.xlane.f32.xlu0 %v1096
        %v1098 = vpop.xlane.xlu0 %1097
        %v1099 = vsub.f32 %v805, %v1098
        %v1100 = vmul.f32 %v1099, 1.442695
        %v1101 = vpow.pop %v1100
        %1103 = vrot.lane.b32.xlu0 %v1101, 124
        %v1104 = vpop.permute.xlu0 %1103
        %v1106 = vsel %vm902, %v1104, 0.0
        %1107 = vadd.xlane.f32.xlu0 %v1106
        %v1108 = vpop.xlane.xlu0 %1107
        %v1109 = vrcp.pop %v1108
        %v1110 = vmul.f32 %v1101, %v1109
        %v1112 = vrot.slane %v1110, 2
        %1113 = vrot.lane.b32.xlu0 %v1112, 124
        %v1114 = vpop.permute.xlu0 %1113
        %v1115 = vrot.slane %v723, 6
        %v1116 = vrot.slane %v726, 6
        %v1117 = vsel %vm683, %v1115, %v1116
        %1118 = vrot.lane.b32.xlu0 %v1117, 64
        %v1119 = vpop.permute.xlu0 %1118
        %v1120 = vsel %vm915, %v1114, 0
        %v1122 = vsel %vm918, %v1119, 0
        %1124 = vmatpush.msra.mxu0 0.0
        %1125 = vmatpush.msra.mxu0 0.0
        %1126 = vmatpush.msra.mxu0 0.0
        %1127 = vmatpush.msra.mxu0 0.0
        %1128 = vmatpush.msra.mxu0 0.0
        %1129 = vmatpush.msra.mxu0 0.0
        %1130 = vmatpush.msra.mxu0 0.0
        %1131 = vmatpush.msra.mxu0 0.0
        %1132 = vmatpush.msra.mxu0 0.0
        %1133 = vmatpush.msra.mxu0 0.0
        %1134 = vmatpush.msra.mxu0 0.0
        %1135 = vmatpush.msra.mxu0 0.0
        %1136 = vmatpush.msra.mxu0 0.0
        %1137 = vmatpush.msra.mxu0 0.0
        %1138 = vmatpush.msra.mxu0 0.0
        %1139 = vmatpush.msra.mxu0 %v1122
        %1140 = vmatmul.f32.gmra.mxu0 %v1120
        %v1141 = vpop.f32.mrf.mxu0
        %v1142 = vadd.f32 0.0, %v1141
        %1143 = vdwg.mxu0
        %v1144 = vmul.f32 %v870, %v1142
        %vm1145 = vcmask 1043456
        %v1146 = vrot.slane %v750, 4
        %v1147 = vrot.slane %v765, 4
        %v1148 = vsel %vm1145, %v1146, %v1147
        %1149 = vrot.lane.b32.xlu0 %v1148, 32
        %v1150 = vpop.permute.xlu0 %1149
        %v1152 = vmul.f32 %v673, %v1150
        %v1153 = vmul.f32 %v886, %v1152
        %v1155 = vrot.slane %v1153, 2
        %v1157 = vadd.f32 %v1144, %v1155
        %s1158 = sld [smem:[#allocation4 + $0x3]]
        %v1159 = vstv %s1158
        %v1160 = vmul.f32 %v1159, %v1157
        %v1161 = vadd.f32 %v1094, %v1160
        %vm1162 = vcmask 55332
        %v1163 = vsel %vm1162, %v805, -inf
        %1164 = vmax.xlane.f32.xlu0 %v1163
        %v1165 = vpop.xlane.xlu0 %1164
        %v1166 = vsub.f32 %v805, %v1165
        %v1167 = vmul.f32 %v1166, 1.442695
        %v1168 = vpow.pop %v1167
        %1170 = vrot.lane.b32.xlu0 %v1168, 124
        %v1171 = vpop.permute.xlu0 %1170
        %v1173 = vsel %vm966, %v1171, 0.0
        %1174 = vadd.xlane.f32.xlu0 %v1173
        %v1175 = vpop.xlane.xlu0 %1174
        %v1176 = vrcp.pop %v1175
        %v1177 = vmul.f32 %v1168, %v1176
        %v1179 = vrot.slane %v1177, 4
        %1180 = vrot.lane.b32.xlu0 %v1179, 124
        %v1181 = vpop.permute.xlu0 %1180
        %v1182 = vsel %vm915, %v1181, 0
        %1184 = vmatpush.msra.mxu0 0.0
        %1185 = vmatpush.msra.mxu0 0.0
        %1186 = vmatpush.msra.mxu0 0.0
        %1187 = vmatpush.msra.mxu0 0.0
        %1188 = vmatpush.msra.mxu0 0.0
        %1189 = vmatpush.msra.mxu0 0.0
        %1190 = vmatpush.msra.mxu0 0.0
        %1191 = vmatpush.msra.mxu0 0.0
        %1192 = vmatpush.msra.mxu0 0.0
        %1193 = vmatpush.msra.mxu0 0.0
        %1194 = vmatpush.msra.mxu0 0.0
        %1195 = vmatpush.msra.mxu0 0.0
        %1196 = vmatpush.msra.mxu0 0.0
        %1197 = vmatpush.msra.mxu0 0.0
        %1198 = vmatpush.msra.mxu0 0.0
        %1199 = vmatpush.msra.mxu0 %v1122
        %1200 = vmatmul.f32.gmra.mxu0 %v1182
        %v1201 = vpop.f32.mrf.mxu0
        %v1202 = vadd.f32 0.0, %v1201
        %1203 = vdwg.mxu0
        %v1204 = vmul.f32 %v870, %v1202
        %v1206 = vrot.slane %v887, 4
        %v1208 = vadd.f32 %v1204, %v1206
        %s1209 = sld [smem:[#allocation4 + $0x4]]
        %v1210 = vstv %s1209
        %v1211 = vmul.f32 %v1210, %v1208
        %v1212 = vadd.f32 %v1161, %v1211
        %vm1213 = vcmask 56358
        %v1214 = vsel %vm1213, %v805, -inf
        %1215 = vmax.xlane.f32.xlu0 %v1214
        %v1216 = vpop.xlane.xlu0 %1215
        %vm1217 = vcmask 49184
        %v1218 = vsel %vm1217, %v808, -inf
        %1219 = vmax.xlane.f32.xlu0 %v1218
        %v1220 = vpop.xlane.xlu0 %1219
        %v1221 = vsub.f32 %v805, %v1216
        %v1222 = vsub.f32 %v808, %v1220
        %v1223 = vmul.f32 %v1221, 1.442695
        %v1224 = vpow.pop %v1223
        %v1225 = vmul.f32 %v1222, 1.442695
        %v1226 = vpow.pop %v1225
        %1229 = vrot.lane.b32.xlu0 %v1224, 124
        %v1230 = vpop.permute.xlu0 %1229
        %1231 = vrot.lane.b32.xlu0 %v1226, 124
        %v1232 = vpop.permute.xlu0 %1231
        %v1235 = vsel %vm1034, %v1230, 0.0
        %1236 = vadd.xlane.f32.xlu0 %v1235
        %v1237 = vpop.xlane.xlu0 %1236
        %v1238 = vsel %vm1038, %v1232, 0.0
        %1239 = vadd.xlane.f32.xlu0 %v1238
        %v1240 = vpop.xlane.xlu0 %1239
        %v1241 = vrcp.pop %v1237
        %v1242 = vrcp.pop %v1240
        %v1243 = vmul.f32 %v1224, %v1241
        %v1244 = vmul.f32 %v1226, %v1242
        %v1247 = vrot.slane %v1243, 6
        %v1248 = vrot.slane %v1244, 6
        %v1249 = vsel %vm683, %v1247, %v1248
        %1250 = vrot.lane.b32.xlu0 %v1249, 124
        %v1251 = vpop.permute.xlu0 %1250
        %v1252 = vsel %vm915, %v1251, 0
        %1254 = vmatpush.msra.mxu0 0.0
        %1255 = vmatpush.msra.mxu0 0.0
        %1256 = vmatpush.msra.mxu0 0.0
        %1257 = vmatpush.msra.mxu0 0.0
        %1258 = vmatpush.msra.mxu0 0.0
        %1259 = vmatpush.msra.mxu0 0.0
        %1260 = vmatpush.msra.mxu0 0.0
        %1261 = vmatpush.msra.mxu0 0.0
        %1262 = vmatpush.msra.mxu0 0.0
        %1263 = vmatpush.msra.mxu0 0.0
        %1264 = vmatpush.msra.mxu0 0.0
        %1265 = vmatpush.msra.mxu0 0.0
        %1266 = vmatpush.msra.mxu0 0.0
        %1267 = vmatpush.msra.mxu0 0.0
        %1268 = vmatpush.msra.mxu0 0.0
        %1269 = vmatpush.msra.mxu0 %v1122
        %1270 = vmatmul.f32.gmra.mxu0 %v1252
        %v1271 = vpop.f32.mrf.mxu0
        %v1272 = vadd.f32 0.0, %v1271
        %1273 = vdwg.mxu0
        %v1274 = vmul.f32 %v870, %v1272
        %1275 = vrot.lane.b32.xlu0 %v765, 32
        %v1276 = vpop.permute.xlu0 %1275
        %v1278 = vmul.f32 %v674, %v1276
        %v1279 = vmul.f32 %v886, %v1278
        %v1281 = vrot.slane %v1003, 6
        %v1282 = vrot.slane %v1279, 6
        %v1283 = vsel %vm683, %v1281, %v1282
        %v1285 = vadd.f32 %v1274, %v1283
        %s1286 = sld [smem:[#allocation4 + $0x5]]
        %v1287 = vstv %s1286
        %v1288 = vmul.f32 %v1287, %v1285
        %v1289 = vadd.f32 %v1212, %v1288
        %vm1290 = vcmask 69682
        %v1291 = vsel %vm1290, %v805, -inf
        %1292 = vmax.xlane.f32.xlu0 %v1291
        %v1293 = vpop.xlane.xlu0 %1292
        %v1294 = vsub.f32 %v805, %v1293
        %v1295 = vmul.f32 %v1294, 1.442695
        %v1296 = vpow.pop %v1295
        %1298 = vrot.lane.b32.xlu0 %v1296, 122
        %v1299 = vpop.permute.xlu0 %1298
        %v1301 = vsel %vm902, %v1299, 0.0
        %1302 = vadd.xlane.f32.xlu0 %v1301
        %v1303 = vpop.xlane.xlu0 %1302
        %v1304 = vrcp.pop %v1303
        %v1305 = vmul.f32 %v1296, %v1304
        %v1307 = vrot.slane %v1305, 2
        %1308 = vrot.lane.b32.xlu0 %v1307, 122
        %v1309 = vpop.permute.xlu0 %1308
        %1310 = vrot.lane.b32.xlu0 %v726, 64
        %v1311 = vpop.permute.xlu0 %1310
        %v1312 = vsel %vm915, %v1309, 0
        %v1314 = vsel %vm918, %v1311, 0
        %1316 = vmatpush.msra.mxu0 0.0
        %1317 = vmatpush.msra.mxu0 0.0
        %1318 = vmatpush.msra.mxu0 0.0
        %1319 = vmatpush.msra.mxu0 0.0
        %1320 = vmatpush.msra.mxu0 0.0
        %1321 = vmatpush.msra.mxu0 0.0
        %1322 = vmatpush.msra.mxu0 0.0
        %1323 = vmatpush.msra.mxu0 0.0
        %1324 = vmatpush.msra.mxu0 0.0
        %1325 = vmatpush.msra.mxu0 0.0
        %1326 = vmatpush.msra.mxu0 0.0
        %1327 = vmatpush.msra.mxu0 0.0
        %1328 = vmatpush.msra.mxu0 0.0
        %1329 = vmatpush.msra.mxu0 0.0
        %1330 = vmatpush.msra.mxu0 0.0
        %1331 = vmatpush.msra.mxu0 %v1314
        %1332 = vmatmul.f32.gmra.mxu0 %v1312
        %v1333 = vpop.f32.mrf.mxu0
        %v1334 = vadd.f32 0.0, %v1333
        %1335 = vdwg.mxu0
        %v1336 = vmul.f32 %v870, %v1334
        %v1337 = vrot.slane %v765, 6
        %1338 = vrot.lane.b32.xlu0 %v1337, 32
        %v1339 = vpop.permute.xlu0 %1338
        %v1341 = vmul.f32 %v673, %v1339
        %v1342 = vmul.f32 %v886, %v1341
        %v1344 = vrot.slane %v1342, 2
        %v1346 = vadd.f32 %v1336, %v1344
        %s1347 = sld [smem:[#allocation4 + $0x6]]
        %v1348 = vstv %s1347
        %v1349 = vmul.f32 %v1348, %v1346
        %v1350 = vadd.f32 %v1289, %v1349
        %vm1351 = vcmask 71732
        %v1352 = vsel %vm1351, %v805, -inf
        %1353 = vmax.xlane.f32.xlu0 %v1352
        %v1354 = vpop.xlane.xlu0 %1353
        %v1355 = vsub.f32 %v805, %v1354
        %v1356 = vmul.f32 %v1355, 1.442695
        %v1357 = vpow.pop %v1356
        %1359 = vrot.lane.b32.xlu0 %v1357, 122
        %v1360 = vpop.permute.xlu0 %1359
        %v1362 = vsel %vm966, %v1360, 0.0
        %1363 = vadd.xlane.f32.xlu0 %v1362
        %v1364 = vpop.xlane.xlu0 %1363
        %v1365 = vrcp.pop %v1364
        %v1366 = vmul.f32 %v1357, %v1365
        %v1368 = vrot.slane %v1366, 4
        %1369 = vrot.lane.b32.xlu0 %v1368, 122
        %v1370 = vpop.permute.xlu0 %1369
        %v1371 = vsel %vm915, %v1370, 0
        %1373 = vmatpush.msra.mxu0 0.0
        %1374 = vmatpush.msra.mxu0 0.0
        %1375 = vmatpush.msra.mxu0 0.0
        %1376 = vmatpush.msra.mxu0 0.0
        %1377 = vmatpush.msra.mxu0 0.0
        %1378 = vmatpush.msra.mxu0 0.0
        %1379 = vmatpush.msra.mxu0 0.0
        %1380 = vmatpush.msra.mxu0 0.0
        %1381 = vmatpush.msra.mxu0 0.0
        %1382 = vmatpush.msra.mxu0 0.0
        %1383 = vmatpush.msra.mxu0 0.0
        %1384 = vmatpush.msra.mxu0 0.0
        %1385 = vmatpush.msra.mxu0 0.0
        %1386 = vmatpush.msra.mxu0 0.0
        %1387 = vmatpush.msra.mxu0 0.0
        %1388 = vmatpush.msra.mxu0 %v1314
        %1389 = vmatmul.f32.gmra.mxu0 %v1371
        %v1390 = vpop.f32.mrf.mxu0
        %v1391 = vadd.f32 0.0, %v1390
        %1392 = vdwg.mxu0
        %v1393 = vmul.f32 %v870, %v1391
        %1394 = vrot.lane.b32.xlu0 %v1147, 32
        %v1395 = vpop.permute.xlu0 %1394
        %v1397 = vmul.f32 %v673, %v1395
        %v1398 = vmul.f32 %v886, %v1397
        %v1400 = vrot.slane %v1398, 4
        %v1402 = vadd.f32 %v1393, %v1400
        %s1403 = sld [smem:[#allocation4 + $0x7]]
        %v1404 = vstv %s1403
        %v1405 = vmul.f32 %v1404, %v1402
        %v1406 = vadd.f32 %v1350, %v1405
        %vm1407 = vcmask 72758
        %v1408 = vsel %vm1407, %v805, -inf
        %1409 = vmax.xlane.f32.xlu0 %v1408
        %v1410 = vpop.xlane.xlu0 %1409
        %vm1411 = vcmask 65584
        %v1412 = vsel %vm1411, %v808, -inf
        %1413 = vmax.xlane.f32.xlu0 %v1412
        %v1414 = vpop.xlane.xlu0 %1413
        %v1415 = vsub.f32 %v805, %v1410
        %v1416 = vsub.f32 %v808, %v1414
        %v1417 = vmul.f32 %v1415, 1.442695
        %v1418 = vpow.pop %v1417
        %v1419 = vmul.f32 %v1416, 1.442695
        %v1420 = vpow.pop %v1419
        %1423 = vrot.lane.b32.xlu0 %v1418, 122
        %v1424 = vpop.permute.xlu0 %1423
        %1425 = vrot.lane.b32.xlu0 %v1420, 122
        %v1426 = vpop.permute.xlu0 %1425
        %v1429 = vsel %vm1034, %v1424, 0.0
        %1430 = vadd.xlane.f32.xlu0 %v1429
        %v1431 = vpop.xlane.xlu0 %1430
        %v1432 = vsel %vm1038, %v1426, 0.0
        %1433 = vadd.xlane.f32.xlu0 %v1432
        %v1434 = vpop.xlane.xlu0 %1433
        %v1435 = vrcp.pop %v1431
        %v1436 = vrcp.pop %v1434
        %v1437 = vmul.f32 %v1418, %v1435
        %v1438 = vmul.f32 %v1420, %v1436
        %v1441 = vrot.slane %v1437, 6
        %v1442 = vrot.slane %v1438, 6
        %v1443 = vsel %vm683, %v1441, %v1442
        %1444 = vrot.lane.b32.xlu0 %v1443, 122
        %v1445 = vpop.permute.xlu0 %1444
        %v1446 = vsel %vm915, %v1445, 0
        %1448 = vmatpush.msra.mxu0 0.0
        %1449 = vmatpush.msra.mxu0 0.0
        %1450 = vmatpush.msra.mxu0 0.0
        %1451 = vmatpush.msra.mxu0 0.0
        %1452 = vmatpush.msra.mxu0 0.0
        %1453 = vmatpush.msra.mxu0 0.0
        %1454 = vmatpush.msra.mxu0 0.0
        %1455 = vmatpush.msra.mxu0 0.0
        %1456 = vmatpush.msra.mxu0 0.0
        %1457 = vmatpush.msra.mxu0 0.0
        %1458 = vmatpush.msra.mxu0 0.0
        %1459 = vmatpush.msra.mxu0 0.0
        %1460 = vmatpush.msra.mxu0 0.0
        %1461 = vmatpush.msra.mxu0 0.0
        %1462 = vmatpush.msra.mxu0 0.0
        %1463 = vmatpush.msra.mxu0 %v1314
        %1464 = vmatmul.f32.gmra.mxu0 %v1446
        %v1465 = vpop.f32.mrf.mxu0
        %v1466 = vadd.f32 0.0, %v1465
        %1467 = vdwg.mxu0
        %v1468 = vmul.f32 %v870, %v1466
        %v1469 = vmul.f32 %v673, %v881
        %v1470 = vmul.f32 %v886, %v1469
        %v1473 = vrot.slane %v1470, 6
        %v1474 = vrot.slane %v888, 6
        %v1475 = vsel %vm683, %v1473, %v1474
        %v1477 = vadd.f32 %v1468, %v1475
        %s1478 = sld [smem:[#allocation4 + $0x8]]
        %v1479 = vstv %s1478
        %v1480 = vmul.f32 %v1479, %v1477
        %v1481 = vadd.f32 %v1406, %v1480
        %s1482 = sld [smem:[#allocation6]]
        %v1484 = vsel %vm915, %v625, 0
        %v1487 = vsel %vm915, %v626, 0
        %v1490 = vsel %vm918, %v1481, 0
        %1492 = vmatpush.msra.mxu0 0.0
        %1493 = vmatpush.msra.mxu0 0.0
        %1494 = vmatpush.msra.mxu0 0.0
        %1495 = vmatpush.msra.mxu0 0.0
        %1496 = vmatpush.msra.mxu0 0.0
        %1497 = vmatpush.msra.mxu0 0.0
        %1498 = vmatpush.msra.mxu0 0.0
        %1499 = vmatpush.msra.mxu0 0.0
        %1500 = vmatpush.msra.mxu0 0.0
        %1501 = vmatpush.msra.mxu0 0.0
        %1502 = vmatpush.msra.mxu0 0.0
        %1503 = vmatpush.msra.mxu0 0.0
        %1504 = vmatpush.msra.mxu0 0.0
        %1505 = vmatpush.msra.mxu0 0.0
        %1506 = vmatpush.msra.mxu0 0.0
        %1507 = vmatpush.msra.mxu0 %v1490
        %1508 = vmatmul.f32.gmra.mxu0 %v1484
        %v1509 = vpop.f32.mrf.mxu0
        %v1510 = vadd.f32 0.0, %v1509
        %1511 = vmatmul.f32.gmra.mxu0 %v1487
        %v1512 = vpop.f32.mrf.mxu0
        %v1513 = vadd.f32 0.0, %v1512
        %1514 = vdwg.mxu0
        %v1515 = vstv %s1482
        %v1516 = vmul.f32 %v1515, %v1510
        %v1517 = vmul.f32 %v1515, %v1513
        %v1518 = vadd.f32 %v889, %v1516
        %v1519 = vadd.f32 %v890, %v1517
        %vm1520 = vcmask 46089
        %v1521 = vsel %vm1520, %v805, -inf
        %1522 = vmax.xlane.f32.xlu0 %v1521
        %v1523 = vpop.xlane.xlu0 %1522
        %v1524 = vsub.f32 %v805, %v1523
        %v1525 = vmul.f32 %v1524, 1.442695
        %v1526 = vpow.pop %v1525
        %1528 = vrot.lane.b32.xlu0 %v1526, 127
        %v1529 = vpop.permute.xlu0 %1528
        %vm1531 = vcmask 37889
        %v1532 = vsel %vm1531, %v1529, 0.0
        %1533 = vadd.xlane.f32.xlu0 %v1532
        %v1534 = vpop.xlane.xlu0 %1533
        %v1535 = vrcp.pop %v1534
        %v1536 = vmul.f32 %v1526, %v1535
        %v1538 = vrot.slane %v1536, 1
        %1539 = vrot.lane.b32.xlu0 %v1538, 127
        %v1540 = vpop.permute.xlu0 %1539
        %v1541 = vrot.slane %v723, 3
        %1542 = vrot.lane.b32.xlu0 %v1541, 64
        %v1543 = vpop.permute.xlu0 %1542
        %vm1544 = vcmask 39936
        %v1545 = vsel %vm1544, %v1540, 0
        %vm1547 = vcmask 1044480
        %v1548 = vsel %vm1547, %v1543, 0
        %1550 = vmatpush.msra.mxu0 0.0
        %1551 = vmatpush.msra.mxu0 0.0
        %1552 = vmatpush.msra.mxu0 0.0
        %1553 = vmatpush.msra.mxu0 0.0
        %1554 = vmatpush.msra.mxu0 0.0
        %1555 = vmatpush.msra.mxu0 0.0
        %1556 = vmatpush.msra.mxu0 0.0
        %1557 = vmatpush.msra.mxu0 0.0
        %1558 = vmatpush.msra.mxu0 0.0
        %1559 = vmatpush.msra.mxu0 0.0
        %1560 = vmatpush.msra.mxu0 0.0
        %1561 = vmatpush.msra.mxu0 0.0
        %1562 = vmatpush.msra.mxu0 0.0
        %1563 = vmatpush.msra.mxu0 0.0
        %1564 = vmatpush.msra.mxu0 0.0
        %1565 = vmatpush.msra.mxu0 %v1548
        %1566 = vmatmul.f32.gmra.mxu0 %v1545
        %v1567 = vpop.f32.mrf.mxu0
        %v1568 = vadd.f32 0.0, %v1567
        %1569 = vdwg.mxu0
        %v1570 = vmul.f32 %v870, %v1568
        %v1571 = vrot.slane %v946, 1
        %v1573 = vadd.f32 %v1570, %v1571
        %v1574 = vmul.f32 %v952, %v1573
        %v1575 = vadd.f32 %v1574, 0.0
        %vm1576 = vcmask 48139
        %v1577 = vsel %vm1576, %v805, -inf
        %1578 = vmax.xlane.f32.xlu0 %v1577
        %v1579 = vpop.xlane.xlu0 %1578
        %v1580 = vsub.f32 %v805, %v1579
        %v1581 = vmul.f32 %v1580, 1.442695
        %v1582 = vpow.pop %v1581
        %1584 = vrot.lane.b32.xlu0 %v1582, 127
        %v1585 = vpop.permute.xlu0 %1584
        %vm1587 = vcmask 39939
        %v1588 = vsel %vm1587, %v1585, 0.0
        %1589 = vadd.xlane.f32.xlu0 %v1588
        %v1590 = vpop.xlane.xlu0 %1589
        %v1591 = vrcp.pop %v1590
        %v1592 = vmul.f32 %v1582, %v1591
        %v1594 = vrot.slane %v1592, 3
        %1595 = vrot.lane.b32.xlu0 %v1594, 127
        %v1596 = vpop.permute.xlu0 %1595
        %v1597 = vsel %vm1544, %v1596, 0
        %1599 = vmatpush.msra.mxu0 0.0
        %1600 = vmatpush.msra.mxu0 0.0
        %1601 = vmatpush.msra.mxu0 0.0
        %1602 = vmatpush.msra.mxu0 0.0
        %1603 = vmatpush.msra.mxu0 0.0
        %1604 = vmatpush.msra.mxu0 0.0
        %1605 = vmatpush.msra.mxu0 0.0
        %1606 = vmatpush.msra.mxu0 0.0
        %1607 = vmatpush.msra.mxu0 0.0
        %1608 = vmatpush.msra.mxu0 0.0
        %1609 = vmatpush.msra.mxu0 0.0
        %1610 = vmatpush.msra.mxu0 0.0
        %1611 = vmatpush.msra.mxu0 0.0
        %1612 = vmatpush.msra.mxu0 0.0
        %1613 = vmatpush.msra.mxu0 0.0
        %1614 = vmatpush.msra.mxu0 %v1548
        %1615 = vmatmul.f32.gmra.mxu0 %v1597
        %v1616 = vpop.f32.mrf.mxu0
        %v1617 = vadd.f32 0.0, %v1616
        %1618 = vdwg.mxu0
        %v1619 = vmul.f32 %v870, %v1617
        %v1620 = vrot.slane %v1003, 3
        %v1622 = vadd.f32 %v1619, %v1620
        %v1623 = vmul.f32 %v1009, %v1622
        %v1624 = vadd.f32 %v1575, %v1623
        %vm1625 = vcmask 48141
        %v1626 = vsel %vm1625, %v805, -inf
        %1627 = vmax.xlane.f32.xlu0 %v1626
        %v1628 = vpop.xlane.xlu0 %1627
        %vm1629 = vcmask 41992
        %v1630 = vsel %vm1629, %v808, -inf
        %1631 = vmax.xlane.f32.xlu0 %v1630
        %v1632 = vpop.xlane.xlu0 %1631
        %v1633 = vsub.f32 %v805, %v1628
        %v1634 = vsub.f32 %v808, %v1632
        %v1635 = vmul.f32 %v1633, 1.442695
        %v1636 = vpow.pop %v1635
        %v1637 = vmul.f32 %v1634, 1.442695
        %v1638 = vpow.pop %v1637
        %1641 = vrot.lane.b32.xlu0 %v1636, 127
        %v1642 = vpop.permute.xlu0 %1641
        %1643 = vrot.lane.b32.xlu0 %v1638, 127
        %v1644 = vpop.permute.xlu0 %1643
        %vm1647 = vcmask 39941
        %v1648 = vsel %vm1647, %v1642, 0.0
        %1649 = vadd.xlane.f32.xlu0 %v1648
        %v1650 = vpop.xlane.xlu0 %1649
        %vm1651 = vcmask 33792
        %v1652 = vsel %vm1651, %v1644, 0.0
        %1653 = vadd.xlane.f32.xlu0 %v1652
        %v1654 = vpop.xlane.xlu0 %1653
        %v1655 = vrcp.pop %v1650
        %v1656 = vrcp.pop %v1654
        %v1657 = vmul.f32 %v1636, %v1655
        %v1658 = vmul.f32 %v1638, %v1656
        %v1661 = vrot.slane %v1657, 5
        %v1662 = vrot.slane %v1658, 5
        %v1663 = vsel %vm918, %v1661, %v1662
        %1664 = vrot.lane.b32.xlu0 %v1663, 127
        %v1665 = vpop.permute.xlu0 %1664
        %v1666 = vsel %vm1544, %v1665, 0
        %1668 = vmatpush.msra.mxu0 0.0
        %1669 = vmatpush.msra.mxu0 0.0
        %1670 = vmatpush.msra.mxu0 0.0
        %1671 = vmatpush.msra.mxu0 0.0
        %1672 = vmatpush.msra.mxu0 0.0
        %1673 = vmatpush.msra.mxu0 0.0
        %1674 = vmatpush.msra.mxu0 0.0
        %1675 = vmatpush.msra.mxu0 0.0
        %1676 = vmatpush.msra.mxu0 0.0
        %1677 = vmatpush.msra.mxu0 0.0
        %1678 = vmatpush.msra.mxu0 0.0
        %1679 = vmatpush.msra.mxu0 0.0
        %1680 = vmatpush.msra.mxu0 0.0
        %1681 = vmatpush.msra.mxu0 0.0
        %1682 = vmatpush.msra.mxu0 0.0
        %1683 = vmatpush.msra.mxu0 %v1548
        %1684 = vmatmul.f32.gmra.mxu0 %v1666
        %v1685 = vpop.f32.mrf.mxu0
        %v1686 = vadd.f32 0.0, %v1685
        %1687 = vdwg.mxu0
        %v1688 = vmul.f32 %v870, %v1686
        %v1689 = vrot.slane %v1082, 5
        %v1690 = vrot.slane %v1083, 5
        %v1691 = vsel %vm918, %v1689, %v1690
        %v1693 = vadd.f32 %v1688, %v1691
        %v1694 = vmul.f32 %v1092, %v1693
        %v1695 = vadd.f32 %v1624, %v1694
        %vm1696 = vcmask 62489
        %v1697 = vsel %vm1696, %v805, -inf
        %1698 = vmax.xlane.f32.xlu0 %v1697
        %v1699 = vpop.xlane.xlu0 %1698
        %v1700 = vsub.f32 %v805, %v1699
        %v1701 = vmul.f32 %v1700, 1.442695
        %v1702 = vpow.pop %v1701
        %1704 = vrot.lane.b32.xlu0 %v1702, 125
        %v1705 = vpop.permute.xlu0 %1704
        %v1707 = vsel %vm1531, %v1705, 0.0
        %1708 = vadd.xlane.f32.xlu0 %v1707
        %v1709 = vpop.xlane.xlu0 %1708
        %v1710 = vrcp.pop %v1709
        %v1711 = vmul.f32 %v1702, %v1710
        %v1713 = vrot.slane %v1711, 1
        %1714 = vrot.lane.b32.xlu0 %v1713, 125
        %v1715 = vpop.permute.xlu0 %1714
        %v1716 = vrot.slane %v723, 5
        %v1717 = vrot.slane %v726, 5
        %v1718 = vsel %vm918, %v1716, %v1717
        %1719 = vrot.lane.b32.xlu0 %v1718, 64
        %v1720 = vpop.permute.xlu0 %1719
        %v1721 = vsel %vm1544, %v1715, 0
        %v1723 = vsel %vm1547, %v1720, 0
        %1725 = vmatpush.msra.mxu0 0.0
        %1726 = vmatpush.msra.mxu0 0.0
        %1727 = vmatpush.msra.mxu0 0.0
        %1728 = vmatpush.msra.mxu0 0.0
        %1729 = vmatpush.msra.mxu0 0.0
        %1730 = vmatpush.msra.mxu0 0.0
        %1731 = vmatpush.msra.mxu0 0.0
        %1732 = vmatpush.msra.mxu0 0.0
        %1733 = vmatpush.msra.mxu0 0.0
        %1734 = vmatpush.msra.mxu0 0.0
        %1735 = vmatpush.msra.mxu0 0.0
        %1736 = vmatpush.msra.mxu0 0.0
        %1737 = vmatpush.msra.mxu0 0.0
        %1738 = vmatpush.msra.mxu0 0.0
        %1739 = vmatpush.msra.mxu0 0.0
        %1740 = vmatpush.msra.mxu0 %v1723
        %1741 = vmatmul.f32.gmra.mxu0 %v1721
        %v1742 = vpop.f32.mrf.mxu0
        %v1743 = vadd.f32 0.0, %v1742
        %1744 = vdwg.mxu0
        %v1745 = vmul.f32 %v870, %v1743
        %v1746 = vrot.slane %v1153, 1
        %v1748 = vadd.f32 %v1745, %v1746
        %v1749 = vmul.f32 %v1159, %v1748
        %v1750 = vadd.f32 %v1695, %v1749
        %vm1751 = vcmask 64539
        %v1752 = vsel %vm1751, %v805, -inf
        %1753 = vmax.xlane.f32.xlu0 %v1752
        %v1754 = vpop.xlane.xlu0 %1753
        %v1755 = vsub.f32 %v805, %v1754
        %v1756 = vmul.f32 %v1755, 1.442695
        %v1757 = vpow.pop %v1756
        %1759 = vrot.lane.b32.xlu0 %v1757, 125
        %v1760 = vpop.permute.xlu0 %1759
        %v1762 = vsel %vm1587, %v1760, 0.0
        %1763 = vadd.xlane.f32.xlu0 %v1762
        %v1764 = vpop.xlane.xlu0 %1763
        %v1765 = vrcp.pop %v1764
        %v1766 = vmul.f32 %v1757, %v1765
        %v1768 = vrot.slane %v1766, 3
        %1769 = vrot.lane.b32.xlu0 %v1768, 125
        %v1770 = vpop.permute.xlu0 %1769
        %v1771 = vsel %vm1544, %v1770, 0
        %1773 = vmatpush.msra.mxu0 0.0
        %1774 = vmatpush.msra.mxu0 0.0
        %1775 = vmatpush.msra.mxu0 0.0
        %1776 = vmatpush.msra.mxu0 0.0
        %1777 = vmatpush.msra.mxu0 0.0
        %1778 = vmatpush.msra.mxu0 0.0
        %1779 = vmatpush.msra.mxu0 0.0
        %1780 = vmatpush.msra.mxu0 0.0
        %1781 = vmatpush.msra.mxu0 0.0
        %1782 = vmatpush.msra.mxu0 0.0
        %1783 = vmatpush.msra.mxu0 0.0
        %1784 = vmatpush.msra.mxu0 0.0
        %1785 = vmatpush.msra.mxu0 0.0
        %1786 = vmatpush.msra.mxu0 0.0
        %1787 = vmatpush.msra.mxu0 0.0
        %1788 = vmatpush.msra.mxu0 %v1723
        %1789 = vmatmul.f32.gmra.mxu0 %v1771
        %v1790 = vpop.f32.mrf.mxu0
        %v1791 = vadd.f32 0.0, %v1790
        %1792 = vdwg.mxu0
        %v1793 = vmul.f32 %v870, %v1791
        %v1794 = vrot.slane %v887, 3
        %v1796 = vadd.f32 %v1793, %v1794
        %v1797 = vmul.f32 %v1210, %v1796
        %v1798 = vadd.f32 %v1750, %v1797
        %vm1799 = vcmask 64541
        %v1800 = vsel %vm1799, %v805, -inf
        %1801 = vmax.xlane.f32.xlu0 %v1800
        %v1802 = vpop.xlane.xlu0 %1801
        %vm1803 = vcmask 58392
        %v1804 = vsel %vm1803, %v808, -inf
        %1805 = vmax.xlane.f32.xlu0 %v1804
        %v1806 = vpop.xlane.xlu0 %1805
        %v1807 = vsub.f32 %v805, %v1802
        %v1808 = vsub.f32 %v808, %v1806
        %v1809 = vmul.f32 %v1807, 1.442695
        %v1810 = vpow.pop %v1809
        %v1811 = vmul.f32 %v1808, 1.442695
        %v1812 = vpow.pop %v1811
        %1815 = vrot.lane.b32.xlu0 %v1810, 125
        %v1816 = vpop.permute.xlu0 %1815
        %1817 = vrot.lane.b32.xlu0 %v1812, 125
        %v1818 = vpop.permute.xlu0 %1817
        %v1821 = vsel %vm1647, %v1816, 0.0
        %1822 = vadd.xlane.f32.xlu0 %v1821
        %v1823 = vpop.xlane.xlu0 %1822
        %v1824 = vsel %vm1651, %v1818, 0.0
        %1825 = vadd.xlane.f32.xlu0 %v1824
        %v1826 = vpop.xlane.xlu0 %1825
        %v1827 = vrcp.pop %v1823
        %v1828 = vrcp.pop %v1826
        %v1829 = vmul.f32 %v1810, %v1827
        %v1830 = vmul.f32 %v1812, %v1828
        %v1833 = vrot.slane %v1829, 5
        %v1834 = vrot.slane %v1830, 5
        %v1835 = vsel %vm918, %v1833, %v1834
        %1836 = vrot.lane.b32.xlu0 %v1835, 125
        %v1837 = vpop.permute.xlu0 %1836
        %v1838 = vsel %vm1544, %v1837, 0
        %1840 = vmatpush.msra.mxu0 0.0
        %1841 = vmatpush.msra.mxu0 0.0
        %1842 = vmatpush.msra.mxu0 0.0
        %1843 = vmatpush.msra.mxu0 0.0
        %1844 = vmatpush.msra.mxu0 0.0
        %1845 = vmatpush.msra.mxu0 0.0
        %1846 = vmatpush.msra.mxu0 0.0
        %1847 = vmatpush.msra.mxu0 0.0
        %1848 = vmatpush.msra.mxu0 0.0
        %1849 = vmatpush.msra.mxu0 0.0
        %1850 = vmatpush.msra.mxu0 0.0
        %1851 = vmatpush.msra.mxu0 0.0
        %1852 = vmatpush.msra.mxu0 0.0
        %1853 = vmatpush.msra.mxu0 0.0
        %1854 = vmatpush.msra.mxu0 0.0
        %1855 = vmatpush.msra.mxu0 %v1723
        %1856 = vmatmul.f32.gmra.mxu0 %v1838
        %v1857 = vpop.f32.mrf.mxu0
        %v1858 = vadd.f32 0.0, %v1857
        %1859 = vdwg.mxu0
        %v1860 = vmul.f32 %v870, %v1858
        %v1861 = vrot.slane %v1003, 5
        %v1862 = vrot.slane %v1279, 5
        %v1863 = vsel %vm918, %v1861, %v1862
        %v1865 = vadd.f32 %v1860, %v1863
        %v1866 = vmul.f32 %v1287, %v1865
        %v1867 = vadd.f32 %v1798, %v1866
        %vm1868 = vcmask 78889
        %v1869 = vsel %vm1868, %v805, -inf
        %1870 = vmax.xlane.f32.xlu0 %v1869
        %v1871 = vpop.xlane.xlu0 %1870
        %v1872 = vsub.f32 %v805, %v1871
        %v1873 = vmul.f32 %v1872, 1.442695
        %v1874 = vpow.pop %v1873
        %1876 = vrot.lane.b32.xlu0 %v1874, 123
        %v1877 = vpop.permute.xlu0 %1876
        %v1879 = vsel %vm1531, %v1877, 0.0
        %1880 = vadd.xlane.f32.xlu0 %v1879
        %v1881 = vpop.xlane.xlu0 %1880
        %v1882 = vrcp.pop %v1881
        %v1883 = vmul.f32 %v1874, %v1882
        %v1885 = vrot.slane %v1883, 1
        %1886 = vrot.lane.b32.xlu0 %v1885, 123
        %v1887 = vpop.permute.xlu0 %1886
        %vm1888 = vcmask 1040384
        %v1889 = vrot.slane %v723, 7
        %v1890 = vrot.slane %v726, 7
        %v1891 = vsel %vm1888, %v1889, %v1890
        %1892 = vrot.lane.b32.xlu0 %v1891, 64
        %v1893 = vpop.permute.xlu0 %1892
        %v1894 = vsel %vm1544, %v1887, 0
        %v1896 = vsel %vm1547, %v1893, 0
        %1898 = vmatpush.msra.mxu0 0.0
        %1899 = vmatpush.msra.mxu0 0.0
        %1900 = vmatpush.msra.mxu0 0.0
        %1901 = vmatpush.msra.mxu0 0.0
        %1902 = vmatpush.msra.mxu0 0.0
        %1903 = vmatpush.msra.mxu0 0.0
        %1904 = vmatpush.msra.mxu0 0.0
        %1905 = vmatpush.msra.mxu0 0.0
        %1906 = vmatpush.msra.mxu0 0.0
        %1907 = vmatpush.msra.mxu0 0.0
        %1908 = vmatpush.msra.mxu0 0.0
        %1909 = vmatpush.msra.mxu0 0.0
        %1910 = vmatpush.msra.mxu0 0.0
        %1911 = vmatpush.msra.mxu0 0.0
        %1912 = vmatpush.msra.mxu0 0.0
        %1913 = vmatpush.msra.mxu0 %v1896
        %1914 = vmatmul.f32.gmra.mxu0 %v1894
        %v1915 = vpop.f32.mrf.mxu0
        %v1916 = vadd.f32 0.0, %v1915
        %1917 = vdwg.mxu0
        %v1918 = vmul.f32 %v870, %v1916
        %v1919 = vsel %vm683, %v1076, %v1337
        %1920 = vrot.lane.b32.xlu0 %v1919, 32
        %v1921 = vpop.permute.xlu0 %1920
        %v1923 = vmul.f32 %v673, %v1921
        %v1924 = vmul.f32 %v886, %v1923
        %v1926 = vrot.slane %v1924, 1
        %v1928 = vadd.f32 %v1918, %v1926
        %v1929 = vmul.f32 %v1348, %v1928
        %v1930 = vadd.f32 %v1867, %v1929
        %vm1931 = vcmask 80939
        %v1932 = vsel %vm1931, %v805, -inf
        %1933 = vmax.xlane.f32.xlu0 %v1932
        %v1934 = vpop.xlane.xlu0 %1933
        %v1935 = vsub.f32 %v805, %v1934
        %v1936 = vmul.f32 %v1935, 1.442695
        %v1937 = vpow.pop %v1936
        %1939 = vrot.lane.b32.xlu0 %v1937, 123
        %v1940 = vpop.permute.xlu0 %1939
        %v1942 = vsel %vm1587, %v1940, 0.0
        %1943 = vadd.xlane.f32.xlu0 %v1942
        %v1944 = vpop.xlane.xlu0 %1943
        %v1945 = vrcp.pop %v1944
        %v1946 = vmul.f32 %v1937, %v1945
        %v1948 = vrot.slane %v1946, 3
        %1949 = vrot.lane.b32.xlu0 %v1948, 123
        %v1950 = vpop.permute.xlu0 %1949
        %v1951 = vsel %vm1544, %v1950, 0
        %1953 = vmatpush.msra.mxu0 0.0
        %1954 = vmatpush.msra.mxu0 0.0
        %1955 = vmatpush.msra.mxu0 0.0
        %1956 = vmatpush.msra.mxu0 0.0
        %1957 = vmatpush.msra.mxu0 0.0
        %1958 = vmatpush.msra.mxu0 0.0
        %1959 = vmatpush.msra.mxu0 0.0
        %1960 = vmatpush.msra.mxu0 0.0
        %1961 = vmatpush.msra.mxu0 0.0
        %1962 = vmatpush.msra.mxu0 0.0
        %1963 = vmatpush.msra.mxu0 0.0
        %1964 = vmatpush.msra.mxu0 0.0
        %1965 = vmatpush.msra.mxu0 0.0
        %1966 = vmatpush.msra.mxu0 0.0
        %1967 = vmatpush.msra.mxu0 0.0
        %1968 = vmatpush.msra.mxu0 %v1896
        %1969 = vmatmul.f32.gmra.mxu0 %v1951
        %v1970 = vpop.f32.mrf.mxu0
        %v1971 = vadd.f32 0.0, %v1970
        %1972 = vdwg.mxu0
        %v1973 = vmul.f32 %v870, %v1971
        %v1974 = vrot.slane %v1153, 3
        %v1976 = vadd.f32 %v1973, %v1974
        %v1977 = vmul.f32 %v1404, %v1976
        %v1978 = vadd.f32 %v1930, %v1977
        %vm1979 = vcmask 80941
        %v1980 = vsel %vm1979, %v805, -inf
        %1981 = vmax.xlane.f32.xlu0 %v1980
        %v1982 = vpop.xlane.xlu0 %1981
        %vm1983 = vcmask 74792
        %v1984 = vsel %vm1983, %v808, -inf
        %1985 = vmax.xlane.f32.xlu0 %v1984
        %v1986 = vpop.xlane.xlu0 %1985
        %v1987 = vsub.f32 %v805, %v1982
        %v1988 = vsub.f32 %v808, %v1986
        %v1989 = vmul.f32 %v1987, 1.442695
        %v1990 = vpow.pop %v1989
        %v1991 = vmul.f32 %v1988, 1.442695
        %v1992 = vpow.pop %v1991
        %1995 = vrot.lane.b32.xlu0 %v1990, 123
        %v1996 = vpop.permute.xlu0 %1995
        %1997 = vrot.lane.b32.xlu0 %v1992, 123
        %v1998 = vpop.permute.xlu0 %1997
        %v2001 = vsel %vm1647, %v1996, 0.0
        %2002 = vadd.xlane.f32.xlu0 %v2001
        %v2003 = vpop.xlane.xlu0 %2002
        %v2004 = vsel %vm1651, %v1998, 0.0
        %2005 = vadd.xlane.f32.xlu0 %v2004
        %v2006 = vpop.xlane.xlu0 %2005
        %v2007 = vrcp.pop %v2003
        %v2008 = vrcp.pop %v2006
        %v2009 = vmul.f32 %v1990, %v2007
        %v2010 = vmul.f32 %v1992, %v2008
        %v2013 = vrot.slane %v2009, 5
        %v2014 = vrot.slane %v2010, 5
        %v2015 = vsel %vm918, %v2013, %v2014
        %2016 = vrot.lane.b32.xlu0 %v2015, 123
        %v2017 = vpop.permute.xlu0 %2016
        %v2018 = vsel %vm1544, %v2017, 0
        %2020 = vmatpush.msra.mxu0 0.0
        %2021 = vmatpush.msra.mxu0 0.0
        %2022 = vmatpush.msra.mxu0 0.0
        %2023 = vmatpush.msra.mxu0 0.0
        %2024 = vmatpush.msra.mxu0 0.0
        %2025 = vmatpush.msra.mxu0 0.0
        %2026 = vmatpush.msra.mxu0 0.0
        %2027 = vmatpush.msra.mxu0 0.0
        %2028 = vmatpush.msra.mxu0 0.0
        %2029 = vmatpush.msra.mxu0 0.0
        %2030 = vmatpush.msra.mxu0 0.0
        %2031 = vmatpush.msra.mxu0 0.0
        %2032 = vmatpush.msra.mxu0 0.0
        %2033 = vmatpush.msra.mxu0 0.0
        %2034 = vmatpush.msra.mxu0 0.0
        %2035 = vmatpush.msra.mxu0 %v1896
        %2036 = vmatmul.f32.gmra.mxu0 %v2018
        %v2037 = vpop.f32.mrf.mxu0
        %v2038 = vadd.f32 0.0, %v2037
        %2039 = vdwg.mxu0
        %v2040 = vmul.f32 %v870, %v2038
        %v2041 = vrot.slane %v887, 5
        %v2042 = vrot.slane %v888, 5
        %v2043 = vsel %vm918, %v2041, %v2042
        %v2045 = vadd.f32 %v2040, %v2043
        %v2046 = vmul.f32 %v1479, %v2045
        %v2047 = vadd.f32 %v1978, %v2046
        %s2048 = sld [smem:[#allocation6 + $0x1]]
        %v2050 = vsel %vm1544, %v627, 0
        %v2053 = vsel %vm1544, %v628, 0
        %v2056 = vsel %vm1547, %v2047, 0
        %2058 = vmatpush.msra.mxu0 0.0
        %2059 = vmatpush.msra.mxu0 0.0
        %2060 = vmatpush.msra.mxu0 0.0
        %2061 = vmatpush.msra.mxu0 0.0
        %2062 = vmatpush.msra.mxu0 0.0
        %2063 = vmatpush.msra.mxu0 0.0
        %2064 = vmatpush.msra.mxu0 0.0
        %2065 = vmatpush.msra.mxu0 0.0
        %2066 = vmatpush.msra.mxu0 0.0
        %2067 = vmatpush.msra.mxu0 0.0
        %2068 = vmatpush.msra.mxu0 0.0
        %2069 = vmatpush.msra.mxu0 0.0
        %2070 = vmatpush.msra.mxu0 0.0
        %2071 = vmatpush.msra.mxu0 0.0
        %2072 = vmatpush.msra.mxu0 0.0
        %2073 = vmatpush.msra.mxu0 %v2056
        %2074 = vmatmul.f32.gmra.mxu0 %v2050
        %v2075 = vpop.f32.mrf.mxu0
        %v2076 = vadd.f32 0.0, %v2075
        %2077 = vmatmul.f32.gmra.mxu0 %v2053
        %v2078 = vpop.f32.mrf.mxu0
        %v2079 = vadd.f32 0.0, %v2078
        %2080 = vdwg.mxu0
        %v2081 = vstv %s2048
        %v2082 = vmul.f32 %v2081, %v2076
        %v2083 = vmul.f32 %v2081, %v2079
        %v2084 = vadd.f32 %v1518, %v2082
        %v2085 = vadd.f32 %v1519, %v2083
        %s2086 = sld [smem:[#allocation2 + $0x100]]
        %v2087 = vstv %s2086
        %v2088 = vmul.f32 %v2087, %v629
        %v2089 = vmul.f32 %v2087, %v630
        %v2090 = vadd.f32 %v2088, 0.0
        %v2091 = vadd.f32 %v2089, 0.0
        %s2092 = sld [smem:[#allocation2 + $0x180]]
        %v2093 = vstv %s2092
        %v2094 = vmul.f32 %v2093, %v637
        %v2095 = vmul.f32 %v2093, %v638
        %v2096 = vadd.f32 %v2094, 0.0
        %v2097 = vadd.f32 %v2095, 0.0
        %s2098 = sld [smem:[#allocation2 + $0x101]]
        %v2099 = vstv %s2098
        %v2100 = vmul.f32 %v2099, %v632
        %v2101 = vmul.f32 %v2099, %v633
        %v2102 = vadd.f32 %v2090, %v2100
        %v2103 = vadd.f32 %v2091, %v2101
        %s2104 = sld [smem:[#allocation2 + $0x181]]
        %v2105 = vstv %s2104
        %v2106 = vmul.f32 %v2105, %v640
        %v2107 = vmul.f32 %v2105, %v641
        %v2108 = vadd.f32 %v2096, %v2106
        %v2109 = vadd.f32 %v2097, %v2107
        %s2110 = sld [smem:[#allocation2 + $0x102]]
        %v2111 = vstv %s2110
        %v2112 = vmul.f32 %v2111, %v635
        %v2113 = vmul.f32 %v2111, %v636
        %v2114 = vadd.f32 %v2102, %v2112
        %v2115 = vadd.f32 %v2103, %v2113
        %s2116 = sld [smem:[#allocation2 + $0x182]]
        %v2117 = vstv %s2116
        %v2118 = vmul.f32 %v2117, %v643
        %v2119 = vmul.f32 %v2117, %v644
        %v2120 = vadd.f32 %v2108, %v2118
        %v2121 = vadd.f32 %v2109, %v2119
        %s2122 = sld [smem:[#allocation2 + $0x103]]
        %v2123 = vstv %s2122
        %v2124 = vmul.f32 %v2123, %v2084
        %v2125 = vmul.f32 %v2123, %v2085
        %v2126 = vadd.f32 %v2114, %v2124
        %v2127 = vadd.f32 %v2115, %v2125
        %s2128 = sld [smem:[#allocation2 + $0x183]]
        %v2129 = vstv %s2128
        %v2130 = vmul.f32 %v2129, %v2084
        %v2131 = vmul.f32 %v2129, %v2085
        %v2132 = vadd.f32 %v2120, %v2130
        %v2133 = vadd.f32 %v2121, %v2131
        %v2136 = vrot.slane %v2132, 6
        %v2137 = vrot.slane %v2133, 6
        %v2138 = vsel %vm683, %v2136, %v2137
        %v2140 = vsel %vm683, %v2127, %v2136
        %s2141 = scalar_lea.vmem %s6, 32
        %v2142 = vld [vmem:[%s2141] sm:$0xff]
        %v2143 = vld [vmem:[%s2141 + $0x8] sm:$0xff]
        %v2144 = vld [vmem:[%s2141 + $0x10] sm:$0xff]
        %v2145 = vld [vmem:[%s2141 + $0x18] sm:$0xff]
        %v2147 = vsel %vm693, %v2126, 0
        %v2150 = vsel %vm693, %v2140, 0
        %v2152 = vsel %vm693, %v2138, 0
        %2154 = vmatpush.msra.mxu0 0.0
        %2155 = vmatpush.msra.mxu0 0.0
        %2156 = vmatpush.msra.mxu0 0.0
        %2157 = vmatpush.msra.mxu0 0.0
        %2158 = vmatpush.msra.mxu0 0.0
        %2159 = vmatpush.msra.mxu0 0.0
        %2160 = vmatpush.msra.mxu0 0.0
        %2161 = vmatpush.msra.mxu0 0.0
        %2162 = vmatpush.msra.mxu0 0.0
        %2163 = vmatpush.msra.mxu0 0.0
        %2164 = vmatpush.msra.mxu0 0.0
        %2165 = vmatpush.msra.mxu0 0.0
        %2166 = vmatpush.msra.mxu0 %v2145
        %2167 = vmatpush.msra.mxu0 %v2144
        %2168 = vmatpush.msra.mxu0 %v2143
        %2169 = vmatpush.msra.mxu0 %v2142
        %2170 = vmatmul.f32.gmra.mxu0 %v2147
        %v2171 = vpop.f32.mrf.mxu0
        %v2172 = vadd.f32 0.0, %v2171
        %2173 = vmatmul.f32.gmra.mxu0 %v2150
        %v2174 = vpop.f32.mrf.mxu0
        %v2175 = vadd.f32 0.0, %v2174
        %2176 = vmatmul.f32.gmra.mxu0 %v2152
        %v2177 = vpop.f32.mrf.mxu0
        %v2178 = vadd.f32 0.0, %v2177
        %2179 = vdwg.mxu0
        %v2180 = vxor.u32 %v2175, 2147483648
        %v2181 = vxor.u32 %v2178, 2147483648
        %v2182 = vmul.f32 %v2180, 1.442695
        %v2183 = vpow.pop %v2182
        %v2184 = vmul.f32 %v2181, 1.442695
        %v2185 = vpow.pop %v2184
        %v2186 = vadd.f32 %v2183, 1.0
        %v2187 = vadd.f32 %v2185, 1.0
        %v2188 = vrcp.pop %v2186
        %v2189 = vmul.f32 %v2186, %v2188
        %v2190 = vsub.f32 1.0, %v2189
        %v2191 = vmul.f32 %v2188, %v2190
        %v2192 = vadd.f32 %v2188, %v2191
        %vm2193 = vweird.f32 %v2186
        %vm2194 = vweird.f32 %v2188
        %vm2195 = vmor %vm2193, %vm2194
        %v2196 = vsel %vm2195, %v2188, %v2192
        %v2197 = vand.u32 2147483647, %v2186
        %vm2198 = vcmp.eq.f32.partialorder %v2197, 8.507059e+37
        %v2199 = vand.u32 %v2186, 2147483648
        %v2200 = vor.u32 1.1754944e-38, %v2199
        %v2201 = vsel %vm2198, %v2200, %v2196
        %v2202 = vmul.f32 1.0, %v2201
        %v2203 = vrcp.pop %v2187
        %v2204 = vmul.f32 %v2187, %v2203
        %v2205 = vsub.f32 1.0, %v2204
        %v2206 = vmul.f32 %v2203, %v2205
        %v2207 = vadd.f32 %v2203, %v2206
        %vm2208 = vweird.f32 %v2187
        %vm2209 = vweird.f32 %v2203
        %vm2210 = vmor %vm2208, %vm2209
        %v2211 = vsel %vm2210, %v2203, %v2207
        %v2212 = vand.u32 2147483647, %v2187
        %vm2213 = vcmp.eq.f32.partialorder %v2212, 8.507059e+37
        %v2214 = vand.u32 %v2187, 2147483648
        %v2215 = vor.u32 1.1754944e-38, %v2214
        %v2216 = vsel %vm2213, %v2215, %v2211
        %v2217 = vmul.f32 1.0, %v2216
        %s2218 = sld [smem:[#allocation7 + $0x80]]
        %s2219 = sld [smem:[#allocation7 + $0x81]]
        %v2222 = vrot.slane %v2175, 2
        %v2223 = vrot.slane %v2178, 2
        %v2224 = vsel %vm770, %v2222, %v2223
        %2225 = vrot.lane.b32.xlu0 %v2224, 96
        %v2226 = vpop.permute.xlu0 %2225
        %2227 = vrot.lane.b32.xlu0 %v2223, 96
        %v2228 = vpop.permute.xlu0 %2227
        %v2230 = vsel %vm693, %v2172, 0
        %v2232 = vsel %vm693, %v2175, 0
        %v2234 = vsel %vm693, %v2226, 0
        %v2236 = vsel %vm693, %v2228, 0
        %2238 = vmatpush.xpose.msra.mxu0 0.0
        %2239 = vmatpush.xpose.msra.mxu0 0.0
        %2240 = vmatpush.xpose.msra.mxu0 0.0
        %2241 = vmatpush.xpose.msra.mxu0 0.0
        %2242 = vmatpush.xpose.msra.mxu0 0.0
        %2243 = vmatpush.xpose.msra.mxu0 0.0
        %2244 = vmatpush.xpose.msra.mxu0 0.0
        %2245 = vmatpush.xpose.msra.mxu0 0.0
        %2246 = vmatpush.xpose.msra.mxu0 0.0
        %2247 = vmatpush.xpose.msra.mxu0 0.0
        %2248 = vmatpush.xpose.msra.mxu0 0.0
        %2249 = vmatpush.xpose.msra.mxu0 0.0
        %2250 = vmatpush.xpose.msra.mxu0 0.0
        %2251 = vmatpush.xpose.msra.mxu0 0.0
        %2252 = vmatpush.xpose.msra.mxu0 %v2236
        %2253 = vmatpush.xpose.msra.mxu0 %v2234
        %2254 = vmatmul.f32.gmra.mxu0 %v2230
        %v2255 = vpop.f32.mrf.mxu0
        %v2256 = vadd.f32 0.0, %v2255
        %2257 = vmatmul.f32.gmra.mxu0 %v2232
        %v2258 = vpop.f32.mrf.mxu0
        %v2259 = vadd.f32 0.0, %v2258
        %2260 = vdwg.mxu0
        %v2261 = vsel %vm810, %v2256, -inf
        %2262 = vmax.xlane.f32.xlu0 %v2261
        %v2263 = vpop.xlane.xlu0 %2262
        %v2264 = vsel %vm814, %v2259, -inf
        %2265 = vmax.xlane.f32.xlu0 %v2264
        %v2266 = vpop.xlane.xlu0 %2265
        %v2267 = vsub.f32 %v2256, %v2263
        %v2268 = vsub.f32 %v2259, %v2266
        %v2269 = vmul.f32 %v2267, 1.442695
        %v2270 = vpow.pop %v2269
        %v2271 = vmul.f32 %v2268, 1.442695
        %v2272 = vpow.pop %v2271
        %v2273 = vsel %vm810, %v2270, 0.0
        %2274 = vadd.xlane.f32.xlu0 %v2273
        %v2275 = vpop.xlane.xlu0 %2274
        %v2276 = vsel %vm814, %v2272, 0.0
        %2277 = vadd.xlane.f32.xlu0 %v2276
        %v2278 = vpop.xlane.xlu0 %2277
        %v2279 = vrcp.pop %v2275
        %v2280 = vrcp.pop %v2278
        %v2281 = vmul.f32 %v2270, %v2279
        %v2282 = vmul.f32 %v2272, %v2280
        %2283 = vrot.lane.b32.xlu0 %v2224, 64
        %v2284 = vpop.permute.xlu0 %2283
        %2285 = vrot.lane.b32.xlu0 %v2223, 64
        %v2286 = vpop.permute.xlu0 %2285
        %v2289 = vsel %vm810, %v2281, 0
        %v2292 = vsel %vm810, %v2282, 0
        %v2294 = vsel %vm683, %v2286, 0
        %2296 = vmatpush.msra.mxu0 0.0
        %2297 = vmatpush.msra.mxu0 0.0
        %2298 = vmatpush.msra.mxu0 0.0
        %2299 = vmatpush.msra.mxu0 0.0
        %2300 = vmatpush.msra.mxu0 0.0
        %2301 = vmatpush.msra.mxu0 0.0
        %2302 = vmatpush.msra.mxu0 0.0
        %2303 = vmatpush.msra.mxu0 0.0
        %2304 = vmatpush.msra.mxu0 0.0
        %2305 = vmatpush.msra.mxu0 0.0
        %2306 = vmatpush.msra.mxu0 0.0
        %2307 = vmatpush.msra.mxu0 0.0
        %2308 = vmatpush.msra.mxu0 0.0
        %2309 = vmatpush.msra.mxu0 0.0
        %2310 = vmatpush.msra.mxu0 %v2294
        %2311 = vmatpush.msra.mxu0 %v2284
        %2312 = vmatmul.f32.gmra.mxu0 %v2289
        %v2313 = vpop.f32.mrf.mxu0
        %v2314 = vadd.f32 0.0, %v2313
        %2315 = vmatmul.f32.gmra.mxu0 %v2292
        %v2316 = vpop.f32.mrf.mxu0
        %v2317 = vadd.f32 0.0, %v2316
        %2318 = vdwg.mxu0
        %v2319 = vstv %s2218
        %v2320 = vmul.f32 %v2319, %v2314
        %v2321 = vmul.f32 %v2319, %v2317
        %v2324 = vrot.slane %v2202, 2
        %v2325 = vrot.slane %v2217, 2
        %v2326 = vsel %vm770, %v2324, %v2325
        %2327 = vrot.lane.b32.xlu0 %v2326, 32
        %v2328 = vpop.permute.xlu0 %2327
        %2329 = vrot.lane.b32.xlu0 %v2325, 32
        %v2330 = vpop.permute.xlu0 %2329
        %v2333 = vmul.f32 %v2126, %v2328
        %v2334 = vmul.f32 %v2127, %v2330
        %v2335 = vstv %s2219
        %v2336 = vmul.f32 %v2335, %v2333
        %v2337 = vmul.f32 %v2335, %v2334
        %v2338 = vadd.f32 %v2320, %v2336
        %v2339 = vadd.f32 %v2321, %v2337
        %v2340 = vsel %vm891, %v2256, -inf
        %2341 = vmax.xlane.f32.xlu0 %v2340
        %v2342 = vpop.xlane.xlu0 %2341
        %v2343 = vsub.f32 %v2256, %v2342
        %v2344 = vmul.f32 %v2343, 1.442695
        %v2345 = vpow.pop %v2344
        %2347 = vrot.lane.b32.xlu0 %v2345, 126
        %v2348 = vpop.permute.xlu0 %2347
        %v2350 = vsel %vm902, %v2348, 0.0
        %2351 = vadd.xlane.f32.xlu0 %v2350
        %v2352 = vpop.xlane.xlu0 %2351
        %v2353 = vrcp.pop %v2352
        %v2354 = vmul.f32 %v2345, %v2353
        %v2356 = vrot.slane %v2354, 2
        %2357 = vrot.lane.b32.xlu0 %v2356, 126
        %v2358 = vpop.permute.xlu0 %2357
        %v2359 = vrot.slane %v2175, 4
        %2360 = vrot.lane.b32.xlu0 %v2359, 64
        %v2361 = vpop.permute.xlu0 %2360
        %v2362 = vsel %vm915, %v2358, 0
        %v2364 = vsel %vm918, %v2361, 0
        %2366 = vmatpush.msra.mxu0 0.0
        %2367 = vmatpush.msra.mxu0 0.0
        %2368 = vmatpush.msra.mxu0 0.0
        %2369 = vmatpush.msra.mxu0 0.0
        %2370 = vmatpush.msra.mxu0 0.0
        %2371 = vmatpush.msra.mxu0 0.0
        %2372 = vmatpush.msra.mxu0 0.0
        %2373 = vmatpush.msra.mxu0 0.0
        %2374 = vmatpush.msra.mxu0 0.0
        %2375 = vmatpush.msra.mxu0 0.0
        %2376 = vmatpush.msra.mxu0 0.0
        %2377 = vmatpush.msra.mxu0 0.0
        %2378 = vmatpush.msra.mxu0 0.0
        %2379 = vmatpush.msra.mxu0 0.0
        %2380 = vmatpush.msra.mxu0 0.0
        %2381 = vmatpush.msra.mxu0 %v2364
        %2382 = vmatmul.f32.gmra.mxu0 %v2362
        %v2383 = vpop.f32.mrf.mxu0
        %v2384 = vadd.f32 0.0, %v2383
        %2385 = vdwg.mxu0
        %v2386 = vmul.f32 %v2319, %v2384
        %2387 = vrot.lane.b32.xlu0 %v2324, 32
        %v2388 = vpop.permute.xlu0 %2387
        %v2390 = vmul.f32 %v2126, %v2388
        %v2391 = vmul.f32 %v2335, %v2390
        %v2393 = vrot.slane %v2391, 2
        %v2395 = vadd.f32 %v2386, %v2393
        %s2396 = sld [smem:[#allocation4 + $0x80]]
        %v2397 = vstv %s2396
        %v2398 = vmul.f32 %v2397, %v2395
        %v2399 = vadd.f32 %v2398, 0.0
        %v2400 = vsel %vm955, %v2256, -inf
        %2401 = vmax.xlane.f32.xlu0 %v2400
        %v2402 = vpop.xlane.xlu0 %2401
        %v2403 = vsub.f32 %v2256, %v2402
        %v2404 = vmul.f32 %v2403, 1.442695
        %v2405 = vpow.pop %v2404
        %2407 = vrot.lane.b32.xlu0 %v2405, 126
        %v2408 = vpop.permute.xlu0 %2407
        %v2410 = vsel %vm966, %v2408, 0.0
        %2411 = vadd.xlane.f32.xlu0 %v2410
        %v2412 = vpop.xlane.xlu0 %2411
        %v2413 = vrcp.pop %v2412
        %v2414 = vmul.f32 %v2405, %v2413
        %v2416 = vrot.slane %v2414, 4
        %2417 = vrot.lane.b32.xlu0 %v2416, 126
        %v2418 = vpop.permute.xlu0 %2417
        %v2419 = vsel %vm915, %v2418, 0
        %2421 = vmatpush.msra.mxu0 0.0
        %2422 = vmatpush.msra.mxu0 0.0
        %2423 = vmatpush.msra.mxu0 0.0
        %2424 = vmatpush.msra.mxu0 0.0
        %2425 = vmatpush.msra.mxu0 0.0
        %2426 = vmatpush.msra.mxu0 0.0
        %2427 = vmatpush.msra.mxu0 0.0
        %2428 = vmatpush.msra.mxu0 0.0
        %2429 = vmatpush.msra.mxu0 0.0
        %2430 = vmatpush.msra.mxu0 0.0
        %2431 = vmatpush.msra.mxu0 0.0
        %2432 = vmatpush.msra.mxu0 0.0
        %2433 = vmatpush.msra.mxu0 0.0
        %2434 = vmatpush.msra.mxu0 0.0
        %2435 = vmatpush.msra.mxu0 0.0
        %2436 = vmatpush.msra.mxu0 %v2364
        %2437 = vmatmul.f32.gmra.mxu0 %v2419
        %v2438 = vpop.f32.mrf.mxu0
        %v2439 = vadd.f32 0.0, %v2438
        %2440 = vdwg.mxu0
        %v2441 = vmul.f32 %v2319, %v2439
        %2442 = vrot.lane.b32.xlu0 %v2202, 32
        %v2443 = vpop.permute.xlu0 %2442
        %v2445 = vmul.f32 %v2126, %v2443
        %v2446 = vmul.f32 %v2335, %v2445
        %v2448 = vrot.slane %v2446, 4
        %v2450 = vadd.f32 %v2441, %v2448
        %s2451 = sld [smem:[#allocation4 + $0x81]]
        %v2452 = vstv %s2451
        %v2453 = vmul.f32 %v2452, %v2450
        %v2454 = vadd.f32 %v2399, %v2453
        %v2455 = vsel %vm1012, %v2256, -inf
        %2456 = vmax.xlane.f32.xlu0 %v2455
        %v2457 = vpop.xlane.xlu0 %2456
        %v2458 = vsel %vm1016, %v2259, -inf
        %2459 = vmax.xlane.f32.xlu0 %v2458
        %v2460 = vpop.xlane.xlu0 %2459
        %v2461 = vsub.f32 %v2256, %v2457
        %v2462 = vsub.f32 %v2259, %v2460
        %v2463 = vmul.f32 %v2461, 1.442695
        %v2464 = vpow.pop %v2463
        %v2465 = vmul.f32 %v2462, 1.442695
        %v2466 = vpow.pop %v2465
        %2469 = vrot.lane.b32.xlu0 %v2464, 126
        %v2470 = vpop.permute.xlu0 %2469
        %2471 = vrot.lane.b32.xlu0 %v2466, 126
        %v2472 = vpop.permute.xlu0 %2471
        %v2475 = vsel %vm1034, %v2470, 0.0
        %2476 = vadd.xlane.f32.xlu0 %v2475
        %v2477 = vpop.xlane.xlu0 %2476
        %v2478 = vsel %vm1038, %v2472, 0.0
        %2479 = vadd.xlane.f32.xlu0 %v2478
        %v2480 = vpop.xlane.xlu0 %2479
        %v2481 = vrcp.pop %v2477
        %v2482 = vrcp.pop %v2480
        %v2483 = vmul.f32 %v2464, %v2481
        %v2484 = vmul.f32 %v2466, %v2482
        %v2487 = vrot.slane %v2483, 6
        %v2488 = vrot.slane %v2484, 6
        %v2489 = vsel %vm683, %v2487, %v2488
        %2490 = vrot.lane.b32.xlu0 %v2489, 126
        %v2491 = vpop.permute.xlu0 %2490
        %v2492 = vsel %vm915, %v2491, 0
        %2494 = vmatpush.msra.mxu0 0.0
        %2495 = vmatpush.msra.mxu0 0.0
        %2496 = vmatpush.msra.mxu0 0.0
        %2497 = vmatpush.msra.mxu0 0.0
        %2498 = vmatpush.msra.mxu0 0.0
        %2499 = vmatpush.msra.mxu0 0.0
        %2500 = vmatpush.msra.mxu0 0.0
        %2501 = vmatpush.msra.mxu0 0.0
        %2502 = vmatpush.msra.mxu0 0.0
        %2503 = vmatpush.msra.mxu0 0.0
        %2504 = vmatpush.msra.mxu0 0.0
        %2505 = vmatpush.msra.mxu0 0.0
        %2506 = vmatpush.msra.mxu0 0.0
        %2507 = vmatpush.msra.mxu0 0.0
        %2508 = vmatpush.msra.mxu0 0.0
        %2509 = vmatpush.msra.mxu0 %v2364
        %2510 = vmatmul.f32.gmra.mxu0 %v2492
        %v2511 = vpop.f32.mrf.mxu0
        %v2512 = vadd.f32 0.0, %v2511
        %2513 = vdwg.mxu0
        %v2514 = vmul.f32 %v2319, %v2512
        %v2515 = vrot.slane %v2202, 6
        %2516 = vrot.lane.b32.xlu0 %v2515, 32
        %v2517 = vpop.permute.xlu0 %2516
        %v2519 = vmul.f32 %v2126, %v2517
        %v2520 = vmul.f32 %v2127, %v2517
        %v2521 = vmul.f32 %v2335, %v2519
        %v2522 = vmul.f32 %v2335, %v2520
        %v2525 = vrot.slane %v2521, 6
        %v2526 = vrot.slane %v2522, 6
        %v2527 = vsel %vm683, %v2525, %v2526
        %v2529 = vadd.f32 %v2514, %v2527
        %s2530 = sld [smem:[#allocation4 + $0x82]]
        %v2531 = vstv %s2530
        %v2532 = vmul.f32 %v2531, %v2529
        %v2533 = vadd.f32 %v2454, %v2532
        %v2534 = vsel %vm1095, %v2256, -inf
        %2535 = vmax.xlane.f32.xlu0 %v2534
        %v2536 = vpop.xlane.xlu0 %2535
        %v2537 = vsub.f32 %v2256, %v2536
        %v2538 = vmul.f32 %v2537, 1.442695
        %v2539 = vpow.pop %v2538
        %2541 = vrot.lane.b32.xlu0 %v2539, 124
        %v2542 = vpop.permute.xlu0 %2541
        %v2544 = vsel %vm902, %v2542, 0.0
        %2545 = vadd.xlane.f32.xlu0 %v2544
        %v2546 = vpop.xlane.xlu0 %2545
        %v2547 = vrcp.pop %v2546
        %v2548 = vmul.f32 %v2539, %v2547
        %v2550 = vrot.slane %v2548, 2
        %2551 = vrot.lane.b32.xlu0 %v2550, 124
        %v2552 = vpop.permute.xlu0 %2551
        %v2553 = vrot.slane %v2175, 6
        %v2554 = vrot.slane %v2178, 6
        %v2555 = vsel %vm683, %v2553, %v2554
        %2556 = vrot.lane.b32.xlu0 %v2555, 64
        %v2557 = vpop.permute.xlu0 %2556
        %v2558 = vsel %vm915, %v2552, 0
        %v2560 = vsel %vm918, %v2557, 0
        %2562 = vmatpush.msra.mxu0 0.0
        %2563 = vmatpush.msra.mxu0 0.0
        %2564 = vmatpush.msra.mxu0 0.0
        %2565 = vmatpush.msra.mxu0 0.0
        %2566 = vmatpush.msra.mxu0 0.0
        %2567 = vmatpush.msra.mxu0 0.0
        %2568 = vmatpush.msra.mxu0 0.0
        %2569 = vmatpush.msra.mxu0 0.0
        %2570 = vmatpush.msra.mxu0 0.0
        %2571 = vmatpush.msra.mxu0 0.0
        %2572 = vmatpush.msra.mxu0 0.0
        %2573 = vmatpush.msra.mxu0 0.0
        %2574 = vmatpush.msra.mxu0 0.0
        %2575 = vmatpush.msra.mxu0 0.0
        %2576 = vmatpush.msra.mxu0 0.0
        %2577 = vmatpush.msra.mxu0 %v2560
        %2578 = vmatmul.f32.gmra.mxu0 %v2558
        %v2579 = vpop.f32.mrf.mxu0
        %v2580 = vadd.f32 0.0, %v2579
        %2581 = vdwg.mxu0
        %v2582 = vmul.f32 %v2319, %v2580
        %v2583 = vrot.slane %v2202, 4
        %v2584 = vrot.slane %v2217, 4
        %v2585 = vsel %vm1145, %v2583, %v2584
        %2586 = vrot.lane.b32.xlu0 %v2585, 32
        %v2587 = vpop.permute.xlu0 %2586
        %v2589 = vmul.f32 %v2126, %v2587
        %v2590 = vmul.f32 %v2335, %v2589
        %v2592 = vrot.slane %v2590, 2
        %v2594 = vadd.f32 %v2582, %v2592
        %s2595 = sld [smem:[#allocation4 + $0x83]]
        %v2596 = vstv %s2595
        %v2597 = vmul.f32 %v2596, %v2594
        %v2598 = vadd.f32 %v2533, %v2597
        %v2599 = vsel %vm1162, %v2256, -inf
        %2600 = vmax.xlane.f32.xlu0 %v2599
        %v2601 = vpop.xlane.xlu0 %2600
        %v2602 = vsub.f32 %v2256, %v2601
        %v2603 = vmul.f32 %v2602, 1.442695
        %v2604 = vpow.pop %v2603
        %2606 = vrot.lane.b32.xlu0 %v2604, 124
        %v2607 = vpop.permute.xlu0 %2606
        %v2609 = vsel %vm966, %v2607, 0.0
        %2610 = vadd.xlane.f32.xlu0 %v2609
        %v2611 = vpop.xlane.xlu0 %2610
        %v2612 = vrcp.pop %v2611
        %v2613 = vmul.f32 %v2604, %v2612
        %v2615 = vrot.slane %v2613, 4
        %2616 = vrot.lane.b32.xlu0 %v2615, 124
        %v2617 = vpop.permute.xlu0 %2616
        %v2618 = vsel %vm915, %v2617, 0
        %2620 = vmatpush.msra.mxu0 0.0
        %2621 = vmatpush.msra.mxu0 0.0
        %2622 = vmatpush.msra.mxu0 0.0
        %2623 = vmatpush.msra.mxu0 0.0
        %2624 = vmatpush.msra.mxu0 0.0
        %2625 = vmatpush.msra.mxu0 0.0
        %2626 = vmatpush.msra.mxu0 0.0
        %2627 = vmatpush.msra.mxu0 0.0
        %2628 = vmatpush.msra.mxu0 0.0
        %2629 = vmatpush.msra.mxu0 0.0
        %2630 = vmatpush.msra.mxu0 0.0
        %2631 = vmatpush.msra.mxu0 0.0
        %2632 = vmatpush.msra.mxu0 0.0
        %2633 = vmatpush.msra.mxu0 0.0
        %2634 = vmatpush.msra.mxu0 0.0
        %2635 = vmatpush.msra.mxu0 %v2560
        %2636 = vmatmul.f32.gmra.mxu0 %v2618
        %v2637 = vpop.f32.mrf.mxu0
        %v2638 = vadd.f32 0.0, %v2637
        %2639 = vdwg.mxu0
        %v2640 = vmul.f32 %v2319, %v2638
        %v2642 = vrot.slane %v2336, 4
        %v2644 = vadd.f32 %v2640, %v2642
        %s2645 = sld [smem:[#allocation4 + $0x84]]
        %v2646 = vstv %s2645
        %v2647 = vmul.f32 %v2646, %v2644
        %v2648 = vadd.f32 %v2598, %v2647
        %v2649 = vsel %vm1213, %v2256, -inf
        %2650 = vmax.xlane.f32.xlu0 %v2649
        %v2651 = vpop.xlane.xlu0 %2650
        %v2652 = vsel %vm1217, %v2259, -inf
        %2653 = vmax.xlane.f32.xlu0 %v2652
        %v2654 = vpop.xlane.xlu0 %2653
        %v2655 = vsub.f32 %v2256, %v2651
        %v2656 = vsub.f32 %v2259, %v2654
        %v2657 = vmul.f32 %v2655, 1.442695
        %v2658 = vpow.pop %v2657
        %v2659 = vmul.f32 %v2656, 1.442695
        %v2660 = vpow.pop %v2659
        %2663 = vrot.lane.b32.xlu0 %v2658, 124
        %v2664 = vpop.permute.xlu0 %2663
        %2665 = vrot.lane.b32.xlu0 %v2660, 124
        %v2666 = vpop.permute.xlu0 %2665
        %v2669 = vsel %vm1034, %v2664, 0.0
        %2670 = vadd.xlane.f32.xlu0 %v2669
        %v2671 = vpop.xlane.xlu0 %2670
        %v2672 = vsel %vm1038, %v2666, 0.0
        %2673 = vadd.xlane.f32.xlu0 %v2672
        %v2674 = vpop.xlane.xlu0 %2673
        %v2675 = vrcp.pop %v2671
        %v2676 = vrcp.pop %v2674
        %v2677 = vmul.f32 %v2658, %v2675
        %v2678 = vmul.f32 %v2660, %v2676
        %v2681 = vrot.slane %v2677, 6
        %v2682 = vrot.slane %v2678, 6
        %v2683 = vsel %vm683, %v2681, %v2682
        %2684 = vrot.lane.b32.xlu0 %v2683, 124
        %v2685 = vpop.permute.xlu0 %2684
        %v2686 = vsel %vm915, %v2685, 0
        %2688 = vmatpush.msra.mxu0 0.0
        %2689 = vmatpush.msra.mxu0 0.0
        %2690 = vmatpush.msra.mxu0 0.0
        %2691 = vmatpush.msra.mxu0 0.0
        %2692 = vmatpush.msra.mxu0 0.0
        %2693 = vmatpush.msra.mxu0 0.0
        %2694 = vmatpush.msra.mxu0 0.0
        %2695 = vmatpush.msra.mxu0 0.0
        %2696 = vmatpush.msra.mxu0 0.0
        %2697 = vmatpush.msra.mxu0 0.0
        %2698 = vmatpush.msra.mxu0 0.0
        %2699 = vmatpush.msra.mxu0 0.0
        %2700 = vmatpush.msra.mxu0 0.0
        %2701 = vmatpush.msra.mxu0 0.0
        %2702 = vmatpush.msra.mxu0 0.0
        %2703 = vmatpush.msra.mxu0 %v2560
        %2704 = vmatmul.f32.gmra.mxu0 %v2686
        %v2705 = vpop.f32.mrf.mxu0
        %v2706 = vadd.f32 0.0, %v2705
        %2707 = vdwg.mxu0
        %v2708 = vmul.f32 %v2319, %v2706
        %2709 = vrot.lane.b32.xlu0 %v2217, 32
        %v2710 = vpop.permute.xlu0 %2709
        %v2712 = vmul.f32 %v2127, %v2710
        %v2713 = vmul.f32 %v2335, %v2712
        %v2715 = vrot.slane %v2446, 6
        %v2716 = vrot.slane %v2713, 6
        %v2717 = vsel %vm683, %v2715, %v2716
        %v2719 = vadd.f32 %v2708, %v2717
        %s2720 = sld [smem:[#allocation4 + $0x85]]
        %v2721 = vstv %s2720
        %v2722 = vmul.f32 %v2721, %v2719
        %v2723 = vadd.f32 %v2648, %v2722
        %v2724 = vsel %vm1290, %v2256, -inf
        %2725 = vmax.xlane.f32.xlu0 %v2724
        %v2726 = vpop.xlane.xlu0 %2725
        %v2727 = vsub.f32 %v2256, %v2726
        %v2728 = vmul.f32 %v2727, 1.442695
        %v2729 = vpow.pop %v2728
        %2731 = vrot.lane.b32.xlu0 %v2729, 122
        %v2732 = vpop.permute.xlu0 %2731
        %v2734 = vsel %vm902, %v2732, 0.0
        %2735 = vadd.xlane.f32.xlu0 %v2734
        %v2736 = vpop.xlane.xlu0 %2735
        %v2737 = vrcp.pop %v2736
        %v2738 = vmul.f32 %v2729, %v2737
        %v2740 = vrot.slane %v2738, 2
        %2741 = vrot.lane.b32.xlu0 %v2740, 122
        %v2742 = vpop.permute.xlu0 %2741
        %2743 = vrot.lane.b32.xlu0 %v2178, 64
        %v2744 = vpop.permute.xlu0 %2743
        %v2745 = vsel %vm915, %v2742, 0
        %v2747 = vsel %vm918, %v2744, 0
        %2749 = vmatpush.msra.mxu0 0.0
        %2750 = vmatpush.msra.mxu0 0.0
        %2751 = vmatpush.msra.mxu0 0.0
        %2752 = vmatpush.msra.mxu0 0.0
        %2753 = vmatpush.msra.mxu0 0.0
        %2754 = vmatpush.msra.mxu0 0.0
        %2755 = vmatpush.msra.mxu0 0.0
        %2756 = vmatpush.msra.mxu0 0.0
        %2757 = vmatpush.msra.mxu0 0.0
        %2758 = vmatpush.msra.mxu0 0.0
        %2759 = vmatpush.msra.mxu0 0.0
        %2760 = vmatpush.msra.mxu0 0.0
        %2761 = vmatpush.msra.mxu0 0.0
        %2762 = vmatpush.msra.mxu0 0.0
        %2763 = vmatpush.msra.mxu0 0.0
        %2764 = vmatpush.msra.mxu0 %v2747
        %2765 = vmatmul.f32.gmra.mxu0 %v2745
        %v2766 = vpop.f32.mrf.mxu0
        %v2767 = vadd.f32 0.0, %v2766
        %2768 = vdwg.mxu0
        %v2769 = vmul.f32 %v2319, %v2767
        %v2770 = vrot.slane %v2217, 6
        %2771 = vrot.lane.b32.xlu0 %v2770, 32
        %v2772 = vpop.permute.xlu0 %2771
        %v2774 = vmul.f32 %v2126, %v2772
        %v2775 = vmul.f32 %v2335, %v2774
        %v2777 = vrot.slane %v2775, 2
        %v2779 = vadd.f32 %v2769, %v2777
        %s2780 = sld [smem:[#allocation4 + $0x86]]
        %v2781 = vstv %s2780
        %v2782 = vmul.f32 %v2781, %v2779
        %v2783 = vadd.f32 %v2723, %v2782
        %v2784 = vsel %vm1351, %v2256, -inf
        %2785 = vmax.xlane.f32.xlu0 %v2784
        %v2786 = vpop.xlane.xlu0 %2785
        %v2787 = vsub.f32 %v2256, %v2786
        %v2788 = vmul.f32 %v2787, 1.442695
        %v2789 = vpow.pop %v2788
        %2791 = vrot.lane.b32.xlu0 %v2789, 122
        %v2792 = vpop.permute.xlu0 %2791
        %v2794 = vsel %vm966, %v2792, 0.0
        %2795 = vadd.xlane.f32.xlu0 %v2794
        %v2796 = vpop.xlane.xlu0 %2795
        %v2797 = vrcp.pop %v2796
        %v2798 = vmul.f32 %v2789, %v2797
        %v2800 = vrot.slane %v2798, 4
        %2801 = vrot.lane.b32.xlu0 %v2800, 122
        %v2802 = vpop.permute.xlu0 %2801
        %v2803 = vsel %vm915, %v2802, 0
        %2805 = vmatpush.msra.mxu0 0.0
        %2806 = vmatpush.msra.mxu0 0.0
        %2807 = vmatpush.msra.mxu0 0.0
        %2808 = vmatpush.msra.mxu0 0.0
        %2809 = vmatpush.msra.mxu0 0.0
        %2810 = vmatpush.msra.mxu0 0.0
        %2811 = vmatpush.msra.mxu0 0.0
        %2812 = vmatpush.msra.mxu0 0.0
        %2813 = vmatpush.msra.mxu0 0.0
        %2814 = vmatpush.msra.mxu0 0.0
        %2815 = vmatpush.msra.mxu0 0.0
        %2816 = vmatpush.msra.mxu0 0.0
        %2817 = vmatpush.msra.mxu0 0.0
        %2818 = vmatpush.msra.mxu0 0.0
        %2819 = vmatpush.msra.mxu0 0.0
        %2820 = vmatpush.msra.mxu0 %v2747
        %2821 = vmatmul.f32.gmra.mxu0 %v2803
        %v2822 = vpop.f32.mrf.mxu0
        %v2823 = vadd.f32 0.0, %v2822
        %2824 = vdwg.mxu0
        %v2825 = vmul.f32 %v2319, %v2823
        %2826 = vrot.lane.b32.xlu0 %v2584, 32
        %v2827 = vpop.permute.xlu0 %2826
        %v2829 = vmul.f32 %v2126, %v2827
        %v2830 = vmul.f32 %v2335, %v2829
        %v2832 = vrot.slane %v2830, 4
        %v2834 = vadd.f32 %v2825, %v2832
        %s2835 = sld [smem:[#allocation4 + $0x87]]
        %v2836 = vstv %s2835
        %v2837 = vmul.f32 %v2836, %v2834
        %v2838 = vadd.f32 %v2783, %v2837
        %v2839 = vsel %vm1407, %v2256, -inf
        %2840 = vmax.xlane.f32.xlu0 %v2839
        %v2841 = vpop.xlane.xlu0 %2840
        %v2842 = vsel %vm1411, %v2259, -inf
        %2843 = vmax.xlane.f32.xlu0 %v2842
        %v2844 = vpop.xlane.xlu0 %2843
        %v2845 = vsub.f32 %v2256, %v2841
        %v2846 = vsub.f32 %v2259, %v2844
        %v2847 = vmul.f32 %v2845, 1.442695
        %v2848 = vpow.pop %v2847
        %v2849 = vmul.f32 %v2846, 1.442695
        %v2850 = vpow.pop %v2849
        %2853 = vrot.lane.b32.xlu0 %v2848, 122
        %v2854 = vpop.permute.xlu0 %2853
        %2855 = vrot.lane.b32.xlu0 %v2850, 122
        %v2856 = vpop.permute.xlu0 %2855
        %v2859 = vsel %vm1034, %v2854, 0.0
        %2860 = vadd.xlane.f32.xlu0 %v2859
        %v2861 = vpop.xlane.xlu0 %2860
        %v2862 = vsel %vm1038, %v2856, 0.0
        %2863 = vadd.xlane.f32.xlu0 %v2862
        %v2864 = vpop.xlane.xlu0 %2863
        %v2865 = vrcp.pop %v2861
        %v2866 = vrcp.pop %v2864
        %v2867 = vmul.f32 %v2848, %v2865
        %v2868 = vmul.f32 %v2850, %v2866
        %v2871 = vrot.slane %v2867, 6
        %v2872 = vrot.slane %v2868, 6
        %v2873 = vsel %vm683, %v2871, %v2872
        %2874 = vrot.lane.b32.xlu0 %v2873, 122
        %v2875 = vpop.permute.xlu0 %2874
        %v2876 = vsel %vm915, %v2875, 0
        %2878 = vmatpush.msra.mxu0 0.0
        %2879 = vmatpush.msra.mxu0 0.0
        %2880 = vmatpush.msra.mxu0 0.0
        %2881 = vmatpush.msra.mxu0 0.0
        %2882 = vmatpush.msra.mxu0 0.0
        %2883 = vmatpush.msra.mxu0 0.0
        %2884 = vmatpush.msra.mxu0 0.0
        %2885 = vmatpush.msra.mxu0 0.0
        %2886 = vmatpush.msra.mxu0 0.0
        %2887 = vmatpush.msra.mxu0 0.0
        %2888 = vmatpush.msra.mxu0 0.0
        %2889 = vmatpush.msra.mxu0 0.0
        %2890 = vmatpush.msra.mxu0 0.0
        %2891 = vmatpush.msra.mxu0 0.0
        %2892 = vmatpush.msra.mxu0 0.0
        %2893 = vmatpush.msra.mxu0 %v2747
        %2894 = vmatmul.f32.gmra.mxu0 %v2876
        %v2895 = vpop.f32.mrf.mxu0
        %v2896 = vadd.f32 0.0, %v2895
        %2897 = vdwg.mxu0
        %v2898 = vmul.f32 %v2319, %v2896
        %v2899 = vmul.f32 %v2126, %v2330
        %v2900 = vmul.f32 %v2335, %v2899
        %v2903 = vrot.slane %v2900, 6
        %v2904 = vrot.slane %v2337, 6
        %v2905 = vsel %vm683, %v2903, %v2904
        %v2907 = vadd.f32 %v2898, %v2905
        %s2908 = sld [smem:[#allocation4 + $0x88]]
        %v2909 = vstv %s2908
        %v2910 = vmul.f32 %v2909, %v2907
        %v2911 = vadd.f32 %v2838, %v2910
        %s2912 = sld [smem:[#allocation6 + $0x80]]
        %v2914 = vsel %vm918, %v2911, 0
        %2916 = vmatpush.msra.mxu0 0.0
        %2917 = vmatpush.msra.mxu0 0.0
        %2918 = vmatpush.msra.mxu0 0.0
        %2919 = vmatpush.msra.mxu0 0.0
        %2920 = vmatpush.msra.mxu0 0.0
        %2921 = vmatpush.msra.mxu0 0.0
        %2922 = vmatpush.msra.mxu0 0.0
        %2923 = vmatpush.msra.mxu0 0.0
        %2924 = vmatpush.msra.mxu0 0.0
        %2925 = vmatpush.msra.mxu0 0.0
        %2926 = vmatpush.msra.mxu0 0.0
        %2927 = vmatpush.msra.mxu0 0.0
        %2928 = vmatpush.msra.mxu0 0.0
        %2929 = vmatpush.msra.mxu0 0.0
        %2930 = vmatpush.msra.mxu0 0.0
        %2931 = vmatpush.msra.mxu0 %v2914
        %2932 = vmatmul.f32.gmra.mxu0 %v1484
        %v2933 = vpop.f32.mrf.mxu0
        %v2934 = vadd.f32 0.0, %v2933
        %2935 = vmatmul.f32.gmra.mxu0 %v1487
        %v2936 = vpop.f32.mrf.mxu0
        %v2937 = vadd.f32 0.0, %v2936
        %2938 = vdwg.mxu0
        %v2939 = vstv %s2912
        %v2940 = vmul.f32 %v2939, %v2934
        %v2941 = vmul.f32 %v2939, %v2937
        %v2942 = vadd.f32 %v2338, %v2940
        %v2943 = vadd.f32 %v2339, %v2941
        %v2944 = vsel %vm1520, %v2256, -inf
        %2945 = vmax.xlane.f32.xlu0 %v2944
        %v2946 = vpop.xlane.xlu0 %2945
        %v2947 = vsub.f32 %v2256, %v2946
        %v2948 = vmul.f32 %v2947, 1.442695
        %v2949 = vpow.pop %v2948
        %2951 = vrot.lane.b32.xlu0 %v2949, 127
        %v2952 = vpop.permute.xlu0 %2951
        %v2954 = vsel %vm1531, %v2952, 0.0
        %2955 = vadd.xlane.f32.xlu0 %v2954
        %v2956 = vpop.xlane.xlu0 %2955
        %v2957 = vrcp.pop %v2956
        %v2958 = vmul.f32 %v2949, %v2957
        %v2960 = vrot.slane %v2958, 1
        %2961 = vrot.lane.b32.xlu0 %v2960, 127
        %v2962 = vpop.permute.xlu0 %2961
        %v2963 = vrot.slane %v2175, 3
        %2964 = vrot.lane.b32.xlu0 %v2963, 64
        %v2965 = vpop.permute.xlu0 %2964
        %v2966 = vsel %vm1544, %v2962, 0
        %v2968 = vsel %vm1547, %v2965, 0
        %2970 = vmatpush.msra.mxu0 0.0
        %2971 = vmatpush.msra.mxu0 0.0
        %2972 = vmatpush.msra.mxu0 0.0
        %2973 = vmatpush.msra.mxu0 0.0
        %2974 = vmatpush.msra.mxu0 0.0
        %2975 = vmatpush.msra.mxu0 0.0
        %2976 = vmatpush.msra.mxu0 0.0
        %2977 = vmatpush.msra.mxu0 0.0
        %2978 = vmatpush.msra.mxu0 0.0
        %2979 = vmatpush.msra.mxu0 0.0
        %2980 = vmatpush.msra.mxu0 0.0
        %2981 = vmatpush.msra.mxu0 0.0
        %2982 = vmatpush.msra.mxu0 0.0
        %2983 = vmatpush.msra.mxu0 0.0
        %2984 = vmatpush.msra.mxu0 0.0
        %2985 = vmatpush.msra.mxu0 %v2968
        %2986 = vmatmul.f32.gmra.mxu0 %v2966
        %v2987 = vpop.f32.mrf.mxu0
        %v2988 = vadd.f32 0.0, %v2987
        %2989 = vdwg.mxu0
        %v2990 = vmul.f32 %v2319, %v2988
        %v2991 = vrot.slane %v2391, 1
        %v2993 = vadd.f32 %v2990, %v2991
        %v2994 = vmul.f32 %v2397, %v2993
        %v2995 = vadd.f32 %v2994, 0.0
        %v2996 = vsel %vm1576, %v2256, -inf
        %2997 = vmax.xlane.f32.xlu0 %v2996
        %v2998 = vpop.xlane.xlu0 %2997
        %v2999 = vsub.f32 %v2256, %v2998
        %v3000 = vmul.f32 %v2999, 1.442695
        %v3001 = vpow.pop %v3000
        %3003 = vrot.lane.b32.xlu0 %v3001, 127
        %v3004 = vpop.permute.xlu0 %3003
        %v3006 = vsel %vm1587, %v3004, 0.0
        %3007 = vadd.xlane.f32.xlu0 %v3006
        %v3008 = vpop.xlane.xlu0 %3007
        %v3009 = vrcp.pop %v3008
        %v3010 = vmul.f32 %v3001, %v3009
        %v3012 = vrot.slane %v3010, 3
        %3013 = vrot.lane.b32.xlu0 %v3012, 127
        %v3014 = vpop.permute.xlu0 %3013
        %v3015 = vsel %vm1544, %v3014, 0
        %3017 = vmatpush.msra.mxu0 0.0
        %3018 = vmatpush.msra.mxu0 0.0
        %3019 = vmatpush.msra.mxu0 0.0
        %3020 = vmatpush.msra.mxu0 0.0
        %3021 = vmatpush.msra.mxu0 0.0
        %3022 = vmatpush.msra.mxu0 0.0
        %3023 = vmatpush.msra.mxu0 0.0
        %3024 = vmatpush.msra.mxu0 0.0
        %3025 = vmatpush.msra.mxu0 0.0
        %3026 = vmatpush.msra.mxu0 0.0
        %3027 = vmatpush.msra.mxu0 0.0
        %3028 = vmatpush.msra.mxu0 0.0
        %3029 = vmatpush.msra.mxu0 0.0
        %3030 = vmatpush.msra.mxu0 0.0
        %3031 = vmatpush.msra.mxu0 0.0
        %3032 = vmatpush.msra.mxu0 %v2968
        %3033 = vmatmul.f32.gmra.mxu0 %v3015
        %v3034 = vpop.f32.mrf.mxu0
        %v3035 = vadd.f32 0.0, %v3034
        %3036 = vdwg.mxu0
        %v3037 = vmul.f32 %v2319, %v3035
        %v3038 = vrot.slane %v2446, 3
        %v3040 = vadd.f32 %v3037, %v3038
        %v3041 = vmul.f32 %v2452, %v3040
        %v3042 = vadd.f32 %v2995, %v3041
        %v3043 = vsel %vm1625, %v2256, -inf
        %3044 = vmax.xlane.f32.xlu0 %v3043
        %v3045 = vpop.xlane.xlu0 %3044
        %v3046 = vsel %vm1629, %v2259, -inf
        %3047 = vmax.xlane.f32.xlu0 %v3046
        %v3048 = vpop.xlane.xlu0 %3047
        %v3049 = vsub.f32 %v2256, %v3045
        %v3050 = vsub.f32 %v2259, %v3048
        %v3051 = vmul.f32 %v3049, 1.442695
        %v3052 = vpow.pop %v3051
        %v3053 = vmul.f32 %v3050, 1.442695
        %v3054 = vpow.pop %v3053
        %3057 = vrot.lane.b32.xlu0 %v3052, 127
        %v3058 = vpop.permute.xlu0 %3057
        %3059 = vrot.lane.b32.xlu0 %v3054, 127
        %v3060 = vpop.permute.xlu0 %3059
        %v3063 = vsel %vm1647, %v3058, 0.0
        %3064 = vadd.xlane.f32.xlu0 %v3063
        %v3065 = vpop.xlane.xlu0 %3064
        %v3066 = vsel %vm1651, %v3060, 0.0
        %3067 = vadd.xlane.f32.xlu0 %v3066
        %v3068 = vpop.xlane.xlu0 %3067
        %v3069 = vrcp.pop %v3065
        %v3070 = vrcp.pop %v3068
        %v3071 = vmul.f32 %v3052, %v3069
        %v3072 = vmul.f32 %v3054, %v3070
        %v3075 = vrot.slane %v3071, 5
        %v3076 = vrot.slane %v3072, 5
        %v3077 = vsel %vm918, %v3075, %v3076
        %3078 = vrot.lane.b32.xlu0 %v3077, 127
        %v3079 = vpop.permute.xlu0 %3078
        %v3080 = vsel %vm1544, %v3079, 0
        %3082 = vmatpush.msra.mxu0 0.0
        %3083 = vmatpush.msra.mxu0 0.0
        %3084 = vmatpush.msra.mxu0 0.0
        %3085 = vmatpush.msra.mxu0 0.0
        %3086 = vmatpush.msra.mxu0 0.0
        %3087 = vmatpush.msra.mxu0 0.0
        %3088 = vmatpush.msra.mxu0 0.0
        %3089 = vmatpush.msra.mxu0 0.0
        %3090 = vmatpush.msra.mxu0 0.0
        %3091 = vmatpush.msra.mxu0 0.0
        %3092 = vmatpush.msra.mxu0 0.0
        %3093 = vmatpush.msra.mxu0 0.0
        %3094 = vmatpush.msra.mxu0 0.0
        %3095 = vmatpush.msra.mxu0 0.0
        %3096 = vmatpush.msra.mxu0 0.0
        %3097 = vmatpush.msra.mxu0 %v2968
        %3098 = vmatmul.f32.gmra.mxu0 %v3080
        %v3099 = vpop.f32.mrf.mxu0
        %v3100 = vadd.f32 0.0, %v3099
        %3101 = vdwg.mxu0
        %v3102 = vmul.f32 %v2319, %v3100
        %v3103 = vrot.slane %v2521, 5
        %v3104 = vrot.slane %v2522, 5
        %v3105 = vsel %vm918, %v3103, %v3104
        %v3107 = vadd.f32 %v3102, %v3105
        %v3108 = vmul.f32 %v2531, %v3107
        %v3109 = vadd.f32 %v3042, %v3108
        %v3110 = vsel %vm1696, %v2256, -inf
        %3111 = vmax.xlane.f32.xlu0 %v3110
        %v3112 = vpop.xlane.xlu0 %3111
        %v3113 = vsub.f32 %v2256, %v3112
        %v3114 = vmul.f32 %v3113, 1.442695
        %v3115 = vpow.pop %v3114
        %3117 = vrot.lane.b32.xlu0 %v3115, 125
        %v3118 = vpop.permute.xlu0 %3117
        %v3120 = vsel %vm1531, %v3118, 0.0
        %3121 = vadd.xlane.f32.xlu0 %v3120
        %v3122 = vpop.xlane.xlu0 %3121
        %v3123 = vrcp.pop %v3122
        %v3124 = vmul.f32 %v3115, %v3123
        %v3126 = vrot.slane %v3124, 1
        %3127 = vrot.lane.b32.xlu0 %v3126, 125
        %v3128 = vpop.permute.xlu0 %3127
        %v3129 = vrot.slane %v2175, 5
        %v3130 = vrot.slane %v2178, 5
        %v3131 = vsel %vm918, %v3129, %v3130
        %3132 = vrot.lane.b32.xlu0 %v3131, 64
        %v3133 = vpop.permute.xlu0 %3132
        %v3134 = vsel %vm1544, %v3128, 0
        %v3136 = vsel %vm1547, %v3133, 0
        %3138 = vmatpush.msra.mxu0 0.0
        %3139 = vmatpush.msra.mxu0 0.0
        %3140 = vmatpush.msra.mxu0 0.0
        %3141 = vmatpush.msra.mxu0 0.0
        %3142 = vmatpush.msra.mxu0 0.0
        %3143 = vmatpush.msra.mxu0 0.0
        %3144 = vmatpush.msra.mxu0 0.0
        %3145 = vmatpush.msra.mxu0 0.0
        %3146 = vmatpush.msra.mxu0 0.0
        %3147 = vmatpush.msra.mxu0 0.0
        %3148 = vmatpush.msra.mxu0 0.0
        %3149 = vmatpush.msra.mxu0 0.0
        %3150 = vmatpush.msra.mxu0 0.0
        %3151 = vmatpush.msra.mxu0 0.0
        %3152 = vmatpush.msra.mxu0 0.0
        %3153 = vmatpush.msra.mxu0 %v3136
        %3154 = vmatmul.f32.gmra.mxu0 %v3134
        %v3155 = vpop.f32.mrf.mxu0
        %v3156 = vadd.f32 0.0, %v3155
        %3157 = vdwg.mxu0
        %v3158 = vmul.f32 %v2319, %v3156
        %v3159 = vrot.slane %v2590, 1
        %v3161 = vadd.f32 %v3158, %v3159
        %v3162 = vmul.f32 %v2596, %v3161
        %v3163 = vadd.f32 %v3109, %v3162
        %v3164 = vsel %vm1751, %v2256, -inf
        %3165 = vmax.xlane.f32.xlu0 %v3164
        %v3166 = vpop.xlane.xlu0 %3165
        %v3167 = vsub.f32 %v2256, %v3166
        %v3168 = vmul.f32 %v3167, 1.442695
        %v3169 = vpow.pop %v3168
        %3171 = vrot.lane.b32.xlu0 %v3169, 125
        %v3172 = vpop.permute.xlu0 %3171
        %v3174 = vsel %vm1587, %v3172, 0.0
        %3175 = vadd.xlane.f32.xlu0 %v3174
        %v3176 = vpop.xlane.xlu0 %3175
        %v3177 = vrcp.pop %v3176
        %v3178 = vmul.f32 %v3169, %v3177
        %v3180 = vrot.slane %v3178, 3
        %3181 = vrot.lane.b32.xlu0 %v3180, 125
        %v3182 = vpop.permute.xlu0 %3181
        %v3183 = vsel %vm1544, %v3182, 0
        %3185 = vmatpush.msra.mxu0 0.0
        %3186 = vmatpush.msra.mxu0 0.0
        %3187 = vmatpush.msra.mxu0 0.0
        %3188 = vmatpush.msra.mxu0 0.0
        %3189 = vmatpush.msra.mxu0 0.0
        %3190 = vmatpush.msra.mxu0 0.0
        %3191 = vmatpush.msra.mxu0 0.0
        %3192 = vmatpush.msra.mxu0 0.0
        %3193 = vmatpush.msra.mxu0 0.0
        %3194 = vmatpush.msra.mxu0 0.0
        %3195 = vmatpush.msra.mxu0 0.0
        %3196 = vmatpush.msra.mxu0 0.0
        %3197 = vmatpush.msra.mxu0 0.0
        %3198 = vmatpush.msra.mxu0 0.0
        %3199 = vmatpush.msra.mxu0 0.0
        %3200 = vmatpush.msra.mxu0 %v3136
        %3201 = vmatmul.f32.gmra.mxu0 %v3183
        %v3202 = vpop.f32.mrf.mxu0
        %v3203 = vadd.f32 0.0, %v3202
        %3204 = vdwg.mxu0
        %v3205 = vmul.f32 %v2319, %v3203
        %v3206 = vrot.slane %v2336, 3
        %v3208 = vadd.f32 %v3205, %v3206
        %v3209 = vmul.f32 %v2646, %v3208
        %v3210 = vadd.f32 %v3163, %v3209
        %v3211 = vsel %vm1799, %v2256, -inf
        %3212 = vmax.xlane.f32.xlu0 %v3211
        %v3213 = vpop.xlane.xlu0 %3212
        %v3214 = vsel %vm1803, %v2259, -inf
        %3215 = vmax.xlane.f32.xlu0 %v3214
        %v3216 = vpop.xlane.xlu0 %3215
        %v3217 = vsub.f32 %v2256, %v3213
        %v3218 = vsub.f32 %v2259, %v3216
        %v3219 = vmul.f32 %v3217, 1.442695
        %v3220 = vpow.pop %v3219
        %v3221 = vmul.f32 %v3218, 1.442695
        %v3222 = vpow.pop %v3221
        %3225 = vrot.lane.b32.xlu0 %v3220, 125
        %v3226 = vpop.permute.xlu0 %3225
        %3227 = vrot.lane.b32.xlu0 %v3222, 125
        %v3228 = vpop.permute.xlu0 %3227
        %v3231 = vsel %vm1647, %v3226, 0.0
        %3232 = vadd.xlane.f32.xlu0 %v3231
        %v3233 = vpop.xlane.xlu0 %3232
        %v3234 = vsel %vm1651, %v3228, 0.0
        %3235 = vadd.xlane.f32.xlu0 %v3234
        %v3236 = vpop.xlane.xlu0 %3235
        %v3237 = vrcp.pop %v3233
        %v3238 = vrcp.pop %v3236
        %v3239 = vmul.f32 %v3220, %v3237
        %v3240 = vmul.f32 %v3222, %v3238
        %v3243 = vrot.slane %v3239, 5
        %v3244 = vrot.slane %v3240, 5
        %v3245 = vsel %vm918, %v3243, %v3244
        %3246 = vrot.lane.b32.xlu0 %v3245, 125
        %v3247 = vpop.permute.xlu0 %3246
        %v3248 = vsel %vm1544, %v3247, 0
        %3250 = vmatpush.msra.mxu0 0.0
        %3251 = vmatpush.msra.mxu0 0.0
        %3252 = vmatpush.msra.mxu0 0.0
        %3253 = vmatpush.msra.mxu0 0.0
        %3254 = vmatpush.msra.mxu0 0.0
        %3255 = vmatpush.msra.mxu0 0.0
        %3256 = vmatpush.msra.mxu0 0.0
        %3257 = vmatpush.msra.mxu0 0.0
        %3258 = vmatpush.msra.mxu0 0.0
        %3259 = vmatpush.msra.mxu0 0.0
        %3260 = vmatpush.msra.mxu0 0.0
        %3261 = vmatpush.msra.mxu0 0.0
        %3262 = vmatpush.msra.mxu0 0.0
        %3263 = vmatpush.msra.mxu0 0.0
        %3264 = vmatpush.msra.mxu0 0.0
        %3265 = vmatpush.msra.mxu0 %v3136
        %3266 = vmatmul.f32.gmra.mxu0 %v3248
        %v3267 = vpop.f32.mrf.mxu0
        %v3268 = vadd.f32 0.0, %v3267
        %3269 = vdwg.mxu0
        %v3270 = vmul.f32 %v2319, %v3268
        %v3271 = vrot.slane %v2446, 5
        %v3272 = vrot.slane %v2713, 5
        %v3273 = vsel %vm918, %v3271, %v3272
        %v3275 = vadd.f32 %v3270, %v3273
        %v3276 = vmul.f32 %v2721, %v3275
        %v3277 = vadd.f32 %v3210, %v3276
        %v3278 = vsel %vm1868, %v2256, -inf
        %3279 = vmax.xlane.f32.xlu0 %v3278
        %v3280 = vpop.xlane.xlu0 %3279
        %v3281 = vsub.f32 %v2256, %v3280
        %v3282 = vmul.f32 %v3281, 1.442695
        %v3283 = vpow.pop %v3282
        %3285 = vrot.lane.b32.xlu0 %v3283, 123
        %v3286 = vpop.permute.xlu0 %3285
        %v3288 = vsel %vm1531, %v3286, 0.0
        %3289 = vadd.xlane.f32.xlu0 %v3288
        %v3290 = vpop.xlane.xlu0 %3289
        %v3291 = vrcp.pop %v3290
        %v3292 = vmul.f32 %v3283, %v3291
        %v3294 = vrot.slane %v3292, 1
        %3295 = vrot.lane.b32.xlu0 %v3294, 123
        %v3296 = vpop.permute.xlu0 %3295
        %v3297 = vrot.slane %v2175, 7
        %v3298 = vrot.slane %v2178, 7
        %v3299 = vsel %vm1888, %v3297, %v3298
        %3300 = vrot.lane.b32.xlu0 %v3299, 64
        %v3301 = vpop.permute.xlu0 %3300
        %v3302 = vsel %vm1544, %v3296, 0
        %v3304 = vsel %vm1547, %v3301, 0
        %3306 = vmatpush.msra.mxu0 0.0
        %3307 = vmatpush.msra.mxu0 0.0
        %3308 = vmatpush.msra.mxu0 0.0
        %3309 = vmatpush.msra.mxu0 0.0
        %3310 = vmatpush.msra.mxu0 0.0
        %3311 = vmatpush.msra.mxu0 0.0
        %3312 = vmatpush.msra.mxu0 0.0
        %3313 = vmatpush.msra.mxu0 0.0
        %3314 = vmatpush.msra.mxu0 0.0
        %3315 = vmatpush.msra.mxu0 0.0
        %3316 = vmatpush.msra.mxu0 0.0
        %3317 = vmatpush.msra.mxu0 0.0
        %3318 = vmatpush.msra.mxu0 0.0
        %3319 = vmatpush.msra.mxu0 0.0
        %3320 = vmatpush.msra.mxu0 0.0
        %3321 = vmatpush.msra.mxu0 %v3304
        %3322 = vmatmul.f32.gmra.mxu0 %v3302
        %v3323 = vpop.f32.mrf.mxu0
        %v3324 = vadd.f32 0.0, %v3323
        %3325 = vdwg.mxu0
        %v3326 = vmul.f32 %v2319, %v3324
        %v3327 = vsel %vm683, %v2515, %v2770
        %3328 = vrot.lane.b32.xlu0 %v3327, 32
        %v3329 = vpop.permute.xlu0 %3328
        %v3331 = vmul.f32 %v2126, %v3329
        %v3332 = vmul.f32 %v2335, %v3331
        %v3334 = vrot.slane %v3332, 1
        %v3336 = vadd.f32 %v3326, %v3334
        %v3337 = vmul.f32 %v2781, %v3336
        %v3338 = vadd.f32 %v3277, %v3337
        %v3339 = vsel %vm1931, %v2256, -inf
        %3340 = vmax.xlane.f32.xlu0 %v3339
        %v3341 = vpop.xlane.xlu0 %3340
        %v3342 = vsub.f32 %v2256, %v3341
        %v3343 = vmul.f32 %v3342, 1.442695
        %v3344 = vpow.pop %v3343
        %3346 = vrot.lane.b32.xlu0 %v3344, 123
        %v3347 = vpop.permute.xlu0 %3346
        %v3349 = vsel %vm1587, %v3347, 0.0
        %3350 = vadd.xlane.f32.xlu0 %v3349
        %v3351 = vpop.xlane.xlu0 %3350
        %v3352 = vrcp.pop %v3351
        %v3353 = vmul.f32 %v3344, %v3352
        %v3355 = vrot.slane %v3353, 3
        %3356 = vrot.lane.b32.xlu0 %v3355, 123
        %v3357 = vpop.permute.xlu0 %3356
        %v3358 = vsel %vm1544, %v3357, 0
        %3360 = vmatpush.msra.mxu0 0.0
        %3361 = vmatpush.msra.mxu0 0.0
        %3362 = vmatpush.msra.mxu0 0.0
        %3363 = vmatpush.msra.mxu0 0.0
        %3364 = vmatpush.msra.mxu0 0.0
        %3365 = vmatpush.msra.mxu0 0.0
        %3366 = vmatpush.msra.mxu0 0.0
        %3367 = vmatpush.msra.mxu0 0.0
        %3368 = vmatpush.msra.mxu0 0.0
        %3369 = vmatpush.msra.mxu0 0.0
        %3370 = vmatpush.msra.mxu0 0.0
        %3371 = vmatpush.msra.mxu0 0.0
        %3372 = vmatpush.msra.mxu0 0.0
        %3373 = vmatpush.msra.mxu0 0.0
        %3374 = vmatpush.msra.mxu0 0.0
        %3375 = vmatpush.msra.mxu0 %v3304
        %3376 = vmatmul.f32.gmra.mxu0 %v3358
        %v3377 = vpop.f32.mrf.mxu0
        %v3378 = vadd.f32 0.0, %v3377
        %3379 = vdwg.mxu0
        %v3380 = vmul.f32 %v2319, %v3378
        %v3381 = vrot.slane %v2590, 3
        %v3383 = vadd.f32 %v3380, %v3381
        %v3384 = vmul.f32 %v2836, %v3383
        %v3385 = vadd.f32 %v3338, %v3384
        %v3386 = vsel %vm1979, %v2256, -inf
        %3387 = vmax.xlane.f32.xlu0 %v3386
        %v3388 = vpop.xlane.xlu0 %3387
        %v3389 = vsel %vm1983, %v2259, -inf
        %3390 = vmax.xlane.f32.xlu0 %v3389
        %v3391 = vpop.xlane.xlu0 %3390
        %v3392 = vsub.f32 %v2256, %v3388
        %v3393 = vsub.f32 %v2259, %v3391
        %v3394 = vmul.f32 %v3392, 1.442695
        %v3395 = vpow.pop %v3394
        %v3396 = vmul.f32 %v3393, 1.442695
        %v3397 = vpow.pop %v3396
        %3400 = vrot.lane.b32.xlu0 %v3395, 123
        %v3401 = vpop.permute.xlu0 %3400
        %3402 = vrot.lane.b32.xlu0 %v3397, 123
        %v3403 = vpop.permute.xlu0 %3402
        %v3406 = vsel %vm1647, %v3401, 0.0
        %3407 = vadd.xlane.f32.xlu0 %v3406
        %v3408 = vpop.xlane.xlu0 %3407
        %v3409 = vsel %vm1651, %v3403, 0.0
        %3410 = vadd.xlane.f32.xlu0 %v3409
        %v3411 = vpop.xlane.xlu0 %3410
        %v3412 = vrcp.pop %v3408
        %v3413 = vrcp.pop %v3411
        %v3414 = vmul.f32 %v3395, %v3412
        %v3415 = vmul.f32 %v3397, %v3413
        %v3418 = vrot.slane %v3414, 5
        %v3419 = vrot.slane %v3415, 5
        %v3420 = vsel %vm918, %v3418, %v3419
        %3421 = vrot.lane.b32.xlu0 %v3420, 123
        %v3422 = vpop.permute.xlu0 %3421
        %v3423 = vsel %vm1544, %v3422, 0
        %3425 = vmatpush.msra.mxu0 0.0
        %3426 = vmatpush.msra.mxu0 0.0
        %3427 = vmatpush.msra.mxu0 0.0
        %3428 = vmatpush.msra.mxu0 0.0
        %3429 = vmatpush.msra.mxu0 0.0
        %3430 = vmatpush.msra.mxu0 0.0
        %3431 = vmatpush.msra.mxu0 0.0
        %3432 = vmatpush.msra.mxu0 0.0
        %3433 = vmatpush.msra.mxu0 0.0
        %3434 = vmatpush.msra.mxu0 0.0
        %3435 = vmatpush.msra.mxu0 0.0
        %3436 = vmatpush.msra.mxu0 0.0
        %3437 = vmatpush.msra.mxu0 0.0
        %3438 = vmatpush.msra.mxu0 0.0
        %3439 = vmatpush.msra.mxu0 0.0
        %3440 = vmatpush.msra.mxu0 %v3304
        %3441 = vmatmul.f32.gmra.mxu0 %v3423
        %v3442 = vpop.f32.mrf.mxu0
        %v3443 = vadd.f32 0.0, %v3442
        %3444 = vdwg.mxu0
        %v3445 = vmul.f32 %v2319, %v3443
        %v3446 = vrot.slane %v2336, 5
        %v3447 = vrot.slane %v2337, 5
        %v3448 = vsel %vm918, %v3446, %v3447
        %v3450 = vadd.f32 %v3445, %v3448
        %v3451 = vmul.f32 %v2909, %v3450
        %v3452 = vadd.f32 %v3385, %v3451
        %s3453 = sld [smem:[#allocation6 + $0x81]]
        %v3455 = vsel %vm1547, %v3452, 0
        %3457 = vmatpush.msra.mxu0 0.0
        %3458 = vmatpush.msra.mxu0 0.0
        %3459 = vmatpush.msra.mxu0 0.0
        %3460 = vmatpush.msra.mxu0 0.0
        %3461 = vmatpush.msra.mxu0 0.0
        %3462 = vmatpush.msra.mxu0 0.0
        %3463 = vmatpush.msra.mxu0 0.0
        %3464 = vmatpush.msra.mxu0 0.0
        %3465 = vmatpush.msra.mxu0 0.0
        %3466 = vmatpush.msra.mxu0 0.0
        %3467 = vmatpush.msra.mxu0 0.0
        %3468 = vmatpush.msra.mxu0 0.0
        %3469 = vmatpush.msra.mxu0 0.0
        %3470 = vmatpush.msra.mxu0 0.0
        %3471 = vmatpush.msra.mxu0 0.0
        %3472 = vmatpush.msra.mxu0 %v3455
        %3473 = vmatmul.f32.gmra.mxu0 %v2050
        %v3474 = vpop.f32.mrf.mxu0
        %v3475 = vadd.f32 0.0, %v3474
        %3476 = vmatmul.f32.gmra.mxu0 %v2053
        %v3477 = vpop.f32.mrf.mxu0
        %v3478 = vadd.f32 0.0, %v3477
        %3479 = vdwg.mxu0
        %v3480 = vstv %s3453
        %v3481 = vmul.f32 %v3480, %v3475
        %v3482 = vmul.f32 %v3480, %v3478
        %v3483 = vadd.f32 %v2942, %v3481
        %v3484 = vadd.f32 %v2943, %v3482
        %3487 = vrot.lane.b32.xlu0 %v3483, 32
        %v3488 = vpop.permute.xlu0 %3487
        %3489 = vrot.lane.b32.xlu0 %v3484, 32
        %v3490 = vpop.permute.xlu0 %3489
        %v3493 = vsel %vm693, %v2084, %v3488
        %v3494 = vsel %vm693, %v2085, %v3490
        %v3495 = vld [vmem:[%s9] sm:$0xff]
        %v3496 = vld [vmem:[%s9 + $0x8] sm:$0xff]
        %v3497 = vld [vmem:[%s9 + $0x10] sm:$0xff]
        %v3498 = vld [vmem:[%s9 + $0x18] sm:$0xff]
        %v3499 = vld [vmem:[%s9 + $0x20] sm:$0xff]
        %v3500 = vld [vmem:[%s9 + $0x28] sm:$0xff]
        %v3501 = vld [vmem:[%s9 + $0x30] sm:$0xff]
        %v3502 = vld [vmem:[%s9 + $0x38] sm:$0xff]
        %v3503 = vld [vmem:[%s10] sm:$0x1]
        %v3505 = vperm.slane %v3503, 0
        %vm3507 = vcmask 523264
        %v3509 = vsel %vm3507, %v3493, 0
        %v3512 = vsel %vm3507, %v3494, 0
        %3514 = vmatpush.msra.mxu0 0.0
        %3515 = vmatpush.msra.mxu0 0.0
        %3516 = vmatpush.msra.mxu0 0.0
        %3517 = vmatpush.msra.mxu0 0.0
        %3518 = vmatpush.msra.mxu0 0.0
        %3519 = vmatpush.msra.mxu0 0.0
        %3520 = vmatpush.msra.mxu0 0.0
        %3521 = vmatpush.msra.mxu0 0.0
        %3522 = vmatpush.msra.mxu0 %v3502
        %3523 = vmatpush.msra.mxu0 %v3501
        %3524 = vmatpush.msra.mxu0 %v3500
        %3525 = vmatpush.msra.mxu0 %v3499
        %3526 = vmatpush.msra.mxu0 %v3498
        %3527 = vmatpush.msra.mxu0 %v3497
        %3528 = vmatpush.msra.mxu0 %v3496
        %3529 = vmatpush.msra.mxu0 %v3495
        %3530 = vmatmul.f32.gmra.mxu0 %v3509
        %v3531 = vpop.f32.mrf.mxu0
        %v3532 = vadd.f32 %v3505, %v3531
        %3533 = vmatmul.f32.gmra.mxu0 %v3512
        %v3534 = vpop.f32.mrf.mxu0
        %v3535 = vadd.f32 %v3505, %v3534
        %3536 = vdwg.mxu0
        %v3537 = vsel %vm693, %v3532, 0.0
        %vm3538 = vcmask 254976
        %v3539 = vsel %vm3538, %v3535, 0.0
        %v3540 = vadd.f32 %v3537, %v3539
        %3541 = vadd.xlane.f32.xlu0 %v3540
        %v3542 = vpop.xlane.xlu0 %3541
        %v3543 = vrot.slane %v3542, 4
        %v3544 = vadd.f32 %v3542, %v3543
        %v3545 = vrot.slane %v3544, 2
        %v3546 = vadd.f32 %v3544, %v3545
        %v3547 = vrot.slane %v3546, 1
        %v3548 = vadd.f32 %v3546, %v3547
        %s3549 = vtos %v3548
        %v3550 = vrcp.pop 320.0
        %v3551 = vmul.f32 320.0, %v3550
        %v3552 = vsub.f32 1.0, %v3551
        %v3553 = vmul.f32 %v3550, %v3552
        %v3554 = vadd.f32 %v3550, %v3553
        %vm3555 = vweird.f32 %v3550
        %v3556 = vsel %vm3555, %v3550, %v3554
        %s3557 = vtos %v3556
        %s3558 = smul.f32 %s3549, %s3557
        %v3559 = vstv %s3558
        %v3560 = vsub.f32 %v3532, %v3559
        %v3561 = vsub.f32 %v3535, %v3559
        %v3562 = vmul.f32 %v3560, %v3560
        %v3563 = vmul.f32 %v3561, %v3561
        %v3564 = vsel %vm693, %v3562, 0.0
        %v3565 = vsel %vm3538, %v3563, 0.0
        %v3566 = vadd.f32 %v3564, %v3565
        %3567 = vadd.xlane.f32.xlu0 %v3566
        %v3568 = vpop.xlane.xlu0 %3567
        %v3569 = vrot.slane %v3568, 4
        %v3570 = vadd.f32 %v3568, %v3569
        %v3571 = vrot.slane %v3570, 2
        %v3572 = vadd.f32 %v3570, %v3571
        %v3573 = vrot.slane %v3572, 1
        %v3574 = vadd.f32 %v3572, %v3573
        %s3575 = vtos %v3574
        %v3576 = vrcp.pop 320.0
        %v3577 = vmul.f32 320.0, %v3576
        %v3578 = vsub.f32 1.0, %v3577
        %v3579 = vmul.f32 %v3576, %v3578
        %v3580 = vadd.f32 %v3576, %v3579
        %vm3581 = vweird.f32 %v3576
        %v3582 = vsel %vm3581, %v3576, %v3580
        %s3583 = vtos %v3582
        %s3584 = smul.f32 %s3575, %s3583
        %s3585 = sadd.f32 %s3584, 1e-05
        %v3586 = vstv %s3585
        %v3587 = vrsqrt.pop %v3586
        %v3588 = vmul.f32 %v3587, %v3586
        %v3589 = vmul.f32 %v3588, %v3587
        %v3590 = vmul.f32 0.5, %v3589
        %v3591 = vsub.f32 1.5, %v3590
        %v3592 = vmul.f32 %v3587, %v3591
        %vm3593 = vweird.f32 %v3586
        %vm3594 = vweird.f32 %v3587
        %vm3595 = vmor %vm3593, %vm3594
        %v3596 = vsel %vm3595, %v3587, %v3592
        %s3597 = vtos %v3596
        %v3598 = vstv %s3597
        %v3599 = vmul.f32 %v3560, %v3598
        %v3600 = vmul.f32 %v3561, %v3598
        %v3601 = vld [vmem:[%s11] sm:$0xff]
        %v3602 = vld [vmem:[%s11 + $0x8] sm:$0x3]
        %v3603 = vmul.f32 %v3599, %v3601
        %v3604 = vmul.f32 %v3600, %v3602
        %v3605 = vld [vmem:[%s12] sm:$0xff]
        %v3606 = vld [vmem:[%s12 + $0x8] sm:$0x3]
        %v3607 = vadd.f32 %v3603, %v3605
        %v3608 = vadd.f32 %v3604, %v3606
        %v3609 = vmax.f32 %v3607, 0.0
        %v3610 = vmax.f32 %v3608, 0.0
        %3611 = vst.msk [vmem:[%s624] sm:$0xff] %vm693, %v3609
        %3612 = vst.msk [vmem:[%s624 + $0x8] sm:$0x3] %vm3538, %v3610
        %p3613 = scmp.lt.s32.totalorder %s27, 1
        %s3614 = scalar_select %p3613, %s27, 1
        %s3615 = smul.addr %s3614, 2
        %s3616 = smul.addr %s3615, 8
        %s3617 = scalar_lea.vmem %s13, %s3616
        // Predicated region
        $region165: #{tpu_custom_call.1} parent=139 // pred_check
          %p3618 = pneg %p328
        $region166: #{tpu_custom_call.1} parent=139 // pred_check_branch
          %3620 = sbr.rel (%p3618) target = $region168
        $region167: #{tpu_custom_call.1} parent=139 // pred_region
          _
        $region168: #{tpu_custom_call.1} parent=139 // pred_fallthru
          _
      $region140: #{tpu_custom_call.1} parent=5 // pred_fallthru
        _
      %p3621 = scmp.le.s32.totalorder 2, %s22
      // Predicated region
      $region169: #{tpu_custom_call.1} parent=5 // pred_check
        %p3622 = pneg %p3621
      $region170: #{tpu_custom_call.1} parent=5 // pred_check_branch
        %3624 = sbr.rel (%p3622) target = $region172
      $region171: #{tpu_custom_call.1} parent=5 // pred_region
        %s3625 = ssub.s32 %s22, 2
        // Predicated region
        $region173: #{tpu_custom_call.1} parent=171 // pred_check
          %p3626 = pneg %p334
        $region174: #{tpu_custom_call.1} parent=171 // pred_check_branch
          %3628 = sbr.rel (%p3626) target = $region176
        $region175: #{tpu_custom_call.1} parent=171 // pred_region
          %p3629 = scmp.lt.s32.totalorder %s28, 1
          %s3630 = scalar_select %p3629, %s28, 1
          %s3631 = smul.addr %s3630, 2
          %s3632 = smul.addr %s3631, 8
          %s3633 = scalar_lea.vmem %s13, %s3632
        $region176: #{tpu_custom_call.1} parent=171 // pred_fallthru
          _
      $region172: #{tpu_custom_call.1} parent=5 // pred_fallthru
        _
    $region6: #{tpu_custom_call.1} parent=1 // loop_footer
      %s26 = sadd.s32 1, %s22
    $region7: #{tpu_custom_call.1} parent=1 // loop_footer_branch
      %21 = sbr.rel target = $region3
    $region8: #{tpu_custom_call.1} parent=1 // loop_exit
      _
    %3634 = vsyncpa [#allocation3], 1
    %s3635 = scalar_lea.sflag [#allocation3], 1
    %3636 = vsyncpa %s3635, 1
    %3637 = vsyncpa [#allocation5], 1
    %3638 = vsyncpa [#allocation8], 1

</llo_original>
